<compile_context>
chip_gen: v5e
topology: v5e:2x2
jax: 0.10.0
libtpu: 0.0.40
codegen_flags: <defaults>
</compile_context>

<pallas_src>
import math

import jax
import jax.numpy as jnp
import numpy as np
from jax import lax
from jax.experimental import pallas as pl
from jax.experimental.pallas import tpu as pltpu


SUBLANE = 8    # f32 sublane tile
LANE = 128     # lane tile


def _round_up(x, m):
    return (x + m - 1) // m * m


def _pick_time_chunk(T, Bg, d_in, Hp, out_dim, budget_bytes=4 << 20):
    """Largest divisor of T whose per-chunk VMEM footprint stays under budget."""
    # f32 bytes per time step resident per grid step:
    #   gx scratch (4Hp) + h chunk buf (Hp) + double-buffered x (2*d_in) + out (2*out_dim)
    per_t = 4 * Bg * (4 * Hp + Hp + 2 * d_in + 2 * out_dim)
    tc = max(1, min(T, budget_bytes // per_t))
    while T % tc:
        tc -= 1
    return int(tc)


# ----------------------------------------------------------------------------
# Fused per-layer kernel: per-chunk input-projection matmul + LSTM recurrence
# with h/c carried in persistent VMEM scratch (+ optional Linear+ReLU epilogue).
# ----------------------------------------------------------------------------
def _make_lstm_layer_kernel(Tc, Bg, Hp, has_proj, unroll):
    def kernel(x_ref, wih_ref, whh_ref, b_ref, *rest):
        if has_proj:
            wp_ref, bp_ref, out_ref, gx_sc, h_carry, c_carry, hbuf = rest
        else:
            out_ref, gx_sc, h_carry, c_carry = rest

        chunk = pl.program_id(1)  # time-chunk axis ("arbitrary")

        @pl.when(chunk == 0)
        def _():  # fresh recurrent state at the start of each batch group
            h_carry[...] = jnp.zeros_like(h_carry)
            c_carry[...] = jnp.zeros_like(c_carry)

        # --- Prologue: hoisted non-recurrent projection as ONE chunk-wide matmul.
        gx_sc[...] = (
            jnp.dot(x_ref[...], wih_ref[...], preferred_element_type=jnp.float32)
            + b_ref[...]
        )

        # TODO(synk): for very large H, stage w_hh on the MXU once via
        # pltpu.matmul_push_rhs / matmul_acc_lhs instead of per-step jnp.dot.
        w_hh = whh_ref[...]  # loop-invariant, hoisted

        # Loop-invariant lane mask: lanes [2Hp, 3Hp) are the 'g' gate (tanh),
        # everything else is sigmoid.
        lane = lax.broadcasted_iota(jnp.int32, (Bg, 4 * Hp), 1)
        is_g = (lane >= 2 * Hp) & (lane < 3 * Hp)

        def step(t, carry):
            h, c = carry
            row = pl.multiple_of(t * Bg, SUBLANE)
            gates = gx_sc[pl.ds(row, Bg), :] + jnp.dot(
                h, w_hh, preferred_element_type=jnp.float32
            )
            # Single transcendental: sigmoid(z) = 0.5 * tanh(z / 2) + 0.5.
            arg = jnp.where(is_g, gates, 0.5 * gates)
            th = jnp.tanh(arg)
            act = jnp.where(is_g, th, 0.5 * th + 0.5)
            i_g = act[:, 0:Hp]
            f_g = act[:, Hp:2 * Hp]
            g_g = act[:, 2 * Hp:3 * Hp]
            o_g = act[:, 3 * Hp:4 * Hp]
            c_new = f_g * c + i_g * g_g
            h_new = o_g * jnp.tanh(c_new)
            if has_proj:
                hbuf[pl.ds(row, Bg), :] = h_new      # chunk-local VMEM buffer
            else:
                out_ref[pl.ds(row, Bg), :] = h_new   # write straight to output block
            return h_new, c_new

        h_fin, c_fin = lax.fori_loop(
            0, Tc, step, (h_carry[...], c_carry[...]), unroll=unroll
        )
        h_carry[...] = h_fin
        c_carry[...] = c_fin

        # --- Epilogue: fused inter-layer Linear + ReLU on the whole chunk.
        if has_proj:
            y = (
                jnp.dot(hbuf[...], wp_ref[...], preferred_element_type=jnp.float32)
                + bp_ref[...]
            )
            out_ref[...] = jnp.maximum(y, 0.0)

    return kernel


# ----------------------------------------------------------------------------
# Pallas wrapper: one fused pallas_call per layer.
# Inputs/outputs are laid out (num_groups, T*Bg, feat): rows grouped by batch
# group, time-major inside a group (row = t*Bg + j).
# ----------------------------------------------------------------------------
def lstm_layer_fused(x, w_ih, w_hh, b, proj, *, T, Bg):
    nG, TBg, D_in = x.shape
    assert TBg == T * Bg
    Hp = w_hh.shape[0]
    has_proj = proj is not None
    out_dim = proj[0].shape[1] if has_proj else Hp

    Tc = _pick_time_chunk(T, Bg, D_in, Hp, out_dim)
    n_chunks = T // Tc
    unroll = int(min(Tc, 8))  # bounded partial unroll: LLO visibility w/o vreg blowup

    kernel = _make_lstm_layer_kernel(Tc, Bg, Hp, has_proj, unroll)

    extra_inputs = ()
    extra_specs = []
    if has_proj:
        w_p, b_p = proj
        extra_inputs = (w_p, b_p)
        extra_specs = [
            pl.BlockSpec((Hp, out_dim), lambda g, c: (0, 0)),
            pl.BlockSpec((1, out_dim), lambda g, c: (0, 0)),
        ]

    scratch = [
        pltpu.VMEM((Tc * Bg, 4 * Hp), jnp.float32),  # per-chunk precomputed x-gates
        pltpu.VMEM((Bg, Hp), jnp.float32),           # h carry (persists across chunks)
        pltpu.VMEM((Bg, Hp), jnp.float32),           # c carry (persists across chunks)
    ]
    if has_proj:
        scratch.append(pltpu.VMEM((Tc * Bg, Hp), jnp.float32))  # chunk h buffer

    # Explicit VMEM budget (v7x has 64 MiB physical / 32 MiB default scoped limit).
    est = 4 * (
        2 * Tc * Bg * (D_in + out_dim)                       # double-buffered x / out
        + Tc * Bg * (4 * Hp + (Hp if has_proj else 0))       # gx (+ h chunk buf)
        + 2 * Bg * Hp                                        # h/c carry
        + D_in * 4 * Hp + Hp * 4 * Hp + 4 * Hp               # weights + bias
        + (Hp * out_dim + out_dim if has_proj else 0)        # proj weights
    )
    vmem_limit = int(min(max(2 * est, 8 << 20), 64 << 20))

    # TODO(synk): on v6e/v7x, feed bf16 weights (keep f32 accumulation) to halve
    # weight DMA / VMEM; kept f32 here to preserve tight numerical tolerance.
    out = pl.pallas_call(
        kernel,
        out_shape=jax.ShapeDtypeStruct((nG, T * Bg, out_dim), jnp.float32),
        grid_spec=pltpu.PrefetchScalarGridSpec(
            num_scalar_prefetch=0,
            grid=(nG, n_chunks),  # (parallel batch groups, sequential time chunks)
            in_specs=[
                pl.BlockSpec((None, Tc * Bg, D_in), lambda g, c: (g, c, 0)),
                pl.BlockSpec((D_in, 4 * Hp), lambda g, c: (0, 0)),
                pl.BlockSpec((Hp, 4 * Hp), lambda g, c: (0, 0)),
                pl.BlockSpec((1, 4 * Hp), lambda g, c: (0, 0)),
            ] + extra_specs,
            out_specs=pl.BlockSpec((None, Tc * Bg, out_dim), lambda g, c: (g, c, 0)),
            scratch_shapes=scratch,
        ),
        compiler_params=pltpu.CompilerParams(
            dimension_semantics=("parallel", "arbitrary"),
            vmem_limit_bytes=vmem_limit,
        ),
    )(x, w_ih, w_hh, b, *extra_inputs)
    return out


# ----------------------------------------------------------------------------
# Parameter init (PyTorch-like) and lane padding helpers.
# ----------------------------------------------------------------------------
def init_params(key, input_size, hidden_size, proj_size, num_layers):
    """Deterministic init mimicking PyTorch's U(-1/sqrt(H), 1/sqrt(H))."""
    bound = 1.0 / math.sqrt(hidden_size)
    params = {"lstm": [], "proj": []}
    in_dims = [input_size] + [proj_size] * (num_layers - 1)
    for l in range(num_layers):
        key, k1, k2, k3, k4 = jax.random.split(key, 5)
        D = in_dims[l]
        # Stored pre-transposed relative to torch: (D, 4H), (H, 4H); gate order [i,f,g,o].
        w_ih = jax.random.uniform(k1, (D, 4 * hidden_size), jnp.float32, -bound, bound)
        w_hh = jax.random.uniform(k2, (hidden_size, 4 * hidden_size), jnp.float32, -bound, bound)
        b_ih = jax.random.uniform(k3, (4 * hidden_size,), jnp.float32, -bound, bound)
        b_hh = jax.random.uniform(k4, (4 * hidden_size,), jnp.float32, -bound, bound)
        params["lstm"].append((w_ih, w_hh, (b_ih + b_hh).reshape(1, 4 * hidden_size)))
    lin_bound = 1.0 / math.sqrt(hidden_size)
    for l in range(num_layers - 1):
        key, k1, k2 = jax.random.split(key, 3)
        w = jax.random.uniform(k1, (hidden_size, proj_size), jnp.float32, -lin_bound, lin_bound)
        b = jax.random.uniform(k2, (1, proj_size), jnp.float32, -lin_bound, lin_bound)
        params["proj"].append((w, b))
    return params


def _pad_gate_cols(w, H, Hp):
    """Zero-pad each of the 4 gate blocks along the last axis from H to Hp."""
    if Hp == H:
        return w
    lead = w.shape[:-1]
    w4 = w.reshape(*lead, 4, H)
    pad = [(0, 0)] * len(lead) + [(0, 0), (0, Hp - H)]
    return jnp.pad(w4, pad).reshape(*lead, 4 * Hp)


# ----------------------------------------------------------------------------
# Model: CustomXLSTM forward
# ----------------------------------------------------------------------------
def xlstm_forward(x_btd, params):
    lstm = params["lstm"]
    proj = params["proj"]
    num_layers = len(lstm)
    B, T, D0 = x_btd.shape
    H = lstm[0][1].shape[0]
    P = proj[0][0].shape[1] if proj else None

    Hp = _round_up(H, LANE)                      # lane-dense hidden dim
    Pp = _round_up(P, LANE) if P is not None else None

    Bg = _round_up(min(B, 64), SUBLANE)          # batch rows per group (sublane aligned)
    nG = -(-B // Bg)                             # parallel batch groups (v7x: one per TC)
    Bp = nG * Bg

    # (B,T,D) -> (nG, T*Bg, D): batch padded & grouped, time-major within a group.
    # TODO(synk): fold this relayout/pad and the final unpad into the first/last
    # layer's BlockSpec index_maps to avoid the extra HBM round-trip at production sizes.
    x = jnp.pad(x_btd, ((0, Bp - B), (0, 0), (0, 0)))
    out = x.reshape(nG, Bg, T, D0).transpose(0, 2, 1, 3).reshape(nG, T * Bg, D0)

    for l in range(num_layers):
        w_ih, w_hh, b = lstm[l]
        D_in = w_ih.shape[0]
        # Lane-pad the weights (padded gate lanes keep h identically zero).
        w_ih_p = _pad_gate_cols(w_ih, H, Hp)
        if l > 0 and Pp is not None and Pp != D_in:
            w_ih_p = jnp.pad(w_ih_p, ((0, Pp - D_in), (0, 0)))
        w_hh_p = jnp.pad(_pad_gate_cols(w_hh, H, Hp), ((0, Hp - H), (0, 0)))
        b_p = _pad_gate_cols(b, H, Hp)

        if l < num_layers - 1:
            w, pb = proj[l]
            w_pp = jnp.pad(w, ((0, Hp - H), (0, Pp - P)))
            pb_p = jnp.pad(pb, ((0, 0), (0, Pp - P)))
            out = lstm_layer_fused(out, w_ih_p, w_hh_p, b_p, (w_pp, pb_p), T=T, Bg=Bg)
        else:
            out = lstm_layer_fused(out, w_ih_p, w_hh_p, b_p, None, T=T, Bg=Bg)

    # (nG, T*Bg, Hp) -> (B, T, H): drop batch/lane padding, back to batch-first.
    out = out.reshape(nG, T, Bg, Hp).transpose(0, 2, 1, 3).reshape(Bp, T, Hp)
    return out[:B, :, :H]


# ----------------------------------------------------------------------------
# Pure-JAX reference (same semantics as PyTorch nn.LSTM + Linear + ReLU)
# ----------------------------------------------------------------------------
def ref_forward(x_btd, params):
    num_layers = len(params["lstm"])
    out = x_btd  # (B, T, D)
    B = out.shape[0]
    for i in range(num_layers):
        w_ih, w_hh, b = params["lstm"][i]
        H = w_hh.shape[0]

        def step(carry, x_t):
            h, c = carry
            gates = x_t @ w_ih + h @ w_hh + b[0]
            i_g = jax.nn.sigmoid(gates[:, 0:H])
            f_g = jax.nn.sigmoid(gates[:, H:2 * H])
            g_g = jnp.tanh(gates[:, 2 * H:3 * H])
            o_g = jax.nn.sigmoid(gates[:, 3 * H:4 * H])
            c = f_g * c + i_g * g_g
            h = o_g * jnp.tanh(c)
            return (h, c), h

        init = (jnp.zeros((B, H), jnp.float32), jnp.zeros((B, H), jnp.float32))
        _, hs = lax.scan(step, init, jnp.transpose(out, (1, 0, 2)))  # (T, B, H)
        out = jnp.transpose(hs, (1, 0, 2))
        if i < num_layers - 1:
            w, pb = params["proj"][i]
            out = jnp.maximum(out @ w + pb[0], 0.0)
    return out


# ----------------------------------------------------------------------------
if __name__ == "__main__":
    batch, seq, input_size = 2, 8, 16
    hidden_size, proj_size, num_layers = 32, 24, 3

    key = jax.random.PRNGKey(0)
    key, xkey = jax.random.split(key)
    x = jax.random.normal(xkey, (batch, seq, input_size), jnp.float32)
    params = init_params(key, input_size, hidden_size, proj_size, num_layers)

    fwd = jax.jit(xlstm_forward)
    out = jax.block_until_ready(fwd(x, params))
    ref = jax.block_until_ready(ref_forward(x, params))
    np.testing.assert_allclose(np.asarray(out), np.asarray(ref), rtol=1e-4, atol=1e-5)
    assert out.shape == (batch, seq, hidden_size)

    print("KERNEL_OK")
</pallas_src>

<mosaic_0001>
module attributes {stable_mosaic.version = 11 : i64} {
  func.func @kernel(%arg0: i32, %arg1: i32, %arg2: memref<1x64x128xf32, #tpu.memory_space<vmem>>, %arg3: memref<128x512xf32, #tpu.memory_space<vmem>>, %arg4: memref<128x512xf32, #tpu.memory_space<vmem>>, %arg5: memref<1x512xf32, #tpu.memory_space<vmem>>, %arg6: memref<128x128xf32, #tpu.memory_space<vmem>>, %arg7: memref<1x128xf32, #tpu.memory_space<vmem>>, %arg8: memref<1x64x128xf32, #tpu.memory_space<vmem>>, %arg9: memref<64x512xf32, #tpu.memory_space<vmem>>, %arg10: memref<8x128xf32, #tpu.memory_space<vmem>>, %arg11: memref<8x128xf32, #tpu.memory_space<vmem>>, %arg12: memref<64x128xf32, #tpu.memory_space<vmem>>) attributes {dimension_semantics = [#tpu.dimension_semantics<parallel>, #tpu.dimension_semantics<arbitrary>], iteration_bounds = array<i64: 1, 1>, scalar_prefetch = 0 : i64, scratch_operands = 4 : i64, tpu.core_type = #tpu.core_type<tc>, window_params = [{transform_indices = @transform_0, window_bounds = array<i64: 1, 64, 128>}, {pipeline_mode = #tpu.pipeline_mode<synchronous>, transform_indices = @transform_1, window_bounds = array<i64: 128, 512>}, {pipeline_mode = #tpu.pipeline_mode<synchronous>, transform_indices = @transform_2, window_bounds = array<i64: 128, 512>}, {pipeline_mode = #tpu.pipeline_mode<synchronous>, transform_indices = @transform_3, window_bounds = array<i64: 1, 512>}, {pipeline_mode = #tpu.pipeline_mode<synchronous>, transform_indices = @transform_4, window_bounds = array<i64: 128, 128>}, {pipeline_mode = #tpu.pipeline_mode<synchronous>, transform_indices = @transform_5, window_bounds = array<i64: 1, 128>}, {transform_indices = @transform_6, window_bounds = array<i64: 1, 64, 128>}]} {
    %c0_i32 = arith.constant 0 : i32
    %0 = arith.cmpi eq, %arg1, %c0_i32 : i32
    %1 = arith.extui %0 : i1 to i32
    %c0_i32_0 = arith.constant 0 : i32
    %2 = arith.cmpi ne, %1, %c0_i32_0 : i32
    scf.if %2 {
      %cst_87 = arith.constant 0.000000e+00 : f32
      %241 = vector.broadcast %cst_87 : f32 to vector<8x128xf32>
      %c0_88 = arith.constant 0 : index
      %c0_89 = arith.constant 0 : index
      %242 = vector.load %arg10[%c0_88, %c0_89] : memref<8x128xf32, #tpu.memory_space<vmem>>, vector<8x128xf32>
      tpu.vector_store %arg10[%c0_88, %c0_89], %241 {strides = array<i32>} : memref<8x128xf32, #tpu.memory_space<vmem>>, vector<8x128xf32>,
      %cst_90 = arith.constant 0.000000e+00 : f32
      %243 = vector.broadcast %cst_90 : f32 to vector<8x128xf32>
      %c0_91 = arith.constant 0 : index
      %c0_92 = arith.constant 0 : index
      %244 = vector.load %arg11[%c0_91, %c0_92] : memref<8x128xf32, #tpu.memory_space<vmem>>, vector<8x128xf32>
      tpu.vector_store %arg11[%c0_91, %c0_92], %243 {strides = array<i32>} : memref<8x128xf32, #tpu.memory_space<vmem>>, vector<8x128xf32>,
    } else {
    }
    %c0 = arith.constant 0 : index
    %c0_1 = arith.constant 0 : index
    %c0_2 = arith.constant 0 : index
    %3 = vector.load %arg2[%c0, %c0_1, %c0_2] : memref<1x64x128xf32, #tpu.memory_space<vmem>>, vector<1x64x128xf32>
    %4 = vector.shape_cast %3 : vector<1x64x128xf32> to vector<64x128xf32>
    %c0_3 = arith.constant 0 : index
    %c0_4 = arith.constant 0 : index
    %5 = vector.load %arg3[%c0_3, %c0_4] : memref<128x512xf32, #tpu.memory_space<vmem>>, vector<128x512xf32>
    %cst = arith.constant dense<0.000000e+00> : vector<64x512xf32>
    %6 = tpu.matmul %4, %5, %cst {dimension_numbers = #tpu.dot_dimension_numbers<[1], [0], [0], [1], [0, 0, 1, 1], [], []>} : vector<64x128xf32>, vector<128x512xf32>, vector<64x512xf32> -> vector<64x512xf32>
    %c0_5 = arith.constant 0 : index
    %c0_6 = arith.constant 0 : index
    %7 = vector.load %arg5[%c0_5, %c0_6] : memref<1x512xf32, #tpu.memory_space<vmem>>, vector<1x512xf32>
    %8 = vector.broadcast %7 : vector<1x512xf32> to vector<64x512xf32>
    %9 = arith.addf %6, %8 : vector<64x512xf32>
    %c0_7 = arith.constant 0 : index
    %c0_8 = arith.constant 0 : index
    %10 = vector.load %arg9[%c0_7, %c0_8] : memref<64x512xf32, #tpu.memory_space<vmem>>, vector<64x512xf32>
    tpu.vector_store %arg9[%c0_7, %c0_8], %9 {strides = array<i32>} : memref<64x512xf32, #tpu.memory_space<vmem>>, vector<64x512xf32>,
    %c0_9 = arith.constant 0 : index
    %c0_10 = arith.constant 0 : index
    %11 = vector.load %arg4[%c0_9, %c0_10] : memref<128x512xf32, #tpu.memory_space<vmem>>, vector<128x512xf32>
    %12 = tpu.iota {dimensions = array<i32: 1>} : vector<8x512xi32>
    %c256_i32 = arith.constant 256 : i32
    %13 = vector.broadcast %c256_i32 : i32 to vector<8x512xi32>
    %14 = arith.cmpi sge, %12, %13 : vector<8x512xi32>
    %c384_i32 = arith.constant 384 : i32
    %15 = vector.broadcast %c384_i32 : i32 to vector<8x512xi32>
    %16 = arith.cmpi slt, %12, %15 : vector<8x512xi32>
    %17 = arith.andi %14, %16 : vector<8x512xi1>
    %c0_11 = arith.constant 0 : index
    %c0_12 = arith.constant 0 : index
    %18 = vector.load %arg10[%c0_11, %c0_12] : memref<8x128xf32, #tpu.memory_space<vmem>>, vector<8x128xf32>
    %c0_13 = arith.constant 0 : index
    %c0_14 = arith.constant 0 : index
    %19 = vector.load %arg11[%c0_13, %c0_14] : memref<8x128xf32, #tpu.memory_space<vmem>>, vector<8x128xf32>
    %c0_i32_15 = arith.constant 0 : i32
    %c8_i32 = arith.constant 8 : i32
    %20 = arith.muli %c0_i32_15, %c8_i32 : i32
    %21 = tpu.assume_multiple %20, 8 : i32
    %22 = arith.index_cast %21 : i32 to index
    %c0_16 = arith.constant 0 : index
    %23 = vector.load %arg9[%22, %c0_16] : memref<64x512xf32, #tpu.memory_space<vmem>>, vector<8x512xf32>
    %cst_17 = arith.constant dense<0.000000e+00> : vector<8x512xf32>
    %24 = tpu.matmul %18, %11, %cst_17 {dimension_numbers = #tpu.dot_dimension_numbers<[1], [0], [0], [1], [0, 0, 1, 1], [], []>} : vector<8x128xf32>, vector<128x512xf32>, vector<8x512xf32> -> vector<8x512xf32>
    %25 = arith.addf %23, %24 : vector<8x512xf32>
    %cst_18 = arith.constant 5.000000e-01 : f32
    %26 = vector.broadcast %cst_18 : f32 to vector<8x512xf32>
    %27 = arith.mulf %26, %25 : vector<8x512xf32>
    %28 = arith.select %17, %25, %27 : vector<8x512xi1>, vector<8x512xf32>
    %29 = math.tanh %28 : vector<8x512xf32>
    %cst_19 = arith.constant 5.000000e-01 : f32
    %30 = vector.broadcast %cst_19 : f32 to vector<8x512xf32>
    %31 = arith.mulf %30, %29 : vector<8x512xf32>
    %cst_20 = arith.constant 5.000000e-01 : f32
    %32 = vector.broadcast %cst_20 : f32 to vector<8x512xf32>
    %33 = arith.addf %31, %32 : vector<8x512xf32>
    %34 = arith.select %17, %29, %33 : vector<8x512xi1>, vector<8x512xf32>
    %35 = vector.extract_strided_slice %34 {offsets = [0, 0], sizes = [8, 128], strides = [1, 1]} : vector<8x512xf32> to vector<8x128xf32>
    %36 = vector.extract_strided_slice %34 {offsets = [0, 128], sizes = [8, 128], strides = [1, 1]} : vector<8x512xf32> to vector<8x128xf32>
    %37 = vector.extract_strided_slice %34 {offsets = [0, 256], sizes = [8, 128], strides = [1, 1]} : vector<8x512xf32> to vector<8x128xf32>
    %38 = vector.extract_strided_slice %34 {offsets = [0, 384], sizes = [8, 128], strides = [1, 1]} : vector<8x512xf32> to vector<8x128xf32>
    %39 = arith.mulf %36, %19 : vector<8x128xf32>
    %40 = arith.mulf %35, %37 : vector<8x128xf32>
    %41 = arith.addf %39, %40 : vector<8x128xf32>
    %42 = math.tanh %41 : vector<8x128xf32>
    %43 = arith.mulf %38, %42 : vector<8x128xf32>
    %44 = arith.index_cast %21 : i32 to index
    %c0_21 = arith.constant 0 : index
    %45 = vector.load %arg12[%44, %c0_21] : memref<64x128xf32, #tpu.memory_space<vmem>>, vector<8x128xf32>
    tpu.vector_store %arg12[%44, %c0_21], %43 {strides = array<i32>} : memref<64x128xf32, #tpu.memory_space<vmem>>, vector<8x128xf32>,
    %c1_i32 = arith.constant 1 : i32
    %c8_i32_22 = arith.constant 8 : i32
    %46 = arith.muli %c1_i32, %c8_i32_22 : i32
    %47 = tpu.assume_multiple %46, 8 : i32
    %48 = arith.index_cast %47 : i32 to index
    %c0_23 = arith.constant 0 : index
    %49 = vector.load %arg9[%48, %c0_23] : memref<64x512xf32, #tpu.memory_space<vmem>>, vector<8x512xf32>
    %cst_24 = arith.constant dense<0.000000e+00> : vector<8x512xf32>
    %50 = tpu.matmul %43, %11, %cst_24 {dimension_numbers = #tpu.dot_dimension_numbers<[1], [0], [0], [1], [0, 0, 1, 1], [], []>} : vector<8x128xf32>, vector<128x512xf32>, vector<8x512xf32> -> vector<8x512xf32>
    %51 = arith.addf %49, %50 : vector<8x512xf32>
    %cst_25 = arith.constant 5.000000e-01 : f32
    %52 = vector.broadcast %cst_25 : f32 to vector<8x512xf32>
    %53 = arith.mulf %52, %51 : vector<8x512xf32>
    %54 = arith.select %17, %51, %53 : vector<8x512xi1>, vector<8x512xf32>
    %55 = math.tanh %54 : vector<8x512xf32>
    %cst_26 = arith.constant 5.000000e-01 : f32
    %56 = vector.broadcast %cst_26 : f32 to vector<8x512xf32>
    %57 = arith.mulf %56, %55 : vector<8x512xf32>
    %cst_27 = arith.constant 5.000000e-01 : f32
    %58 = vector.broadcast %cst_27 : f32 to vector<8x512xf32>
    %59 = arith.addf %57, %58 : vector<8x512xf32>
    %60 = arith.select %17, %55, %59 : vector<8x512xi1>, vector<8x512xf32>
    %61 = vector.extract_strided_slice %60 {offsets = [0, 0], sizes = [8, 128], strides = [1, 1]} : vector<8x512xf32> to vector<8x128xf32>
    %62 = vector.extract_strided_slice %60 {offsets = [0, 128], sizes = [8, 128], strides = [1, 1]} : vector<8x512xf32> to vector<8x128xf32>
    %63 = vector.extract_strided_slice %60 {offsets = [0, 256], sizes = [8, 128], strides = [1, 1]} : vector<8x512xf32> to vector<8x128xf32>
    %64 = vector.extract_strided_slice %60 {offsets = [0, 384], sizes = [8, 128], strides = [1, 1]} : vector<8x512xf32> to vector<8x128xf32>
    %65 = arith.mulf %62, %41 : vector<8x128xf32>
    %66 = arith.mulf %61, %63 : vector<8x128xf32>
    %67 = arith.addf %65, %66 : vector<8x128xf32>
    %68 = math.tanh %67 : vector<8x128xf32>
    %69 = arith.mulf %64, %68 : vector<8x128xf32>
    %70 = arith.index_cast %47 : i32 to index
    %c0_28 = arith.constant 0 : index
    %71 = vector.load %arg12[%70, %c0_28] : memref<64x128xf32, #tpu.memory_space<vmem>>, vector<8x128xf32>
    tpu.vector_store %arg12[%70, %c0_28], %69 {strides = array<i32>} : memref<64x128xf32, #tpu.memory_space<vmem>>, vector<8x128xf32>,
    %c2_i32 = arith.constant 2 : i32
    %c8_i32_29 = arith.constant 8 : i32
    %72 = arith.muli %c2_i32, %c8_i32_29 : i32
    %73 = tpu.assume_multiple %72, 8 : i32
    %74 = arith.index_cast %73 : i32 to index
    %c0_30 = arith.constant 0 : index
    %75 = vector.load %arg9[%74, %c0_30] : memref<64x512xf32, #tpu.memory_space<vmem>>, vector<8x512xf32>
    %cst_31 = arith.constant dense<0.000000e+00> : vector<8x512xf32>
    %76 = tpu.matmul %69, %11, %cst_31 {dimension_numbers = #tpu.dot_dimension_numbers<[1], [0], [0], [1], [0, 0, 1, 1], [], []>} : vector<8x128xf32>, vector<128x512xf32>, vector<8x512xf32> -> vector<8x512xf32>
    %77 = arith.addf %75, %76 : vector<8x512xf32>
    %cst_32 = arith.constant 5.000000e-01 : f32
    %78 = vector.broadcast %cst_32 : f32 to vector<8x512xf32>
    %79 = arith.mulf %78, %77 : vector<8x512xf32>
    %80 = arith.select %17, %77, %79 : vector<8x512xi1>, vector<8x512xf32>
    %81 = math.tanh %80 : vector<8x512xf32>
    %cst_33 = arith.constant 5.000000e-01 : f32
    %82 = vector.broadcast %cst_33 : f32 to vector<8x512xf32>
    %83 = arith.mulf %82, %81 : vector<8x512xf32>
    %cst_34 = arith.constant 5.000000e-01 : f32
    %84 = vector.broadcast %cst_34 : f32 to vector<8x512xf32>
    %85 = arith.addf %83, %84 : vector<8x512xf32>
    %86 = arith.select %17, %81, %85 : vector<8x512xi1>, vector<8x512xf32>
    %87 = vector.extract_strided_slice %86 {offsets = [0, 0], sizes = [8, 128], strides = [1, 1]} : vector<8x512xf32> to vector<8x128xf32>
    %88 = vector.extract_strided_slice %86 {offsets = [0, 128], sizes = [8, 128], strides = [1, 1]} : vector<8x512xf32> to vector<8x128xf32>
    %89 = vector.extract_strided_slice %86 {offsets = [0, 256], sizes = [8, 128], strides = [1, 1]} : vector<8x512xf32> to vector<8x128xf32>
    %90 = vector.extract_strided_slice %86 {offsets = [0, 384], sizes = [8, 128], strides = [1, 1]} : vector<8x512xf32> to vector<8x128xf32>
    %91 = arith.mulf %88, %67 : vector<8x128xf32>
    %92 = arith.mulf %87, %89 : vector<8x128xf32>
    %93 = arith.addf %91, %92 : vector<8x128xf32>
    %94 = math.tanh %93 : vector<8x128xf32>
    %95 = arith.mulf %90, %94 : vector<8x128xf32>
    %96 = arith.index_cast %73 : i32 to index
    %c0_35 = arith.constant 0 : index
    %97 = vector.load %arg12[%96, %c0_35] : memref<64x128xf32, #tpu.memory_space<vmem>>, vector<8x128xf32>
    tpu.vector_store %arg12[%96, %c0_35], %95 {strides = array<i32>} : memref<64x128xf32, #tpu.memory_space<vmem>>, vector<8x128xf32>,
    %c3_i32 = arith.constant 3 : i32
    %c8_i32_36 = arith.constant 8 : i32
    %98 = arith.muli %c3_i32, %c8_i32_36 : i32
    %99 = tpu.assume_multiple %98, 8 : i32
    %100 = arith.index_cast %99 : i32 to index
    %c0_37 = arith.constant 0 : index
    %101 = vector.load %arg9[%100, %c0_37] : memref<64x512xf32, #tpu.memory_space<vmem>>, vector<8x512xf32>
    %cst_38 = arith.constant dense<0.000000e+00> : vector<8x512xf32>
    %102 = tpu.matmul %95, %11, %cst_38 {dimension_numbers = #tpu.dot_dimension_numbers<[1], [0], [0], [1], [0, 0, 1, 1], [], []>} : vector<8x128xf32>, vector<128x512xf32>, vector<8x512xf32> -> vector<8x512xf32>
    %103 = arith.addf %101, %102 : vector<8x512xf32>
    %cst_39 = arith.constant 5.000000e-01 : f32
    %104 = vector.broadcast %cst_39 : f32 to vector<8x512xf32>
    %105 = arith.mulf %104, %103 : vector<8x512xf32>
    %106 = arith.select %17, %103, %105 : vector<8x512xi1>, vector<8x512xf32>
    %107 = math.tanh %106 : vector<8x512xf32>
    %cst_40 = arith.constant 5.000000e-01 : f32
    %108 = vector.broadcast %cst_40 : f32 to vector<8x512xf32>
    %109 = arith.mulf %108, %107 : vector<8x512xf32>
    %cst_41 = arith.constant 5.000000e-01 : f32
    %110 = vector.broadcast %cst_41 : f32 to vector<8x512xf32>
    %111 = arith.addf %109, %110 : vector<8x512xf32>
    %112 = arith.select %17, %107, %111 : vector<8x512xi1>, vector<8x512xf32>
    %113 = vector.extract_strided_slice %112 {offsets = [0, 0], sizes = [8, 128], strides = [1, 1]} : vector<8x512xf32> to vector<8x128xf32>
    %114 = vector.extract_strided_slice %112 {offsets = [0, 128], sizes = [8, 128], strides = [1, 1]} : vector<8x512xf32> to vector<8x128xf32>
    %115 = vector.extract_strided_slice %112 {offsets = [0, 256], sizes = [8, 128], strides = [1, 1]} : vector<8x512xf32> to vector<8x128xf32>
    %116 = vector.extract_strided_slice %112 {offsets = [0, 384], sizes = [8, 128], strides = [1, 1]} : vector<8x512xf32> to vector<8x128xf32>
    %117 = arith.mulf %114, %93 : vector<8x128xf32>
    %118 = arith.mulf %113, %115 : vector<8x128xf32>
    %119 = arith.addf %117, %118 : vector<8x128xf32>
    %120 = math.tanh %119 : vector<8x128xf32>
    %121 = arith.mulf %116, %120 : vector<8x128xf32>
    %122 = arith.index_cast %99 : i32 to index
    %c0_42 = arith.constant 0 : index
    %123 = vector.load %arg12[%122, %c0_42] : memref<64x128xf32, #tpu.memory_space<vmem>>, vector<8x128xf32>
    tpu.vector_store %arg12[%122, %c0_42], %121 {strides = array<i32>} : memref<64x128xf32, #tpu.memory_space<vmem>>, vector<8x128xf32>,
    %c4_i32 = arith.constant 4 : i32
    %c8_i32_43 = arith.constant 8 : i32
    %124 = arith.muli %c4_i32, %c8_i32_43 : i32
    %125 = tpu.assume_multiple %124, 8 : i32
    %126 = arith.index_cast %125 : i32 to index
    %c0_44 = arith.constant 0 : index
    %127 = vector.load %arg9[%126, %c0_44] : memref<64x512xf32, #tpu.memory_space<vmem>>, vector<8x512xf32>
    %cst_45 = arith.constant dense<0.000000e+00> : vector<8x512xf32>
    %128 = tpu.matmul %121, %11, %cst_45 {dimension_numbers = #tpu.dot_dimension_numbers<[1], [0], [0], [1], [0, 0, 1, 1], [], []>} : vector<8x128xf32>, vector<128x512xf32>, vector<8x512xf32> -> vector<8x512xf32>
    %129 = arith.addf %127, %128 : vector<8x512xf32>
    %cst_46 = arith.constant 5.000000e-01 : f32
    %130 = vector.broadcast %cst_46 : f32 to vector<8x512xf32>
    %131 = arith.mulf %130, %129 : vector<8x512xf32>
    %132 = arith.select %17, %129, %131 : vector<8x512xi1>, vector<8x512xf32>
    %133 = math.tanh %132 : vector<8x512xf32>
    %cst_47 = arith.constant 5.000000e-01 : f32
    %134 = vector.broadcast %cst_47 : f32 to vector<8x512xf32>
    %135 = arith.mulf %134, %133 : vector<8x512xf32>
    %cst_48 = arith.constant 5.000000e-01 : f32
    %136 = vector.broadcast %cst_48 : f32 to vector<8x512xf32>
    %137 = arith.addf %135, %136 : vector<8x512xf32>
    %138 = arith.select %17, %133, %137 : vector<8x512xi1>, vector<8x512xf32>
    %139 = vector.extract_strided_slice %138 {offsets = [0, 0], sizes = [8, 128], strides = [1, 1]} : vector<8x512xf32> to vector<8x128xf32>
    %140 = vector.extract_strided_slice %138 {offsets = [0, 128], sizes = [8, 128], strides = [1, 1]} : vector<8x512xf32> to vector<8x128xf32>
    %141 = vector.extract_strided_slice %138 {offsets = [0, 256], sizes = [8, 128], strides = [1, 1]} : vector<8x512xf32> to vector<8x128xf32>
    %142 = vector.extract_strided_slice %138 {offsets = [0, 384], sizes = [8, 128], strides = [1, 1]} : vector<8x512xf32> to vector<8x128xf32>
    %143 = arith.mulf %140, %119 : vector<8x128xf32>
    %144 = arith.mulf %139, %141 : vector<8x128xf32>
    %145 = arith.addf %143, %144 : vector<8x128xf32>
    %146 = math.tanh %145 : vector<8x128xf32>
    %147 = arith.mulf %142, %146 : vector<8x128xf32>
    %148 = arith.index_cast %125 : i32 to index
    %c0_49 = arith.constant 0 : index
    %149 = vector.load %arg12[%148, %c0_49] : memref<64x128xf32, #tpu.memory_space<vmem>>, vector<8x128xf32>
    tpu.vector_store %arg12[%148, %c0_49], %147 {strides = array<i32>} : memref<64x128xf32, #tpu.memory_space<vmem>>, vector<8x128xf32>,
    %c5_i32 = arith.constant 5 : i32
    %c8_i32_50 = arith.constant 8 : i32
    %150 = arith.muli %c5_i32, %c8_i32_50 : i32
    %151 = tpu.assume_multiple %150, 8 : i32
    %152 = arith.index_cast %151 : i32 to index
    %c0_51 = arith.constant 0 : index
    %153 = vector.load %arg9[%152, %c0_51] : memref<64x512xf32, #tpu.memory_space<vmem>>, vector<8x512xf32>
    %cst_52 = arith.constant dense<0.000000e+00> : vector<8x512xf32>
    %154 = tpu.matmul %147, %11, %cst_52 {dimension_numbers = #tpu.dot_dimension_numbers<[1], [0], [0], [1], [0, 0, 1, 1], [], []>} : vector<8x128xf32>, vector<128x512xf32>, vector<8x512xf32> -> vector<8x512xf32>
    %155 = arith.addf %153, %154 : vector<8x512xf32>
    %cst_53 = arith.constant 5.000000e-01 : f32
    %156 = vector.broadcast %cst_53 : f32 to vector<8x512xf32>
    %157 = arith.mulf %156, %155 : vector<8x512xf32>
    %158 = arith.select %17, %155, %157 : vector<8x512xi1>, vector<8x512xf32>
    %159 = math.tanh %158 : vector<8x512xf32>
    %cst_54 = arith.constant 5.000000e-01 : f32
    %160 = vector.broadcast %cst_54 : f32 to vector<8x512xf32>
    %161 = arith.mulf %160, %159 : vector<8x512xf32>
    %cst_55 = arith.constant 5.000000e-01 : f32
    %162 = vector.broadcast %cst_55 : f32 to vector<8x512xf32>
    %163 = arith.addf %161, %162 : vector<8x512xf32>
    %164 = arith.select %17, %159, %163 : vector<8x512xi1>, vector<8x512xf32>
    %165 = vector.extract_strided_slice %164 {offsets = [0, 0], sizes = [8, 128], strides = [1, 1]} : vector<8x512xf32> to vector<8x128xf32>
    %166 = vector.extract_strided_slice %164 {offsets = [0, 128], sizes = [8, 128], strides = [1, 1]} : vector<8x512xf32> to vector<8x128xf32>
    %167 = vector.extract_strided_slice %164 {offsets = [0, 256], sizes = [8, 128], strides = [1, 1]} : vector<8x512xf32> to vector<8x128xf32>
    %168 = vector.extract_strided_slice %164 {offsets = [0, 384], sizes = [8, 128], strides = [1, 1]} : vector<8x512xf32> to vector<8x128xf32>
    %169 = arith.mulf %166, %145 : vector<8x128xf32>
    %170 = arith.mulf %165, %167 : vector<8x128xf32>
    %171 = arith.addf %169, %170 : vector<8x128xf32>
    %172 = math.tanh %171 : vector<8x128xf32>
    %173 = arith.mulf %168, %172 : vector<8x128xf32>
    %174 = arith.index_cast %151 : i32 to index
    %c0_56 = arith.constant 0 : index
    %175 = vector.load %arg12[%174, %c0_56] : memref<64x128xf32, #tpu.memory_space<vmem>>, vector<8x128xf32>
    tpu.vector_store %arg12[%174, %c0_56], %173 {strides = array<i32>} : memref<64x128xf32, #tpu.memory_space<vmem>>, vector<8x128xf32>,
    %c6_i32 = arith.constant 6 : i32
    %c8_i32_57 = arith.constant 8 : i32
    %176 = arith.muli %c6_i32, %c8_i32_57 : i32
    %177 = tpu.assume_multiple %176, 8 : i32
    %178 = arith.index_cast %177 : i32 to index
    %c0_58 = arith.constant 0 : index
    %179 = vector.load %arg9[%178, %c0_58] : memref<64x512xf32, #tpu.memory_space<vmem>>, vector<8x512xf32>
    %cst_59 = arith.constant dense<0.000000e+00> : vector<8x512xf32>
    %180 = tpu.matmul %173, %11, %cst_59 {dimension_numbers = #tpu.dot_dimension_numbers<[1], [0], [0], [1], [0, 0, 1, 1], [], []>} : vector<8x128xf32>, vector<128x512xf32>, vector<8x512xf32> -> vector<8x512xf32>
    %181 = arith.addf %179, %180 : vector<8x512xf32>
    %cst_60 = arith.constant 5.000000e-01 : f32
    %182 = vector.broadcast %cst_60 : f32 to vector<8x512xf32>
    %183 = arith.mulf %182, %181 : vector<8x512xf32>
    %184 = arith.select %17, %181, %183 : vector<8x512xi1>, vector<8x512xf32>
    %185 = math.tanh %184 : vector<8x512xf32>
    %cst_61 = arith.constant 5.000000e-01 : f32
    %186 = vector.broadcast %cst_61 : f32 to vector<8x512xf32>
    %187 = arith.mulf %186, %185 : vector<8x512xf32>
    %cst_62 = arith.constant 5.000000e-01 : f32
    %188 = vector.broadcast %cst_62 : f32 to vector<8x512xf32>
    %189 = arith.addf %187, %188 : vector<8x512xf32>
    %190 = arith.select %17, %185, %189 : vector<8x512xi1>, vector<8x512xf32>
    %191 = vector.extract_strided_slice %190 {offsets = [0, 0], sizes = [8, 128], strides = [1, 1]} : vector<8x512xf32> to vector<8x128xf32>
    %192 = vector.extract_strided_slice %190 {offsets = [0, 128], sizes = [8, 128], strides = [1, 1]} : vector<8x512xf32> to vector<8x128xf32>
    %193 = vector.extract_strided_slice %190 {offsets = [0, 256], sizes = [8, 128], strides = [1, 1]} : vector<8x512xf32> to vector<8x128xf32>
    %194 = vector.extract_strided_slice %190 {offsets = [0, 384], sizes = [8, 128], strides = [1, 1]} : vector<8x512xf32> to vector<8x128xf32>
    %195 = arith.mulf %192, %171 : vector<8x128xf32>
    %196 = arith.mulf %191, %193 : vector<8x128xf32>
    %197 = arith.addf %195, %196 : vector<8x128xf32>
    %198 = math.tanh %197 : vector<8x128xf32>
    %199 = arith.mulf %194, %198 : vector<8x128xf32>
    %200 = arith.index_cast %177 : i32 to index
    %c0_63 = arith.constant 0 : index
    %201 = vector.load %arg12[%200, %c0_63] : memref<64x128xf32, #tpu.memory_space<vmem>>, vector<8x128xf32>
    tpu.vector_store %arg12[%200, %c0_63], %199 {strides = array<i32>} : memref<64x128xf32, #tpu.memory_space<vmem>>, vector<8x128xf32>,
    %c7_i32 = arith.constant 7 : i32
    %c8_i32_64 = arith.constant 8 : i32
    %202 = arith.muli %c7_i32, %c8_i32_64 : i32
    %203 = tpu.assume_multiple %202, 8 : i32
    %204 = arith.index_cast %203 : i32 to index
    %c0_65 = arith.constant 0 : index
    %205 = vector.load %arg9[%204, %c0_65] : memref<64x512xf32, #tpu.memory_space<vmem>>, vector<8x512xf32>
    %cst_66 = arith.constant dense<0.000000e+00> : vector<8x512xf32>
    %206 = tpu.matmul %199, %11, %cst_66 {dimension_numbers = #tpu.dot_dimension_numbers<[1], [0], [0], [1], [0, 0, 1, 1], [], []>} : vector<8x128xf32>, vector<128x512xf32>, vector<8x512xf32> -> vector<8x512xf32>
    %207 = arith.addf %205, %206 : vector<8x512xf32>
    %cst_67 = arith.constant 5.000000e-01 : f32
    %208 = vector.broadcast %cst_67 : f32 to vector<8x512xf32>
    %209 = arith.mulf %208, %207 : vector<8x512xf32>
    %210 = arith.select %17, %207, %209 : vector<8x512xi1>, vector<8x512xf32>
    %211 = math.tanh %210 : vector<8x512xf32>
    %cst_68 = arith.constant 5.000000e-01 : f32
    %212 = vector.broadcast %cst_68 : f32 to vector<8x512xf32>
    %213 = arith.mulf %212, %211 : vector<8x512xf32>
    %cst_69 = arith.constant 5.000000e-01 : f32
    %214 = vector.broadcast %cst_69 : f32 to vector<8x512xf32>
    %215 = arith.addf %213, %214 : vector<8x512xf32>
    %216 = arith.select %17, %211, %215 : vector<8x512xi1>, vector<8x512xf32>
    %217 = vector.extract_strided_slice %216 {offsets = [0, 0], sizes = [8, 128], strides = [1, 1]} : vector<8x512xf32> to vector<8x128xf32>
    %218 = vector.extract_strided_slice %216 {offsets = [0, 128], sizes = [8, 128], strides = [1, 1]} : vector<8x512xf32> to vector<8x128xf32>
    %219 = vector.extract_strided_slice %216 {offsets = [0, 256], sizes = [8, 128], strides = [1, 1]} : vector<8x512xf32> to vector<8x128xf32>
    %220 = vector.extract_strided_slice %216 {offsets = [0, 384], sizes = [8, 128], strides = [1, 1]} : vector<8x512xf32> to vector<8x128xf32>
    %221 = arith.mulf %218, %197 : vector<8x128xf32>
    %222 = arith.mulf %217, %219 : vector<8x128xf32>
    %223 = arith.addf %221, %222 : vector<8x128xf32>
    %224 = math.tanh %223 : vector<8x128xf32>
    %225 = arith.mulf %220, %224 : vector<8x128xf32>
    %226 = arith.index_cast %203 : i32 to index
    %c0_70 = arith.constant 0 : index
    %227 = vector.load %arg12[%226, %c0_70] : memref<64x128xf32, #tpu.memory_space<vmem>>, vector<8x128xf32>
    tpu.vector_store %arg12[%226, %c0_70], %225 {strides = array<i32>} : memref<64x128xf32, #tpu.memory_space<vmem>>, vector<8x128xf32>,
    %c8_i32_71 = arith.constant 8 : i32
    %c0_72 = arith.constant 0 : index
    %c0_73 = arith.constant 0 : index
    %228 = vector.load %arg10[%c0_72, %c0_73] : memref<8x128xf32, #tpu.memory_space<vmem>>, vector<8x128xf32>
    tpu.vector_store %arg10[%c0_72, %c0_73], %225 {strides = array<i32>} : memref<8x128xf32, #tpu.memory_space<vmem>>, vector<8x128xf32>,
    %c0_74 = arith.constant 0 : index
    %c0_75 = arith.constant 0 : index
    %229 = vector.load %arg11[%c0_74, %c0_75] : memref<8x128xf32, #tpu.memory_space<vmem>>, vector<8x128xf32>
    tpu.vector_store %arg11[%c0_74, %c0_75], %223 {strides = array<i32>} : memref<8x128xf32, #tpu.memory_space<vmem>>, vector<8x128xf32>,
    %c0_76 = arith.constant 0 : index
    %c0_77 = arith.constant 0 : index
    %230 = vector.load %arg12[%c0_76, %c0_77] : memref<64x128xf32, #tpu.memory_space<vmem>>, vector<64x128xf32>
    %c0_78 = arith.constant 0 : index
    %c0_79 = arith.constant 0 : index
    %231 = vector.load %arg6[%c0_78, %c0_79] : memref<128x128xf32, #tpu.memory_space<vmem>>, vector<128x128xf32>
    %cst_80 = arith.constant dense<0.000000e+00> : vector<64x128xf32>
    %232 = tpu.matmul %230, %231, %cst_80 {dimension_numbers = #tpu.dot_dimension_numbers<[1], [0], [0], [1], [0, 0, 1, 1], [], []>} : vector<64x128xf32>, vector<128x128xf32>, vector<64x128xf32> -> vector<64x128xf32>
    %c0_81 = arith.constant 0 : index
    %c0_82 = arith.constant 0 : index
    %233 = vector.load %arg7[%c0_81, %c0_82] : memref<1x128xf32, #tpu.memory_space<vmem>>, vector<1x128xf32>
    %234 = vector.broadcast %233 : vector<1x128xf32> to vector<64x128xf32>
    %235 = arith.addf %232, %234 : vector<64x128xf32>
    %cst_83 = arith.constant 0.000000e+00 : f32
    %236 = vector.broadcast %cst_83 : f32 to vector<64x128xf32>
    %237 = arith.maximumf %235, %236 : vector<64x128xf32>
    %c0_84 = arith.constant 0 : index
    %c0_85 = arith.constant 0 : index
    %c0_86 = arith.constant 0 : index
    %238 = vector.load %arg8[%c0_84, %c0_85, %c0_86] : memref<1x64x128xf32, #tpu.memory_space<vmem>>, vector<1x64x128xf32>
    %239 = vector.shape_cast %238 : vector<1x64x128xf32> to vector<64x128xf32>
    %240 = vector.shape_cast %237 : vector<64x128xf32> to vector<1x64x128xf32>
    tpu.vector_store %arg8[%c0_84, %c0_85, %c0_86], %240 {strides = array<i32>} : memref<1x64x128xf32, #tpu.memory_space<vmem>>, vector<1x64x128xf32>,
    return
  }
  func.func @transform_0(%arg0: i32, %arg1: i32) -> (i32, i32, i32) {
    %c0_i32 = arith.constant 0 : i32
    %c0_i32_0 = arith.constant 0 : i32
    return %arg0, %arg1, %c0_i32 : i32, i32, i32
  }
  func.func @transform_1(%arg0: i32, %arg1: i32) -> (i32, i32) {
    %c0_i32 = arith.constant 0 : i32
    %c0_i32_0 = arith.constant 0 : i32
    %c0_i32_1 = arith.constant 0 : i32
    return %c0_i32, %c0_i32_0 : i32, i32
  }
  func.func @transform_2(%arg0: i32, %arg1: i32) -> (i32, i32) {
    %c0_i32 = arith.constant 0 : i32
    %c0_i32_0 = arith.constant 0 : i32
    %c0_i32_1 = arith.constant 0 : i32
    return %c0_i32, %c0_i32_0 : i32, i32
  }
  func.func @transform_3(%arg0: i32, %arg1: i32) -> (i32, i32) {
    %c0_i32 = arith.constant 0 : i32
    %c0_i32_0 = arith.constant 0 : i32
    %c0_i32_1 = arith.constant 0 : i32
    return %c0_i32, %c0_i32_0 : i32, i32
  }
  func.func @transform_4(%arg0: i32, %arg1: i32) -> (i32, i32) {
    %c0_i32 = arith.constant 0 : i32
    %c0_i32_0 = arith.constant 0 : i32
    %c0_i32_1 = arith.constant 0 : i32
    return %c0_i32, %c0_i32_0 : i32, i32
  }
  func.func @transform_5(%arg0: i32, %arg1: i32) -> (i32, i32) {
    %c0_i32 = arith.constant 0 : i32
    %c0_i32_0 = arith.constant 0 : i32
    %c0_i32_1 = arith.constant 0 : i32
    return %c0_i32, %c0_i32_0 : i32, i32
  }
  func.func @transform_6(%arg0: i32, %arg1: i32) -> (i32, i32, i32) {
    %c0_i32 = arith.constant 0 : i32
    %c0_i32_0 = arith.constant 0 : i32
    return %arg0, %arg1, %c0_i32 : i32, i32, i32
  }
}

module attributes {stable_mosaic.version = 11 : i64} {
  func.func @kernel(%arg0: i32, %arg1: i32, %arg2: memref<1x64x128xf32, #tpu.memory_space<vmem>>, %arg3: memref<128x512xf32, #tpu.memory_space<vmem>>, %arg4: memref<128x512xf32, #tpu.memory_space<vmem>>, %arg5: memref<1x512xf32, #tpu.memory_space<vmem>>, %arg6: memref<1x64x128xf32, #tpu.memory_space<vmem>>, %arg7: memref<64x512xf32, #tpu.memory_space<vmem>>, %arg8: memref<8x128xf32, #tpu.memory_space<vmem>>, %arg9: memref<8x128xf32, #tpu.memory_space<vmem>>) attributes {dimension_semantics = [#tpu.dimension_semantics<parallel>, #tpu.dimension_semantics<arbitrary>], iteration_bounds = array<i64: 1, 1>, scalar_prefetch = 0 : i64, scratch_operands = 3 : i64, tpu.core_type = #tpu.core_type<tc>, window_params = [{transform_indices = @transform_0, window_bounds = array<i64: 1, 64, 128>}, {pipeline_mode = #tpu.pipeline_mode<synchronous>, transform_indices = @transform_1, window_bounds = array<i64: 128, 512>}, {pipeline_mode = #tpu.pipeline_mode<synchronous>, transform_indices = @transform_2, window_bounds = array<i64: 128, 512>}, {pipeline_mode = #tpu.pipeline_mode<synchronous>, transform_indices = @transform_3, window_bounds = array<i64: 1, 512>}, {transform_indices = @transform_4, window_bounds = array<i64: 1, 64, 128>}]} {
    %c0_i32 = arith.constant 0 : i32
    %0 = arith.cmpi eq, %arg1, %c0_i32 : i32
    %1 = arith.extui %0 : i1 to i32
    %c0_i32_0 = arith.constant 0 : i32
    %2 = arith.cmpi ne, %1, %c0_i32_0 : i32
    scf.if %2 {
      %cst_84 = arith.constant 0.000000e+00 : f32
      %246 = vector.broadcast %cst_84 : f32 to vector<8x128xf32>
      %c0_85 = arith.constant 0 : index
      %c0_86 = arith.constant 0 : index
      %247 = vector.load %arg8[%c0_85, %c0_86] : memref<8x128xf32, #tpu.memory_space<vmem>>, vector<8x128xf32>
      tpu.vector_store %arg8[%c0_85, %c0_86], %246 {strides = array<i32>} : memref<8x128xf32, #tpu.memory_space<vmem>>, vector<8x128xf32>,
      %cst_87 = arith.constant 0.000000e+00 : f32
      %248 = vector.broadcast %cst_87 : f32 to vector<8x128xf32>
      %c0_88 = arith.constant 0 : index
      %c0_89 = arith.constant 0 : index
      %249 = vector.load %arg9[%c0_88, %c0_89] : memref<8x128xf32, #tpu.memory_space<vmem>>, vector<8x128xf32>
      tpu.vector_store %arg9[%c0_88, %c0_89], %248 {strides = array<i32>} : memref<8x128xf32, #tpu.memory_space<vmem>>, vector<8x128xf32>,
    } else {
    }
    %c0 = arith.constant 0 : index
    %c0_1 = arith.constant 0 : index
    %c0_2 = arith.constant 0 : index
    %3 = vector.load %arg2[%c0, %c0_1, %c0_2] : memref<1x64x128xf32, #tpu.memory_space<vmem>>, vector<1x64x128xf32>
    %4 = vector.shape_cast %3 : vector<1x64x128xf32> to vector<64x128xf32>
    %c0_3 = arith.constant 0 : index
    %c0_4 = arith.constant 0 : index
    %5 = vector.load %arg3[%c0_3, %c0_4] : memref<128x512xf32, #tpu.memory_space<vmem>>, vector<128x512xf32>
    %cst = arith.constant dense<0.000000e+00> : vector<64x512xf32>
    %6 = tpu.matmul %4, %5, %cst {dimension_numbers = #tpu.dot_dimension_numbers<[1], [0], [0], [1], [0, 0, 1, 1], [], []>} : vector<64x128xf32>, vector<128x512xf32>, vector<64x512xf32> -> vector<64x512xf32>
    %c0_5 = arith.constant 0 : index
    %c0_6 = arith.constant 0 : index
    %7 = vector.load %arg5[%c0_5, %c0_6] : memref<1x512xf32, #tpu.memory_space<vmem>>, vector<1x512xf32>
    %8 = vector.broadcast %7 : vector<1x512xf32> to vector<64x512xf32>
    %9 = arith.addf %6, %8 : vector<64x512xf32>
    %c0_7 = arith.constant 0 : index
    %c0_8 = arith.constant 0 : index
    %10 = vector.load %arg7[%c0_7, %c0_8] : memref<64x512xf32, #tpu.memory_space<vmem>>, vector<64x512xf32>
    tpu.vector_store %arg7[%c0_7, %c0_8], %9 {strides = array<i32>} : memref<64x512xf32, #tpu.memory_space<vmem>>, vector<64x512xf32>,
    %c0_9 = arith.constant 0 : index
    %c0_10 = arith.constant 0 : index
    %11 = vector.load %arg4[%c0_9, %c0_10] : memref<128x512xf32, #tpu.memory_space<vmem>>, vector<128x512xf32>
    %12 = tpu.iota {dimensions = array<i32: 1>} : vector<8x512xi32>
    %c256_i32 = arith.constant 256 : i32
    %13 = vector.broadcast %c256_i32 : i32 to vector<8x512xi32>
    %14 = arith.cmpi sge, %12, %13 : vector<8x512xi32>
    %c384_i32 = arith.constant 384 : i32
    %15 = vector.broadcast %c384_i32 : i32 to vector<8x512xi32>
    %16 = arith.cmpi slt, %12, %15 : vector<8x512xi32>
    %17 = arith.andi %14, %16 : vector<8x512xi1>
    %c0_11 = arith.constant 0 : index
    %c0_12 = arith.constant 0 : index
    %18 = vector.load %arg8[%c0_11, %c0_12] : memref<8x128xf32, #tpu.memory_space<vmem>>, vector<8x128xf32>
    %c0_13 = arith.constant 0 : index
    %c0_14 = arith.constant 0 : index
    %19 = vector.load %arg9[%c0_13, %c0_14] : memref<8x128xf32, #tpu.memory_space<vmem>>, vector<8x128xf32>
    %c0_i32_15 = arith.constant 0 : i32
    %c8_i32 = arith.constant 8 : i32
    %20 = arith.muli %c0_i32_15, %c8_i32 : i32
    %21 = tpu.assume_multiple %20, 8 : i32
    %22 = arith.index_cast %21 : i32 to index
    %c0_16 = arith.constant 0 : index
    %23 = vector.load %arg7[%22, %c0_16] : memref<64x512xf32, #tpu.memory_space<vmem>>, vector<8x512xf32>
    %cst_17 = arith.constant dense<0.000000e+00> : vector<8x512xf32>
    %24 = tpu.matmul %18, %11, %cst_17 {dimension_numbers = #tpu.dot_dimension_numbers<[1], [0], [0], [1], [0, 0, 1, 1], [], []>} : vector<8x128xf32>, vector<128x512xf32>, vector<8x512xf32> -> vector<8x512xf32>
    %25 = arith.addf %23, %24 : vector<8x512xf32>
    %cst_18 = arith.constant 5.000000e-01 : f32
    %26 = vector.broadcast %cst_18 : f32 to vector<8x512xf32>
    %27 = arith.mulf %26, %25 : vector<8x512xf32>
    %28 = arith.select %17, %25, %27 : vector<8x512xi1>, vector<8x512xf32>
    %29 = math.tanh %28 : vector<8x512xf32>
    %cst_19 = arith.constant 5.000000e-01 : f32
    %30 = vector.broadcast %cst_19 : f32 to vector<8x512xf32>
    %31 = arith.mulf %30, %29 : vector<8x512xf32>
    %cst_20 = arith.constant 5.000000e-01 : f32
    %32 = vector.broadcast %cst_20 : f32 to vector<8x512xf32>
    %33 = arith.addf %31, %32 : vector<8x512xf32>
    %34 = arith.select %17, %29, %33 : vector<8x512xi1>, vector<8x512xf32>
    %35 = vector.extract_strided_slice %34 {offsets = [0, 0], sizes = [8, 128], strides = [1, 1]} : vector<8x512xf32> to vector<8x128xf32>
    %36 = vector.extract_strided_slice %34 {offsets = [0, 128], sizes = [8, 128], strides = [1, 1]} : vector<8x512xf32> to vector<8x128xf32>
    %37 = vector.extract_strided_slice %34 {offsets = [0, 256], sizes = [8, 128], strides = [1, 1]} : vector<8x512xf32> to vector<8x128xf32>
    %38 = vector.extract_strided_slice %34 {offsets = [0, 384], sizes = [8, 128], strides = [1, 1]} : vector<8x512xf32> to vector<8x128xf32>
    %39 = arith.mulf %36, %19 : vector<8x128xf32>
    %40 = arith.mulf %35, %37 : vector<8x128xf32>
    %41 = arith.addf %39, %40 : vector<8x128xf32>
    %42 = math.tanh %41 : vector<8x128xf32>
    %43 = arith.mulf %38, %42 : vector<8x128xf32>
    %c0_21 = arith.constant 0 : index
    %44 = arith.index_cast %21 : i32 to index
    %c0_22 = arith.constant 0 : index
    %45 = vector.load %arg6[%c0_21, %44, %c0_22] : memref<1x64x128xf32, #tpu.memory_space<vmem>>, vector<1x8x128xf32>
    %46 = vector.shape_cast %45 : vector<1x8x128xf32> to vector<8x128xf32>
    %47 = vector.shape_cast %43 : vector<8x128xf32> to vector<1x8x128xf32>
    tpu.vector_store %arg6[%c0_21, %44, %c0_22], %47 {strides = array<i32>} : memref<1x64x128xf32, #tpu.memory_space<vmem>>, vector<1x8x128xf32>,
    %c1_i32 = arith.constant 1 : i32
    %c8_i32_23 = arith.constant 8 : i32
    %48 = arith.muli %c1_i32, %c8_i32_23 : i32
    %49 = tpu.assume_multiple %48, 8 : i32
    %50 = arith.index_cast %49 : i32 to index
    %c0_24 = arith.constant 0 : index
    %51 = vector.load %arg7[%50, %c0_24] : memref<64x512xf32, #tpu.memory_space<vmem>>, vector<8x512xf32>
    %cst_25 = arith.constant dense<0.000000e+00> : vector<8x512xf32>
    %52 = tpu.matmul %43, %11, %cst_25 {dimension_numbers = #tpu.dot_dimension_numbers<[1], [0], [0], [1], [0, 0, 1, 1], [], []>} : vector<8x128xf32>, vector<128x512xf32>, vector<8x512xf32> -> vector<8x512xf32>
    %53 = arith.addf %51, %52 : vector<8x512xf32>
    %cst_26 = arith.constant 5.000000e-01 : f32
    %54 = vector.broadcast %cst_26 : f32 to vector<8x512xf32>
    %55 = arith.mulf %54, %53 : vector<8x512xf32>
    %56 = arith.select %17, %53, %55 : vector<8x512xi1>, vector<8x512xf32>
    %57 = math.tanh %56 : vector<8x512xf32>
    %cst_27 = arith.constant 5.000000e-01 : f32
    %58 = vector.broadcast %cst_27 : f32 to vector<8x512xf32>
    %59 = arith.mulf %58, %57 : vector<8x512xf32>
    %cst_28 = arith.constant 5.000000e-01 : f32
    %60 = vector.broadcast %cst_28 : f32 to vector<8x512xf32>
    %61 = arith.addf %59, %60 : vector<8x512xf32>
    %62 = arith.select %17, %57, %61 : vector<8x512xi1>, vector<8x512xf32>
    %63 = vector.extract_strided_slice %62 {offsets = [0, 0], sizes = [8, 128], strides = [1, 1]} : vector<8x512xf32> to vector<8x128xf32>
    %64 = vector.extract_strided_slice %62 {offsets = [0, 128], sizes = [8, 128], strides = [1, 1]} : vector<8x512xf32> to vector<8x128xf32>
    %65 = vector.extract_strided_slice %62 {offsets = [0, 256], sizes = [8, 128], strides = [1, 1]} : vector<8x512xf32> to vector<8x128xf32>
    %66 = vector.extract_strided_slice %62 {offsets = [0, 384], sizes = [8, 128], strides = [1, 1]} : vector<8x512xf32> to vector<8x128xf32>
    %67 = arith.mulf %64, %41 : vector<8x128xf32>
    %68 = arith.mulf %63, %65 : vector<8x128xf32>
    %69 = arith.addf %67, %68 : vector<8x128xf32>
    %70 = math.tanh %69 : vector<8x128xf32>
    %71 = arith.mulf %66, %70 : vector<8x128xf32>
    %c0_29 = arith.constant 0 : index
    %72 = arith.index_cast %49 : i32 to index
    %c0_30 = arith.constant 0 : index
    %73 = vector.load %arg6[%c0_29, %72, %c0_30] : memref<1x64x128xf32, #tpu.memory_space<vmem>>, vector<1x8x128xf32>
    %74 = vector.shape_cast %73 : vector<1x8x128xf32> to vector<8x128xf32>
    %75 = vector.shape_cast %71 : vector<8x128xf32> to vector<1x8x128xf32>
    tpu.vector_store %arg6[%c0_29, %72, %c0_30], %75 {strides = array<i32>} : memref<1x64x128xf32, #tpu.memory_space<vmem>>, vector<1x8x128xf32>,
    %c2_i32 = arith.constant 2 : i32
    %c8_i32_31 = arith.constant 8 : i32
    %76 = arith.muli %c2_i32, %c8_i32_31 : i32
    %77 = tpu.assume_multiple %76, 8 : i32
    %78 = arith.index_cast %77 : i32 to index
    %c0_32 = arith.constant 0 : index
    %79 = vector.load %arg7[%78, %c0_32] : memref<64x512xf32, #tpu.memory_space<vmem>>, vector<8x512xf32>
    %cst_33 = arith.constant dense<0.000000e+00> : vector<8x512xf32>
    %80 = tpu.matmul %71, %11, %cst_33 {dimension_numbers = #tpu.dot_dimension_numbers<[1], [0], [0], [1], [0, 0, 1, 1], [], []>} : vector<8x128xf32>, vector<128x512xf32>, vector<8x512xf32> -> vector<8x512xf32>
    %81 = arith.addf %79, %80 : vector<8x512xf32>
    %cst_34 = arith.constant 5.000000e-01 : f32
    %82 = vector.broadcast %cst_34 : f32 to vector<8x512xf32>
    %83 = arith.mulf %82, %81 : vector<8x512xf32>
    %84 = arith.select %17, %81, %83 : vector<8x512xi1>, vector<8x512xf32>
    %85 = math.tanh %84 : vector<8x512xf32>
    %cst_35 = arith.constant 5.000000e-01 : f32
    %86 = vector.broadcast %cst_35 : f32 to vector<8x512xf32>
    %87 = arith.mulf %86, %85 : vector<8x512xf32>
    %cst_36 = arith.constant 5.000000e-01 : f32
    %88 = vector.broadcast %cst_36 : f32 to vector<8x512xf32>
    %89 = arith.addf %87, %88 : vector<8x512xf32>
    %90 = arith.select %17, %85, %89 : vector<8x512xi1>, vector<8x512xf32>
    %91 = vector.extract_strided_slice %90 {offsets = [0, 0], sizes = [8, 128], strides = [1, 1]} : vector<8x512xf32> to vector<8x128xf32>
    %92 = vector.extract_strided_slice %90 {offsets = [0, 128], sizes = [8, 128], strides = [1, 1]} : vector<8x512xf32> to vector<8x128xf32>
    %93 = vector.extract_strided_slice %90 {offsets = [0, 256], sizes = [8, 128], strides = [1, 1]} : vector<8x512xf32> to vector<8x128xf32>
    %94 = vector.extract_strided_slice %90 {offsets = [0, 384], sizes = [8, 128], strides = [1, 1]} : vector<8x512xf32> to vector<8x128xf32>
    %95 = arith.mulf %92, %69 : vector<8x128xf32>
    %96 = arith.mulf %91, %93 : vector<8x128xf32>
    %97 = arith.addf %95, %96 : vector<8x128xf32>
    %98 = math.tanh %97 : vector<8x128xf32>
    %99 = arith.mulf %94, %98 : vector<8x128xf32>
    %c0_37 = arith.constant 0 : index
    %100 = arith.index_cast %77 : i32 to index
    %c0_38 = arith.constant 0 : index
    %101 = vector.load %arg6[%c0_37, %100, %c0_38] : memref<1x64x128xf32, #tpu.memory_space<vmem>>, vector<1x8x128xf32>
    %102 = vector.shape_cast %101 : vector<1x8x128xf32> to vector<8x128xf32>
    %103 = vector.shape_cast %99 : vector<8x128xf32> to vector<1x8x128xf32>
    tpu.vector_store %arg6[%c0_37, %100, %c0_38], %103 {strides = array<i32>} : memref<1x64x128xf32, #tpu.memory_space<vmem>>, vector<1x8x128xf32>,
    %c3_i32 = arith.constant 3 : i32
    %c8_i32_39 = arith.constant 8 : i32
    %104 = arith.muli %c3_i32, %c8_i32_39 : i32
    %105 = tpu.assume_multiple %104, 8 : i32
    %106 = arith.index_cast %105 : i32 to index
    %c0_40 = arith.constant 0 : index
    %107 = vector.load %arg7[%106, %c0_40] : memref<64x512xf32, #tpu.memory_space<vmem>>, vector<8x512xf32>
    %cst_41 = arith.constant dense<0.000000e+00> : vector<8x512xf32>
    %108 = tpu.matmul %99, %11, %cst_41 {dimension_numbers = #tpu.dot_dimension_numbers<[1], [0], [0], [1], [0, 0, 1, 1], [], []>} : vector<8x128xf32>, vector<128x512xf32>, vector<8x512xf32> -> vector<8x512xf32>
    %109 = arith.addf %107, %108 : vector<8x512xf32>
    %cst_42 = arith.constant 5.000000e-01 : f32
    %110 = vector.broadcast %cst_42 : f32 to vector<8x512xf32>
    %111 = arith.mulf %110, %109 : vector<8x512xf32>
    %112 = arith.select %17, %109, %111 : vector<8x512xi1>, vector<8x512xf32>
    %113 = math.tanh %112 : vector<8x512xf32>
    %cst_43 = arith.constant 5.000000e-01 : f32
    %114 = vector.broadcast %cst_43 : f32 to vector<8x512xf32>
    %115 = arith.mulf %114, %113 : vector<8x512xf32>
    %cst_44 = arith.constant 5.000000e-01 : f32
    %116 = vector.broadcast %cst_44 : f32 to vector<8x512xf32>
    %117 = arith.addf %115, %116 : vector<8x512xf32>
    %118 = arith.select %17, %113, %117 : vector<8x512xi1>, vector<8x512xf32>
    %119 = vector.extract_strided_slice %118 {offsets = [0, 0], sizes = [8, 128], strides = [1, 1]} : vector<8x512xf32> to vector<8x128xf32>
    %120 = vector.extract_strided_slice %118 {offsets = [0, 128], sizes = [8, 128], strides = [1, 1]} : vector<8x512xf32> to vector<8x128xf32>
    %121 = vector.extract_strided_slice %118 {offsets = [0, 256], sizes = [8, 128], strides = [1, 1]} : vector<8x512xf32> to vector<8x128xf32>
    %122 = vector.extract_strided_slice %118 {offsets = [0, 384], sizes = [8, 128], strides = [1, 1]} : vector<8x512xf32> to vector<8x128xf32>
    %123 = arith.mulf %120, %97 : vector<8x128xf32>
    %124 = arith.mulf %119, %121 : vector<8x128xf32>
    %125 = arith.addf %123, %124 : vector<8x128xf32>
    %126 = math.tanh %125 : vector<8x128xf32>
    %127 = arith.mulf %122, %126 : vector<8x128xf32>
    %c0_45 = arith.constant 0 : index
    %128 = arith.index_cast %105 : i32 to index
    %c0_46 = arith.constant 0 : index
    %129 = vector.load %arg6[%c0_45, %128, %c0_46] : memref<1x64x128xf32, #tpu.memory_space<vmem>>, vector<1x8x128xf32>
    %130 = vector.shape_cast %129 : vector<1x8x128xf32> to vector<8x128xf32>
    %131 = vector.shape_cast %127 : vector<8x128xf32> to vector<1x8x128xf32>
    tpu.vector_store %arg6[%c0_45, %128, %c0_46], %131 {strides = array<i32>} : memref<1x64x128xf32, #tpu.memory_space<vmem>>, vector<1x8x128xf32>,
    %c4_i32 = arith.constant 4 : i32
    %c8_i32_47 = arith.constant 8 : i32
    %132 = arith.muli %c4_i32, %c8_i32_47 : i32
    %133 = tpu.assume_multiple %132, 8 : i32
    %134 = arith.index_cast %133 : i32 to index
    %c0_48 = arith.constant 0 : index
    %135 = vector.load %arg7[%134, %c0_48] : memref<64x512xf32, #tpu.memory_space<vmem>>, vector<8x512xf32>
    %cst_49 = arith.constant dense<0.000000e+00> : vector<8x512xf32>
    %136 = tpu.matmul %127, %11, %cst_49 {dimension_numbers = #tpu.dot_dimension_numbers<[1], [0], [0], [1], [0, 0, 1, 1], [], []>} : vector<8x128xf32>, vector<128x512xf32>, vector<8x512xf32> -> vector<8x512xf32>
    %137 = arith.addf %135, %136 : vector<8x512xf32>
    %cst_50 = arith.constant 5.000000e-01 : f32
    %138 = vector.broadcast %cst_50 : f32 to vector<8x512xf32>
    %139 = arith.mulf %138, %137 : vector<8x512xf32>
    %140 = arith.select %17, %137, %139 : vector<8x512xi1>, vector<8x512xf32>
    %141 = math.tanh %140 : vector<8x512xf32>
    %cst_51 = arith.constant 5.000000e-01 : f32
    %142 = vector.broadcast %cst_51 : f32 to vector<8x512xf32>
    %143 = arith.mulf %142, %141 : vector<8x512xf32>
    %cst_52 = arith.constant 5.000000e-01 : f32
    %144 = vector.broadcast %cst_52 : f32 to vector<8x512xf32>
    %145 = arith.addf %143, %144 : vector<8x512xf32>
    %146 = arith.select %17, %141, %145 : vector<8x512xi1>, vector<8x512xf32>
    %147 = vector.extract_strided_slice %146 {offsets = [0, 0], sizes = [8, 128], strides = [1, 1]} : vector<8x512xf32> to vector<8x128xf32>
    %148 = vector.extract_strided_slice %146 {offsets = [0, 128], sizes = [8, 128], strides = [1, 1]} : vector<8x512xf32> to vector<8x128xf32>
    %149 = vector.extract_strided_slice %146 {offsets = [0, 256], sizes = [8, 128], strides = [1, 1]} : vector<8x512xf32> to vector<8x128xf32>
    %150 = vector.extract_strided_slice %146 {offsets = [0, 384], sizes = [8, 128], strides = [1, 1]} : vector<8x512xf32> to vector<8x128xf32>
    %151 = arith.mulf %148, %125 : vector<8x128xf32>
    %152 = arith.mulf %147, %149 : vector<8x128xf32>
    %153 = arith.addf %151, %152 : vector<8x128xf32>
    %154 = math.tanh %153 : vector<8x128xf32>
    %155 = arith.mulf %150, %154 : vector<8x128xf32>
    %c0_53 = arith.constant 0 : index
    %156 = arith.index_cast %133 : i32 to index
    %c0_54 = arith.constant 0 : index
    %157 = vector.load %arg6[%c0_53, %156, %c0_54] : memref<1x64x128xf32, #tpu.memory_space<vmem>>, vector<1x8x128xf32>
    %158 = vector.shape_cast %157 : vector<1x8x128xf32> to vector<8x128xf32>
    %159 = vector.shape_cast %155 : vector<8x128xf32> to vector<1x8x128xf32>
    tpu.vector_store %arg6[%c0_53, %156, %c0_54], %159 {strides = array<i32>} : memref<1x64x128xf32, #tpu.memory_space<vmem>>, vector<1x8x128xf32>,
    %c5_i32 = arith.constant 5 : i32
    %c8_i32_55 = arith.constant 8 : i32
    %160 = arith.muli %c5_i32, %c8_i32_55 : i32
    %161 = tpu.assume_multiple %160, 8 : i32
    %162 = arith.index_cast %161 : i32 to index
    %c0_56 = arith.constant 0 : index
    %163 = vector.load %arg7[%162, %c0_56] : memref<64x512xf32, #tpu.memory_space<vmem>>, vector<8x512xf32>
    %cst_57 = arith.constant dense<0.000000e+00> : vector<8x512xf32>
    %164 = tpu.matmul %155, %11, %cst_57 {dimension_numbers = #tpu.dot_dimension_numbers<[1], [0], [0], [1], [0, 0, 1, 1], [], []>} : vector<8x128xf32>, vector<128x512xf32>, vector<8x512xf32> -> vector<8x512xf32>
    %165 = arith.addf %163, %164 : vector<8x512xf32>
    %cst_58 = arith.constant 5.000000e-01 : f32
    %166 = vector.broadcast %cst_58 : f32 to vector<8x512xf32>
    %167 = arith.mulf %166, %165 : vector<8x512xf32>
    %168 = arith.select %17, %165, %167 : vector<8x512xi1>, vector<8x512xf32>
    %169 = math.tanh %168 : vector<8x512xf32>
    %cst_59 = arith.constant 5.000000e-01 : f32
    %170 = vector.broadcast %cst_59 : f32 to vector<8x512xf32>
    %171 = arith.mulf %170, %169 : vector<8x512xf32>
    %cst_60 = arith.constant 5.000000e-01 : f32
    %172 = vector.broadcast %cst_60 : f32 to vector<8x512xf32>
    %173 = arith.addf %171, %172 : vector<8x512xf32>
    %174 = arith.select %17, %169, %173 : vector<8x512xi1>, vector<8x512xf32>
    %175 = vector.extract_strided_slice %174 {offsets = [0, 0], sizes = [8, 128], strides = [1, 1]} : vector<8x512xf32> to vector<8x128xf32>
    %176 = vector.extract_strided_slice %174 {offsets = [0, 128], sizes = [8, 128], strides = [1, 1]} : vector<8x512xf32> to vector<8x128xf32>
    %177 = vector.extract_strided_slice %174 {offsets = [0, 256], sizes = [8, 128], strides = [1, 1]} : vector<8x512xf32> to vector<8x128xf32>
    %178 = vector.extract_strided_slice %174 {offsets = [0, 384], sizes = [8, 128], strides = [1, 1]} : vector<8x512xf32> to vector<8x128xf32>
    %179 = arith.mulf %176, %153 : vector<8x128xf32>
    %180 = arith.mulf %175, %177 : vector<8x128xf32>
    %181 = arith.addf %179, %180 : vector<8x128xf32>
    %182 = math.tanh %181 : vector<8x128xf32>
    %183 = arith.mulf %178, %182 : vector<8x128xf32>
    %c0_61 = arith.constant 0 : index
    %184 = arith.index_cast %161 : i32 to index
    %c0_62 = arith.constant 0 : index
    %185 = vector.load %arg6[%c0_61, %184, %c0_62] : memref<1x64x128xf32, #tpu.memory_space<vmem>>, vector<1x8x128xf32>
    %186 = vector.shape_cast %185 : vector<1x8x128xf32> to vector<8x128xf32>
    %187 = vector.shape_cast %183 : vector<8x128xf32> to vector<1x8x128xf32>
    tpu.vector_store %arg6[%c0_61, %184, %c0_62], %187 {strides = array<i32>} : memref<1x64x128xf32, #tpu.memory_space<vmem>>, vector<1x8x128xf32>,
    %c6_i32 = arith.constant 6 : i32
    %c8_i32_63 = arith.constant 8 : i32
    %188 = arith.muli %c6_i32, %c8_i32_63 : i32
    %189 = tpu.assume_multiple %188, 8 : i32
    %190 = arith.index_cast %189 : i32 to index
    %c0_64 = arith.constant 0 : index
    %191 = vector.load %arg7[%190, %c0_64] : memref<64x512xf32, #tpu.memory_space<vmem>>, vector<8x512xf32>
    %cst_65 = arith.constant dense<0.000000e+00> : vector<8x512xf32>
    %192 = tpu.matmul %183, %11, %cst_65 {dimension_numbers = #tpu.dot_dimension_numbers<[1], [0], [0], [1], [0, 0, 1, 1], [], []>} : vector<8x128xf32>, vector<128x512xf32>, vector<8x512xf32> -> vector<8x512xf32>
    %193 = arith.addf %191, %192 : vector<8x512xf32>
    %cst_66 = arith.constant 5.000000e-01 : f32
    %194 = vector.broadcast %cst_66 : f32 to vector<8x512xf32>
    %195 = arith.mulf %194, %193 : vector<8x512xf32>
    %196 = arith.select %17, %193, %195 : vector<8x512xi1>, vector<8x512xf32>
    %197 = math.tanh %196 : vector<8x512xf32>
    %cst_67 = arith.constant 5.000000e-01 : f32
    %198 = vector.broadcast %cst_67 : f32 to vector<8x512xf32>
    %199 = arith.mulf %198, %197 : vector<8x512xf32>
    %cst_68 = arith.constant 5.000000e-01 : f32
    %200 = vector.broadcast %cst_68 : f32 to vector<8x512xf32>
    %201 = arith.addf %199, %200 : vector<8x512xf32>
    %202 = arith.select %17, %197, %201 : vector<8x512xi1>, vector<8x512xf32>
    %203 = vector.extract_strided_slice %202 {offsets = [0, 0], sizes = [8, 128], strides = [1, 1]} : vector<8x512xf32> to vector<8x128xf32>
    %204 = vector.extract_strided_slice %202 {offsets = [0, 128], sizes = [8, 128], strides = [1, 1]} : vector<8x512xf32> to vector<8x128xf32>
    %205 = vector.extract_strided_slice %202 {offsets = [0, 256], sizes = [8, 128], strides = [1, 1]} : vector<8x512xf32> to vector<8x128xf32>
    %206 = vector.extract_strided_slice %202 {offsets = [0, 384], sizes = [8, 128], strides = [1, 1]} : vector<8x512xf32> to vector<8x128xf32>
    %207 = arith.mulf %204, %181 : vector<8x128xf32>
    %208 = arith.mulf %203, %205 : vector<8x128xf32>
    %209 = arith.addf %207, %208 : vector<8x128xf32>
    %210 = math.tanh %209 : vector<8x128xf32>
    %211 = arith.mulf %206, %210 : vector<8x128xf32>
    %c0_69 = arith.constant 0 : index
    %212 = arith.index_cast %189 : i32 to index
    %c0_70 = arith.constant 0 : index
    %213 = vector.load %arg6[%c0_69, %212, %c0_70] : memref<1x64x128xf32, #tpu.memory_space<vmem>>, vector<1x8x128xf32>
    %214 = vector.shape_cast %213 : vector<1x8x128xf32> to vector<8x128xf32>
    %215 = vector.shape_cast %211 : vector<8x128xf32> to vector<1x8x128xf32>
    tpu.vector_store %arg6[%c0_69, %212, %c0_70], %215 {strides = array<i32>} : memref<1x64x128xf32, #tpu.memory_space<vmem>>, vector<1x8x128xf32>,
    %c7_i32 = arith.constant 7 : i32
    %c8_i32_71 = arith.constant 8 : i32
    %216 = arith.muli %c7_i32, %c8_i32_71 : i32
    %217 = tpu.assume_multiple %216, 8 : i32
    %218 = arith.index_cast %217 : i32 to index
    %c0_72 = arith.constant 0 : index
    %219 = vector.load %arg7[%218, %c0_72] : memref<64x512xf32, #tpu.memory_space<vmem>>, vector<8x512xf32>
    %cst_73 = arith.constant dense<0.000000e+00> : vector<8x512xf32>
    %220 = tpu.matmul %211, %11, %cst_73 {dimension_numbers = #tpu.dot_dimension_numbers<[1], [0], [0], [1], [0, 0, 1, 1], [], []>} : vector<8x128xf32>, vector<128x512xf32>, vector<8x512xf32> -> vector<8x512xf32>
    %221 = arith.addf %219, %220 : vector<8x512xf32>
    %cst_74 = arith.constant 5.000000e-01 : f32
    %222 = vector.broadcast %cst_74 : f32 to vector<8x512xf32>
    %223 = arith.mulf %222, %221 : vector<8x512xf32>
    %224 = arith.select %17, %221, %223 : vector<8x512xi1>, vector<8x512xf32>
    %225 = math.tanh %224 : vector<8x512xf32>
    %cst_75 = arith.constant 5.000000e-01 : f32
    %226 = vector.broadcast %cst_75 : f32 to vector<8x512xf32>
    %227 = arith.mulf %226, %225 : vector<8x512xf32>
    %cst_76 = arith.constant 5.000000e-01 : f32
    %228 = vector.broadcast %cst_76 : f32 to vector<8x512xf32>
    %229 = arith.addf %227, %228 : vector<8x512xf32>
    %230 = arith.select %17, %225, %229 : vector<8x512xi1>, vector<8x512xf32>
    %231 = vector.extract_strided_slice %230 {offsets = [0, 0], sizes = [8, 128], strides = [1, 1]} : vector<8x512xf32> to vector<8x128xf32>
    %232 = vector.extract_strided_slice %230 {offsets = [0, 128], sizes = [8, 128], strides = [1, 1]} : vector<8x512xf32> to vector<8x128xf32>
    %233 = vector.extract_strided_slice %230 {offsets = [0, 256], sizes = [8, 128], strides = [1, 1]} : vector<8x512xf32> to vector<8x128xf32>
    %234 = vector.extract_strided_slice %230 {offsets = [0, 384], sizes = [8, 128], strides = [1, 1]} : vector<8x512xf32> to vector<8x128xf32>
    %235 = arith.mulf %232, %209 : vector<8x128xf32>
    %236 = arith.mulf %231, %233 : vector<8x128xf32>
    %237 = arith.addf %235, %236 : vector<8x128xf32>
    %238 = math.tanh %237 : vector<8x128xf32>
    %239 = arith.mulf %234, %238 : vector<8x128xf32>
    %c0_77 = arith.constant 0 : index
    %240 = arith.index_cast %217 : i32 to index
    %c0_78 = arith.constant 0 : index
    %241 = vector.load %arg6[%c0_77, %240, %c0_78] : memref<1x64x128xf32, #tpu.memory_space<vmem>>, vector<1x8x128xf32>
    %242 = vector.shape_cast %241 : vector<1x8x128xf32> to vector<8x128xf32>
    %243 = vector.shape_cast %239 : vector<8x128xf32> to vector<1x8x128xf32>
    tpu.vector_store %arg6[%c0_77, %240, %c0_78], %243 {strides = array<i32>} : memref<1x64x128xf32, #tpu.memory_space<vmem>>, vector<1x8x128xf32>,
    %c8_i32_79 = arith.constant 8 : i32
    %c0_80 = arith.constant 0 : index
    %c0_81 = arith.constant 0 : index
    %244 = vector.load %arg8[%c0_80, %c0_81] : memref<8x128xf32, #tpu.memory_space<vmem>>, vector<8x128xf32>
    tpu.vector_store %arg8[%c0_80, %c0_81], %239 {strides = array<i32>} : memref<8x128xf32, #tpu.memory_space<vmem>>, vector<8x128xf32>,
    %c0_82 = arith.constant 0 : index
    %c0_83 = arith.constant 0 : index
    %245 = vector.load %arg9[%c0_82, %c0_83] : memref<8x128xf32, #tpu.memory_space<vmem>>, vector<8x128xf32>
    tpu.vector_store %arg9[%c0_82, %c0_83], %237 {strides = array<i32>} : memref<8x128xf32, #tpu.memory_space<vmem>>, vector<8x128xf32>,
    return
  }
  func.func @transform_0(%arg0: i32, %arg1: i32) -> (i32, i32, i32) {
    %c0_i32 = arith.constant 0 : i32
    %c0_i32_0 = arith.constant 0 : i32
    return %arg0, %arg1, %c0_i32 : i32, i32, i32
  }
  func.func @transform_1(%arg0: i32, %arg1: i32) -> (i32, i32) {
    %c0_i32 = arith.constant 0 : i32
    %c0_i32_0 = arith.constant 0 : i32
    %c0_i32_1 = arith.constant 0 : i32
    return %c0_i32, %c0_i32_0 : i32, i32
  }
  func.func @transform_2(%arg0: i32, %arg1: i32) -> (i32, i32) {
    %c0_i32 = arith.constant 0 : i32
    %c0_i32_0 = arith.constant 0 : i32
    %c0_i32_1 = arith.constant 0 : i32
    return %c0_i32, %c0_i32_0 : i32, i32
  }
  func.func @transform_3(%arg0: i32, %arg1: i32) -> (i32, i32) {
    %c0_i32 = arith.constant 0 : i32
    %c0_i32_0 = arith.constant 0 : i32
    %c0_i32_1 = arith.constant 0 : i32
    return %c0_i32, %c0_i32_0 : i32, i32
  }
  func.func @transform_4(%arg0: i32, %arg1: i32) -> (i32, i32, i32) {
    %c0_i32 = arith.constant 0 : i32
    %c0_i32_0 = arith.constant 0 : i32
    return %arg0, %arg1, %c0_i32 : i32, i32, i32
  }
}

module attributes {stable_mosaic.version = 11 : i64} {
  func.func @kernel(%arg0: i32, %arg1: i32, %arg2: memref<1x64x16xf32, #tpu.memory_space<vmem>>, %arg3: memref<16x512xf32, #tpu.memory_space<vmem>>, %arg4: memref<128x512xf32, #tpu.memory_space<vmem>>, %arg5: memref<1x512xf32, #tpu.memory_space<vmem>>, %arg6: memref<128x128xf32, #tpu.memory_space<vmem>>, %arg7: memref<1x128xf32, #tpu.memory_space<vmem>>, %arg8: memref<1x64x128xf32, #tpu.memory_space<vmem>>, %arg9: memref<64x512xf32, #tpu.memory_space<vmem>>, %arg10: memref<8x128xf32, #tpu.memory_space<vmem>>, %arg11: memref<8x128xf32, #tpu.memory_space<vmem>>, %arg12: memref<64x128xf32, #tpu.memory_space<vmem>>) attributes {dimension_semantics = [#tpu.dimension_semantics<parallel>, #tpu.dimension_semantics<arbitrary>], iteration_bounds = array<i64: 1, 1>, scalar_prefetch = 0 : i64, scratch_operands = 4 : i64, tpu.core_type = #tpu.core_type<tc>, window_params = [{transform_indices = @transform_0, window_bounds = array<i64: 1, 64, 16>}, {pipeline_mode = #tpu.pipeline_mode<synchronous>, transform_indices = @transform_1, window_bounds = array<i64: 16, 512>}, {pipeline_mode = #tpu.pipeline_mode<synchronous>, transform_indices = @transform_2, window_bounds = array<i64: 128, 512>}, {pipeline_mode = #tpu.pipeline_mode<synchronous>, transform_indices = @transform_3, window_bounds = array<i64: 1, 512>}, {pipeline_mode = #tpu.pipeline_mode<synchronous>, transform_indices = @transform_4, window_bounds = array<i64: 128, 128>}, {pipeline_mode = #tpu.pipeline_mode<synchronous>, transform_indices = @transform_5, window_bounds = array<i64: 1, 128>}, {transform_indices = @transform_6, window_bounds = array<i64: 1, 64, 128>}]} {
    %c0_i32 = arith.constant 0 : i32
    %0 = arith.cmpi eq, %arg1, %c0_i32 : i32
    %1 = arith.extui %0 : i1 to i32
    %c0_i32_0 = arith.constant 0 : i32
    %2 = arith.cmpi ne, %1, %c0_i32_0 : i32
    scf.if %2 {
      %cst_87 = arith.constant 0.000000e+00 : f32
      %241 = vector.broadcast %cst_87 : f32 to vector<8x128xf32>
      %c0_88 = arith.constant 0 : index
      %c0_89 = arith.constant 0 : index
      %242 = vector.load %arg10[%c0_88, %c0_89] : memref<8x128xf32, #tpu.memory_space<vmem>>, vector<8x128xf32>
      tpu.vector_store %arg10[%c0_88, %c0_89], %241 {strides = array<i32>} : memref<8x128xf32, #tpu.memory_space<vmem>>, vector<8x128xf32>,
      %cst_90 = arith.constant 0.000000e+00 : f32
      %243 = vector.broadcast %cst_90 : f32 to vector<8x128xf32>
      %c0_91 = arith.constant 0 : index
      %c0_92 = arith.constant 0 : index
      %244 = vector.load %arg11[%c0_91, %c0_92] : memref<8x128xf32, #tpu.memory_space<vmem>>, vector<8x128xf32>
      tpu.vector_store %arg11[%c0_91, %c0_92], %243 {strides = array<i32>} : memref<8x128xf32, #tpu.memory_space<vmem>>, vector<8x128xf32>,
    } else {
    }
    %c0 = arith.constant 0 : index
    %c0_1 = arith.constant 0 : index
    %c0_2 = arith.constant 0 : index
    %3 = vector.load %arg2[%c0, %c0_1, %c0_2] : memref<1x64x16xf32, #tpu.memory_space<vmem>>, vector<1x64x16xf32>
    %4 = vector.shape_cast %3 : vector<1x64x16xf32> to vector<64x16xf32>
    %c0_3 = arith.constant 0 : index
    %c0_4 = arith.constant 0 : index
    %5 = vector.load %arg3[%c0_3, %c0_4] : memref<16x512xf32, #tpu.memory_space<vmem>>, vector<16x512xf32>
    %cst = arith.constant dense<0.000000e+00> : vector<64x512xf32>
    %6 = tpu.matmul %4, %5, %cst {dimension_numbers = #tpu.dot_dimension_numbers<[1], [0], [0], [1], [0, 0, 1, 1], [], []>} : vector<64x16xf32>, vector<16x512xf32>, vector<64x512xf32> -> vector<64x512xf32>
    %c0_5 = arith.constant 0 : index
    %c0_6 = arith.constant 0 : index
    %7 = vector.load %arg5[%c0_5, %c0_6] : memref<1x512xf32, #tpu.memory_space<vmem>>, vector<1x512xf32>
    %8 = vector.broadcast %7 : vector<1x512xf32> to vector<64x512xf32>
    %9 = arith.addf %6, %8 : vector<64x512xf32>
    %c0_7 = arith.constant 0 : index
    %c0_8 = arith.constant 0 : index
    %10 = vector.load %arg9[%c0_7, %c0_8] : memref<64x512xf32, #tpu.memory_space<vmem>>, vector<64x512xf32>
    tpu.vector_store %arg9[%c0_7, %c0_8], %9 {strides = array<i32>} : memref<64x512xf32, #tpu.memory_space<vmem>>, vector<64x512xf32>,
    %c0_9 = arith.constant 0 : index
    %c0_10 = arith.constant 0 : index
    %11 = vector.load %arg4[%c0_9, %c0_10] : memref<128x512xf32, #tpu.memory_space<vmem>>, vector<128x512xf32>
    %12 = tpu.iota {dimensions = array<i32: 1>} : vector<8x512xi32>
    %c256_i32 = arith.constant 256 : i32
    %13 = vector.broadcast %c256_i32 : i32 to vector<8x512xi32>
    %14 = arith.cmpi sge, %12, %13 : vector<8x512xi32>
    %c384_i32 = arith.constant 384 : i32
    %15 = vector.broadcast %c384_i32 : i32 to vector<8x512xi32>
    %16 = arith.cmpi slt, %12, %15 : vector<8x512xi32>
    %17 = arith.andi %14, %16 : vector<8x512xi1>
    %c0_11 = arith.constant 0 : index
    %c0_12 = arith.constant 0 : index
    %18 = vector.load %arg10[%c0_11, %c0_12] : memref<8x128xf32, #tpu.memory_space<vmem>>, vector<8x128xf32>
    %c0_13 = arith.constant 0 : index
    %c0_14 = arith.constant 0 : index
    %19 = vector.load %arg11[%c0_13, %c0_14] : memref<8x128xf32, #tpu.memory_space<vmem>>, vector<8x128xf32>
    %c0_i32_15 = arith.constant 0 : i32
    %c8_i32 = arith.constant 8 : i32
    %20 = arith.muli %c0_i32_15, %c8_i32 : i32
    %21 = tpu.assume_multiple %20, 8 : i32
    %22 = arith.index_cast %21 : i32 to index
    %c0_16 = arith.constant 0 : index
    %23 = vector.load %arg9[%22, %c0_16] : memref<64x512xf32, #tpu.memory_space<vmem>>, vector<8x512xf32>
    %cst_17 = arith.constant dense<0.000000e+00> : vector<8x512xf32>
    %24 = tpu.matmul %18, %11, %cst_17 {dimension_numbers = #tpu.dot_dimension_numbers<[1], [0], [0], [1], [0, 0, 1, 1], [], []>} : vector<8x128xf32>, vector<128x512xf32>, vector<8x512xf32> -> vector<8x512xf32>
    %25 = arith.addf %23, %24 : vector<8x512xf32>
    %cst_18 = arith.constant 5.000000e-01 : f32
    %26 = vector.broadcast %cst_18 : f32 to vector<8x512xf32>
    %27 = arith.mulf %26, %25 : vector<8x512xf32>
    %28 = arith.select %17, %25, %27 : vector<8x512xi1>, vector<8x512xf32>
    %29 = math.tanh %28 : vector<8x512xf32>
    %cst_19 = arith.constant 5.000000e-01 : f32
    %30 = vector.broadcast %cst_19 : f32 to vector<8x512xf32>
    %31 = arith.mulf %30, %29 : vector<8x512xf32>
    %cst_20 = arith.constant 5.000000e-01 : f32
    %32 = vector.broadcast %cst_20 : f32 to vector<8x512xf32>
    %33 = arith.addf %31, %32 : vector<8x512xf32>
    %34 = arith.select %17, %29, %33 : vector<8x512xi1>, vector<8x512xf32>
    %35 = vector.extract_strided_slice %34 {offsets = [0, 0], sizes = [8, 128], strides = [1, 1]} : vector<8x512xf32> to vector<8x128xf32>
    %36 = vector.extract_strided_slice %34 {offsets = [0, 128], sizes = [8, 128], strides = [1, 1]} : vector<8x512xf32> to vector<8x128xf32>
    %37 = vector.extract_strided_slice %34 {offsets = [0, 256], sizes = [8, 128], strides = [1, 1]} : vector<8x512xf32> to vector<8x128xf32>
    %38 = vector.extract_strided_slice %34 {offsets = [0, 384], sizes = [8, 128], strides = [1, 1]} : vector<8x512xf32> to vector<8x128xf32>
    %39 = arith.mulf %36, %19 : vector<8x128xf32>
    %40 = arith.mulf %35, %37 : vector<8x128xf32>
    %41 = arith.addf %39, %40 : vector<8x128xf32>
    %42 = math.tanh %41 : vector<8x128xf32>
    %43 = arith.mulf %38, %42 : vector<8x128xf32>
    %44 = arith.index_cast %21 : i32 to index
    %c0_21 = arith.constant 0 : index
    %45 = vector.load %arg12[%44, %c0_21] : memref<64x128xf32, #tpu.memory_space<vmem>>, vector<8x128xf32>
    tpu.vector_store %arg12[%44, %c0_21], %43 {strides = array<i32>} : memref<64x128xf32, #tpu.memory_space<vmem>>, vector<8x128xf32>,
    %c1_i32 = arith.constant 1 : i32
    %c8_i32_22 = arith.constant 8 : i32
    %46 = arith.muli %c1_i32, %c8_i32_22 : i32
    %47 = tpu.assume_multiple %46, 8 : i32
    %48 = arith.index_cast %47 : i32 to index
    %c0_23 = arith.constant 0 : index
    %49 = vector.load %arg9[%48, %c0_23] : memref<64x512xf32, #tpu.memory_space<vmem>>, vector<8x512xf32>
    %cst_24 = arith.constant dense<0.000000e+00> : vector<8x512xf32>
    %50 = tpu.matmul %43, %11, %cst_24 {dimension_numbers = #tpu.dot_dimension_numbers<[1], [0], [0], [1], [0, 0, 1, 1], [], []>} : vector<8x128xf32>, vector<128x512xf32>, vector<8x512xf32> -> vector<8x512xf32>
    %51 = arith.addf %49, %50 : vector<8x512xf32>
    %cst_25 = arith.constant 5.000000e-01 : f32
    %52 = vector.broadcast %cst_25 : f32 to vector<8x512xf32>
    %53 = arith.mulf %52, %51 : vector<8x512xf32>
    %54 = arith.select %17, %51, %53 : vector<8x512xi1>, vector<8x512xf32>
    %55 = math.tanh %54 : vector<8x512xf32>
    %cst_26 = arith.constant 5.000000e-01 : f32
    %56 = vector.broadcast %cst_26 : f32 to vector<8x512xf32>
    %57 = arith.mulf %56, %55 : vector<8x512xf32>
    %cst_27 = arith.constant 5.000000e-01 : f32
    %58 = vector.broadcast %cst_27 : f32 to vector<8x512xf32>
    %59 = arith.addf %57, %58 : vector<8x512xf32>
    %60 = arith.select %17, %55, %59 : vector<8x512xi1>, vector<8x512xf32>
    %61 = vector.extract_strided_slice %60 {offsets = [0, 0], sizes = [8, 128], strides = [1, 1]} : vector<8x512xf32> to vector<8x128xf32>
    %62 = vector.extract_strided_slice %60 {offsets = [0, 128], sizes = [8, 128], strides = [1, 1]} : vector<8x512xf32> to vector<8x128xf32>
    %63 = vector.extract_strided_slice %60 {offsets = [0, 256], sizes = [8, 128], strides = [1, 1]} : vector<8x512xf32> to vector<8x128xf32>
    %64 = vector.extract_strided_slice %60 {offsets = [0, 384], sizes = [8, 128], strides = [1, 1]} : vector<8x512xf32> to vector<8x128xf32>
    %65 = arith.mulf %62, %41 : vector<8x128xf32>
    %66 = arith.mulf %61, %63 : vector<8x128xf32>
    %67 = arith.addf %65, %66 : vector<8x128xf32>
    %68 = math.tanh %67 : vector<8x128xf32>
    %69 = arith.mulf %64, %68 : vector<8x128xf32>
    %70 = arith.index_cast %47 : i32 to index
    %c0_28 = arith.constant 0 : index
    %71 = vector.load %arg12[%70, %c0_28] : memref<64x128xf32, #tpu.memory_space<vmem>>, vector<8x128xf32>
    tpu.vector_store %arg12[%70, %c0_28], %69 {strides = array<i32>} : memref<64x128xf32, #tpu.memory_space<vmem>>, vector<8x128xf32>,
    %c2_i32 = arith.constant 2 : i32
    %c8_i32_29 = arith.constant 8 : i32
    %72 = arith.muli %c2_i32, %c8_i32_29 : i32
    %73 = tpu.assume_multiple %72, 8 : i32
    %74 = arith.index_cast %73 : i32 to index
    %c0_30 = arith.constant 0 : index
    %75 = vector.load %arg9[%74, %c0_30] : memref<64x512xf32, #tpu.memory_space<vmem>>, vector<8x512xf32>
    %cst_31 = arith.constant dense<0.000000e+00> : vector<8x512xf32>
    %76 = tpu.matmul %69, %11, %cst_31 {dimension_numbers = #tpu.dot_dimension_numbers<[1], [0], [0], [1], [0, 0, 1, 1], [], []>} : vector<8x128xf32>, vector<128x512xf32>, vector<8x512xf32> -> vector<8x512xf32>
    %77 = arith.addf %75, %76 : vector<8x512xf32>
    %cst_32 = arith.constant 5.000000e-01 : f32
    %78 = vector.broadcast %cst_32 : f32 to vector<8x512xf32>
    %79 = arith.mulf %78, %77 : vector<8x512xf32>
    %80 = arith.select %17, %77, %79 : vector<8x512xi1>, vector<8x512xf32>
    %81 = math.tanh %80 : vector<8x512xf32>
    %cst_33 = arith.constant 5.000000e-01 : f32
    %82 = vector.broadcast %cst_33 : f32 to vector<8x512xf32>
    %83 = arith.mulf %82, %81 : vector<8x512xf32>
    %cst_34 = arith.constant 5.000000e-01 : f32
    %84 = vector.broadcast %cst_34 : f32 to vector<8x512xf32>
    %85 = arith.addf %83, %84 : vector<8x512xf32>
    %86 = arith.select %17, %81, %85 : vector<8x512xi1>, vector<8x512xf32>
    %87 = vector.extract_strided_slice %86 {offsets = [0, 0], sizes = [8, 128], strides = [1, 1]} : vector<8x512xf32> to vector<8x128xf32>
    %88 = vector.extract_strided_slice %86 {offsets = [0, 128], sizes = [8, 128], strides = [1, 1]} : vector<8x512xf32> to vector<8x128xf32>
    %89 = vector.extract_strided_slice %86 {offsets = [0, 256], sizes = [8, 128], strides = [1, 1]} : vector<8x512xf32> to vector<8x128xf32>
    %90 = vector.extract_strided_slice %86 {offsets = [0, 384], sizes = [8, 128], strides = [1, 1]} : vector<8x512xf32> to vector<8x128xf32>
    %91 = arith.mulf %88, %67 : vector<8x128xf32>
    %92 = arith.mulf %87, %89 : vector<8x128xf32>
    %93 = arith.addf %91, %92 : vector<8x128xf32>
    %94 = math.tanh %93 : vector<8x128xf32>
    %95 = arith.mulf %90, %94 : vector<8x128xf32>
    %96 = arith.index_cast %73 : i32 to index
    %c0_35 = arith.constant 0 : index
    %97 = vector.load %arg12[%96, %c0_35] : memref<64x128xf32, #tpu.memory_space<vmem>>, vector<8x128xf32>
    tpu.vector_store %arg12[%96, %c0_35], %95 {strides = array<i32>} : memref<64x128xf32, #tpu.memory_space<vmem>>, vector<8x128xf32>,
    %c3_i32 = arith.constant 3 : i32
    %c8_i32_36 = arith.constant 8 : i32
    %98 = arith.muli %c3_i32, %c8_i32_36 : i32
    %99 = tpu.assume_multiple %98, 8 : i32
    %100 = arith.index_cast %99 : i32 to index
    %c0_37 = arith.constant 0 : index
    %101 = vector.load %arg9[%100, %c0_37] : memref<64x512xf32, #tpu.memory_space<vmem>>, vector<8x512xf32>
    %cst_38 = arith.constant dense<0.000000e+00> : vector<8x512xf32>
    %102 = tpu.matmul %95, %11, %cst_38 {dimension_numbers = #tpu.dot_dimension_numbers<[1], [0], [0], [1], [0, 0, 1, 1], [], []>} : vector<8x128xf32>, vector<128x512xf32>, vector<8x512xf32> -> vector<8x512xf32>
    %103 = arith.addf %101, %102 : vector<8x512xf32>
    %cst_39 = arith.constant 5.000000e-01 : f32
    %104 = vector.broadcast %cst_39 : f32 to vector<8x512xf32>
    %105 = arith.mulf %104, %103 : vector<8x512xf32>
    %106 = arith.select %17, %103, %105 : vector<8x512xi1>, vector<8x512xf32>
    %107 = math.tanh %106 : vector<8x512xf32>
    %cst_40 = arith.constant 5.000000e-01 : f32
    %108 = vector.broadcast %cst_40 : f32 to vector<8x512xf32>
    %109 = arith.mulf %108, %107 : vector<8x512xf32>
    %cst_41 = arith.constant 5.000000e-01 : f32
    %110 = vector.broadcast %cst_41 : f32 to vector<8x512xf32>
    %111 = arith.addf %109, %110 : vector<8x512xf32>
    %112 = arith.select %17, %107, %111 : vector<8x512xi1>, vector<8x512xf32>
    %113 = vector.extract_strided_slice %112 {offsets = [0, 0], sizes = [8, 128], strides = [1, 1]} : vector<8x512xf32> to vector<8x128xf32>
    %114 = vector.extract_strided_slice %112 {offsets = [0, 128], sizes = [8, 128], strides = [1, 1]} : vector<8x512xf32> to vector<8x128xf32>
    %115 = vector.extract_strided_slice %112 {offsets = [0, 256], sizes = [8, 128], strides = [1, 1]} : vector<8x512xf32> to vector<8x128xf32>
    %116 = vector.extract_strided_slice %112 {offsets = [0, 384], sizes = [8, 128], strides = [1, 1]} : vector<8x512xf32> to vector<8x128xf32>
    %117 = arith.mulf %114, %93 : vector<8x128xf32>
    %118 = arith.mulf %113, %115 : vector<8x128xf32>
    %119 = arith.addf %117, %118 : vector<8x128xf32>
    %120 = math.tanh %119 : vector<8x128xf32>
    %121 = arith.mulf %116, %120 : vector<8x128xf32>
    %122 = arith.index_cast %99 : i32 to index
    %c0_42 = arith.constant 0 : index
    %123 = vector.load %arg12[%122, %c0_42] : memref<64x128xf32, #tpu.memory_space<vmem>>, vector<8x128xf32>
    tpu.vector_store %arg12[%122, %c0_42], %121 {strides = array<i32>} : memref<64x128xf32, #tpu.memory_space<vmem>>, vector<8x128xf32>,
    %c4_i32 = arith.constant 4 : i32
    %c8_i32_43 = arith.constant 8 : i32
    %124 = arith.muli %c4_i32, %c8_i32_43 : i32
    %125 = tpu.assume_multiple %124, 8 : i32
    %126 = arith.index_cast %125 : i32 to index
    %c0_44 = arith.constant 0 : index
    %127 = vector.load %arg9[%126, %c0_44] : memref<64x512xf32, #tpu.memory_space<vmem>>, vector<8x512xf32>
    %cst_45 = arith.constant dense<0.000000e+00> : vector<8x512xf32>
    %128 = tpu.matmul %121, %11, %cst_45 {dimension_numbers = #tpu.dot_dimension_numbers<[1], [0], [0], [1], [0, 0, 1, 1], [], []>} : vector<8x128xf32>, vector<128x512xf32>, vector<8x512xf32> -> vector<8x512xf32>
    %129 = arith.addf %127, %128 : vector<8x512xf32>
    %cst_46 = arith.constant 5.000000e-01 : f32
    %130 = vector.broadcast %cst_46 : f32 to vector<8x512xf32>
    %131 = arith.mulf %130, %129 : vector<8x512xf32>
    %132 = arith.select %17, %129, %131 : vector<8x512xi1>, vector<8x512xf32>
    %133 = math.tanh %132 : vector<8x512xf32>
    %cst_47 = arith.constant 5.000000e-01 : f32
    %134 = vector.broadcast %cst_47 : f32 to vector<8x512xf32>
    %135 = arith.mulf %134, %133 : vector<8x512xf32>
    %cst_48 = arith.constant 5.000000e-01 : f32
    %136 = vector.broadcast %cst_48 : f32 to vector<8x512xf32>
    %137 = arith.addf %135, %136 : vector<8x512xf32>
    %138 = arith.select %17, %133, %137 : vector<8x512xi1>, vector<8x512xf32>
    %139 = vector.extract_strided_slice %138 {offsets = [0, 0], sizes = [8, 128], strides = [1, 1]} : vector<8x512xf32> to vector<8x128xf32>
    %140 = vector.extract_strided_slice %138 {offsets = [0, 128], sizes = [8, 128], strides = [1, 1]} : vector<8x512xf32> to vector<8x128xf32>
    %141 = vector.extract_strided_slice %138 {offsets = [0, 256], sizes = [8, 128], strides = [1, 1]} : vector<8x512xf32> to vector<8x128xf32>
    %142 = vector.extract_strided_slice %138 {offsets = [0, 384], sizes = [8, 128], strides = [1, 1]} : vector<8x512xf32> to vector<8x128xf32>
    %143 = arith.mulf %140, %119 : vector<8x128xf32>
    %144 = arith.mulf %139, %141 : vector<8x128xf32>
    %145 = arith.addf %143, %144 : vector<8x128xf32>
    %146 = math.tanh %145 : vector<8x128xf32>
    %147 = arith.mulf %142, %146 : vector<8x128xf32>
    %148 = arith.index_cast %125 : i32 to index
    %c0_49 = arith.constant 0 : index
    %149 = vector.load %arg12[%148, %c0_49] : memref<64x128xf32, #tpu.memory_space<vmem>>, vector<8x128xf32>
    tpu.vector_store %arg12[%148, %c0_49], %147 {strides = array<i32>} : memref<64x128xf32, #tpu.memory_space<vmem>>, vector<8x128xf32>,
    %c5_i32 = arith.constant 5 : i32
    %c8_i32_50 = arith.constant 8 : i32
    %150 = arith.muli %c5_i32, %c8_i32_50 : i32
    %151 = tpu.assume_multiple %150, 8 : i32
    %152 = arith.index_cast %151 : i32 to index
    %c0_51 = arith.constant 0 : index
    %153 = vector.load %arg9[%152, %c0_51] : memref<64x512xf32, #tpu.memory_space<vmem>>, vector<8x512xf32>
    %cst_52 = arith.constant dense<0.000000e+00> : vector<8x512xf32>
    %154 = tpu.matmul %147, %11, %cst_52 {dimension_numbers = #tpu.dot_dimension_numbers<[1], [0], [0], [1], [0, 0, 1, 1], [], []>} : vector<8x128xf32>, vector<128x512xf32>, vector<8x512xf32> -> vector<8x512xf32>
    %155 = arith.addf %153, %154 : vector<8x512xf32>
    %cst_53 = arith.constant 5.000000e-01 : f32
    %156 = vector.broadcast %cst_53 : f32 to vector<8x512xf32>
    %157 = arith.mulf %156, %155 : vector<8x512xf32>
    %158 = arith.select %17, %155, %157 : vector<8x512xi1>, vector<8x512xf32>
    %159 = math.tanh %158 : vector<8x512xf32>
    %cst_54 = arith.constant 5.000000e-01 : f32
    %160 = vector.broadcast %cst_54 : f32 to vector<8x512xf32>
    %161 = arith.mulf %160, %159 : vector<8x512xf32>
    %cst_55 = arith.constant 5.000000e-01 : f32
    %162 = vector.broadcast %cst_55 : f32 to vector<8x512xf32>
    %163 = arith.addf %161, %162 : vector<8x512xf32>
    %164 = arith.select %17, %159, %163 : vector<8x512xi1>, vector<8x512xf32>
    %165 = vector.extract_strided_slice %164 {offsets = [0, 0], sizes = [8, 128], strides = [1, 1]} : vector<8x512xf32> to vector<8x128xf32>
    %166 = vector.extract_strided_slice %164 {offsets = [0, 128], sizes = [8, 128], strides = [1, 1]} : vector<8x512xf32> to vector<8x128xf32>
    %167 = vector.extract_strided_slice %164 {offsets = [0, 256], sizes = [8, 128], strides = [1, 1]} : vector<8x512xf32> to vector<8x128xf32>
    %168 = vector.extract_strided_slice %164 {offsets = [0, 384], sizes = [8, 128], strides = [1, 1]} : vector<8x512xf32> to vector<8x128xf32>
    %169 = arith.mulf %166, %145 : vector<8x128xf32>
    %170 = arith.mulf %165, %167 : vector<8x128xf32>
    %171 = arith.addf %169, %170 : vector<8x128xf32>
    %172 = math.tanh %171 : vector<8x128xf32>
    %173 = arith.mulf %168, %172 : vector<8x128xf32>
    %174 = arith.index_cast %151 : i32 to index
    %c0_56 = arith.constant 0 : index
    %175 = vector.load %arg12[%174, %c0_56] : memref<64x128xf32, #tpu.memory_space<vmem>>, vector<8x128xf32>
    tpu.vector_store %arg12[%174, %c0_56], %173 {strides = array<i32>} : memref<64x128xf32, #tpu.memory_space<vmem>>, vector<8x128xf32>,
    %c6_i32 = arith.constant 6 : i32
    %c8_i32_57 = arith.constant 8 : i32
    %176 = arith.muli %c6_i32, %c8_i32_57 : i32
    %177 = tpu.assume_multiple %176, 8 : i32
    %178 = arith.index_cast %177 : i32 to index
    %c0_58 = arith.constant 0 : index
    %179 = vector.load %arg9[%178, %c0_58] : memref<64x512xf32, #tpu.memory_space<vmem>>, vector<8x512xf32>
    %cst_59 = arith.constant dense<0.000000e+00> : vector<8x512xf32>
    %180 = tpu.matmul %173, %11, %cst_59 {dimension_numbers = #tpu.dot_dimension_numbers<[1], [0], [0], [1], [0, 0, 1, 1], [], []>} : vector<8x128xf32>, vector<128x512xf32>, vector<8x512xf32> -> vector<8x512xf32>
    %181 = arith.addf %179, %180 : vector<8x512xf32>
    %cst_60 = arith.constant 5.000000e-01 : f32
    %182 = vector.broadcast %cst_60 : f32 to vector<8x512xf32>
    %183 = arith.mulf %182, %181 : vector<8x512xf32>
    %184 = arith.select %17, %181, %183 : vector<8x512xi1>, vector<8x512xf32>
    %185 = math.tanh %184 : vector<8x512xf32>
    %cst_61 = arith.constant 5.000000e-01 : f32
    %186 = vector.broadcast %cst_61 : f32 to vector<8x512xf32>
    %187 = arith.mulf %186, %185 : vector<8x512xf32>
    %cst_62 = arith.constant 5.000000e-01 : f32
    %188 = vector.broadcast %cst_62 : f32 to vector<8x512xf32>
    %189 = arith.addf %187, %188 : vector<8x512xf32>
    %190 = arith.select %17, %185, %189 : vector<8x512xi1>, vector<8x512xf32>
    %191 = vector.extract_strided_slice %190 {offsets = [0, 0], sizes = [8, 128], strides = [1, 1]} : vector<8x512xf32> to vector<8x128xf32>
    %192 = vector.extract_strided_slice %190 {offsets = [0, 128], sizes = [8, 128], strides = [1, 1]} : vector<8x512xf32> to vector<8x128xf32>
    %193 = vector.extract_strided_slice %190 {offsets = [0, 256], sizes = [8, 128], strides = [1, 1]} : vector<8x512xf32> to vector<8x128xf32>
    %194 = vector.extract_strided_slice %190 {offsets = [0, 384], sizes = [8, 128], strides = [1, 1]} : vector<8x512xf32> to vector<8x128xf32>
    %195 = arith.mulf %192, %171 : vector<8x128xf32>
    %196 = arith.mulf %191, %193 : vector<8x128xf32>
    %197 = arith.addf %195, %196 : vector<8x128xf32>
    %198 = math.tanh %197 : vector<8x128xf32>
    %199 = arith.mulf %194, %198 : vector<8x128xf32>
    %200 = arith.index_cast %177 : i32 to index
    %c0_63 = arith.constant 0 : index
    %201 = vector.load %arg12[%200, %c0_63] : memref<64x128xf32, #tpu.memory_space<vmem>>, vector<8x128xf32>
    tpu.vector_store %arg12[%200, %c0_63], %199 {strides = array<i32>} : memref<64x128xf32, #tpu.memory_space<vmem>>, vector<8x128xf32>,
    %c7_i32 = arith.constant 7 : i32
    %c8_i32_64 = arith.constant 8 : i32
    %202 = arith.muli %c7_i32, %c8_i32_64 : i32
    %203 = tpu.assume_multiple %202, 8 : i32
    %204 = arith.index_cast %203 : i32 to index
    %c0_65 = arith.constant 0 : index
    %205 = vector.load %arg9[%204, %c0_65] : memref<64x512xf32, #tpu.memory_space<vmem>>, vector<8x512xf32>
    %cst_66 = arith.constant dense<0.000000e+00> : vector<8x512xf32>
    %206 = tpu.matmul %199, %11, %cst_66 {dimension_numbers = #tpu.dot_dimension_numbers<[1], [0], [0], [1], [0, 0, 1, 1], [], []>} : vector<8x128xf32>, vector<128x512xf32>, vector<8x512xf32> -> vector<8x512xf32>
    %207 = arith.addf %205, %206 : vector<8x512xf32>
    %cst_67 = arith.constant 5.000000e-01 : f32
    %208 = vector.broadcast %cst_67 : f32 to vector<8x512xf32>
    %209 = arith.mulf %208, %207 : vector<8x512xf32>
    %210 = arith.select %17, %207, %209 : vector<8x512xi1>, vector<8x512xf32>
    %211 = math.tanh %210 : vector<8x512xf32>
    %cst_68 = arith.constant 5.000000e-01 : f32
    %212 = vector.broadcast %cst_68 : f32 to vector<8x512xf32>
    %213 = arith.mulf %212, %211 : vector<8x512xf32>
    %cst_69 = arith.constant 5.000000e-01 : f32
    %214 = vector.broadcast %cst_69 : f32 to vector<8x512xf32>
    %215 = arith.addf %213, %214 : vector<8x512xf32>
    %216 = arith.select %17, %211, %215 : vector<8x512xi1>, vector<8x512xf32>
    %217 = vector.extract_strided_slice %216 {offsets = [0, 0], sizes = [8, 128], strides = [1, 1]} : vector<8x512xf32> to vector<8x128xf32>
    %218 = vector.extract_strided_slice %216 {offsets = [0, 128], sizes = [8, 128], strides = [1, 1]} : vector<8x512xf32> to vector<8x128xf32>
    %219 = vector.extract_strided_slice %216 {offsets = [0, 256], sizes = [8, 128], strides = [1, 1]} : vector<8x512xf32> to vector<8x128xf32>
    %220 = vector.extract_strided_slice %216 {offsets = [0, 384], sizes = [8, 128], strides = [1, 1]} : vector<8x512xf32> to vector<8x128xf32>
    %221 = arith.mulf %218, %197 : vector<8x128xf32>
    %222 = arith.mulf %217, %219 : vector<8x128xf32>
    %223 = arith.addf %221, %222 : vector<8x128xf32>
    %224 = math.tanh %223 : vector<8x128xf32>
    %225 = arith.mulf %220, %224 : vector<8x128xf32>
    %226 = arith.index_cast %203 : i32 to index
    %c0_70 = arith.constant 0 : index
    %227 = vector.load %arg12[%226, %c0_70] : memref<64x128xf32, #tpu.memory_space<vmem>>, vector<8x128xf32>
    tpu.vector_store %arg12[%226, %c0_70], %225 {strides = array<i32>} : memref<64x128xf32, #tpu.memory_space<vmem>>, vector<8x128xf32>,
    %c8_i32_71 = arith.constant 8 : i32
    %c0_72 = arith.constant 0 : index
    %c0_73 = arith.constant 0 : index
    %228 = vector.load %arg10[%c0_72, %c0_73] : memref<8x128xf32, #tpu.memory_space<vmem>>, vector<8x128xf32>
    tpu.vector_store %arg10[%c0_72, %c0_73], %225 {strides = array<i32>} : memref<8x128xf32, #tpu.memory_space<vmem>>, vector<8x128xf32>,
    %c0_74 = arith.constant 0 : index
    %c0_75 = arith.constant 0 : index
    %229 = vector.load %arg11[%c0_74, %c0_75] : memref<8x128xf32, #tpu.memory_space<vmem>>, vector<8x128xf32>
    tpu.vector_store %arg11[%c0_74, %c0_75], %223 {strides = array<i32>} : memref<8x128xf32, #tpu.memory_space<vmem>>, vector<8x128xf32>,
    %c0_76 = arith.constant 0 : index
    %c0_77 = arith.constant 0 : index
    %230 = vector.load %arg12[%c0_76, %c0_77] : memref<64x128xf32, #tpu.memory_space<vmem>>, vector<64x128xf32>
    %c0_78 = arith.constant 0 : index
    %c0_79 = arith.constant 0 : index
    %231 = vector.load %arg6[%c0_78, %c0_79] : memref<128x128xf32, #tpu.memory_space<vmem>>, vector<128x128xf32>
    %cst_80 = arith.constant dense<0.000000e+00> : vector<64x128xf32>
    %232 = tpu.matmul %230, %231, %cst_80 {dimension_numbers = #tpu.dot_dimension_numbers<[1], [0], [0], [1], [0, 0, 1, 1], [], []>} : vector<64x128xf32>, vector<128x128xf32>, vector<64x128xf32> -> vector<64x128xf32>
    %c0_81 = arith.constant 0 : index
    %c0_82 = arith.constant 0 : index
    %233 = vector.load %arg7[%c0_81, %c0_82] : memref<1x128xf32, #tpu.memory_space<vmem>>, vector<1x128xf32>
    %234 = vector.broadcast %233 : vector<1x128xf32> to vector<64x128xf32>
    %235 = arith.addf %232, %234 : vector<64x128xf32>
    %cst_83 = arith.constant 0.000000e+00 : f32
    %236 = vector.broadcast %cst_83 : f32 to vector<64x128xf32>
    %237 = arith.maximumf %235, %236 : vector<64x128xf32>
    %c0_84 = arith.constant 0 : index
    %c0_85 = arith.constant 0 : index
    %c0_86 = arith.constant 0 : index
    %238 = vector.load %arg8[%c0_84, %c0_85, %c0_86] : memref<1x64x128xf32, #tpu.memory_space<vmem>>, vector<1x64x128xf32>
    %239 = vector.shape_cast %238 : vector<1x64x128xf32> to vector<64x128xf32>
    %240 = vector.shape_cast %237 : vector<64x128xf32> to vector<1x64x128xf32>
    tpu.vector_store %arg8[%c0_84, %c0_85, %c0_86], %240 {strides = array<i32>} : memref<1x64x128xf32, #tpu.memory_space<vmem>>, vector<1x64x128xf32>,
    return
  }
  func.func @transform_0(%arg0: i32, %arg1: i32) -> (i32, i32, i32) {
    %c0_i32 = arith.constant 0 : i32
    %c0_i32_0 = arith.constant 0 : i32
    return %arg0, %arg1, %c0_i32 : i32, i32, i32
  }
  func.func @transform_1(%arg0: i32, %arg1: i32) -> (i32, i32) {
    %c0_i32 = arith.constant 0 : i32
    %c0_i32_0 = arith.constant 0 : i32
    %c0_i32_1 = arith.constant 0 : i32
    return %c0_i32, %c0_i32_0 : i32, i32
  }
  func.func @transform_2(%arg0: i32, %arg1: i32) -> (i32, i32) {
    %c0_i32 = arith.constant 0 : i32
    %c0_i32_0 = arith.constant 0 : i32
    %c0_i32_1 = arith.constant 0 : i32
    return %c0_i32, %c0_i32_0 : i32, i32
  }
  func.func @transform_3(%arg0: i32, %arg1: i32) -> (i32, i32) {
    %c0_i32 = arith.constant 0 : i32
    %c0_i32_0 = arith.constant 0 : i32
    %c0_i32_1 = arith.constant 0 : i32
    return %c0_i32, %c0_i32_0 : i32, i32
  }
  func.func @transform_4(%arg0: i32, %arg1: i32) -> (i32, i32) {
    %c0_i32 = arith.constant 0 : i32
    %c0_i32_0 = arith.constant 0 : i32
    %c0_i32_1 = arith.constant 0 : i32
    return %c0_i32, %c0_i32_0 : i32, i32
  }
  func.func @transform_5(%arg0: i32, %arg1: i32) -> (i32, i32) {
    %c0_i32 = arith.constant 0 : i32
    %c0_i32_0 = arith.constant 0 : i32
    %c0_i32_1 = arith.constant 0 : i32
    return %c0_i32, %c0_i32_0 : i32, i32
  }
  func.func @transform_6(%arg0: i32, %arg1: i32) -> (i32, i32, i32) {
    %c0_i32 = arith.constant 0 : i32
    %c0_i32_0 = arith.constant 0 : i32
    return %arg0, %arg1, %c0_i32 : i32, i32, i32
  }
}

</mosaic_0001>

<llo_original>
// kernel: xlstm_forward.3
$region0: #{xlstm_forward.3}
  #allocation0 [shape = 'u32[]', space=smem, size = 0x4, offset = 0x4, fixed_abs, tag = 'smem constant byte address 0x4 - core index']
  #allocation1 [shape = 'u32[72,128]{1,0:T(1,128)}', space=vmem, size = 0x9000, scoped, tag = 'internal scratch']
  #allocation2 [shape = 'f32[64,512]{1,0:T(8,128)}', space=vmem, size = 0x20000, scoped, tag = 'scratch operand']
  #allocation3 [shape = 'f32[8,128]{1,0:T(8,128)}', space=vmem, size = 0x1000, scoped, tag = 'scratch operand']
  #allocation4 [shape = 'f32[8,128]{1,0:T(8,128)}', space=vmem, size = 0x1000, scoped, tag = 'scratch operand']
  #allocation5 [shape = 'f32[64,128]{1,0:T(8,128)}', space=vmem, size = 0x8000, scoped, tag = 'scratch operand']
  %s0 = inlined_call_operand.vmem [shape: f32[1,64,16], index: 0, kind: input, shape index: {}]
  %s1 = inlined_call_operand.vmem [shape: f32[16,512], index: 1, kind: input, shape index: {}]
  %s2 = inlined_call_operand.vmem [shape: f32[128,512], index: 2, kind: input, shape index: {}]
  %s3 = inlined_call_operand.vmem [shape: f32[1,512], index: 3, kind: input, shape index: {}]
  %s4 = inlined_call_operand.vmem [shape: f32[128,128], index: 4, kind: input, shape index: {}]
  %s5 = inlined_call_operand.vmem [shape: f32[1,128], index: 5, kind: input, shape index: {}]
  %s6 = inlined_call_operand.vmem [shape: f32[1,64,128], index: 6, kind: output, shape index: {}]
  %s7 = sld [smem:[#allocation0]]
  $region38: #{xlstm_forward.3} parent=0
    _
  %s9 = ssub.s32 1, %s7
  %s10 = scalar_select 0, %s9, %s7
  // Predicated region
  $region2: #{xlstm_forward.3} parent=0 // pred_check
    _
  $region3: #{xlstm_forward.3} parent=0 // pred_check_branch
    %12 = sbr.rel (0) target = $region5
  $region4: #{xlstm_forward.3} parent=0 // pred_region
    _
  $region5: #{xlstm_forward.3} parent=0 // pred_fallthru
    _
  // Predicated region
  $region6: #{xlstm_forward.3} parent=0 // pred_check
    _
  $region7: #{xlstm_forward.3} parent=0 // pred_check_branch
    %14 = sbr.rel (0) target = $region9
  $region8: #{xlstm_forward.3} parent=0 // pred_region
    _
  $region9: #{xlstm_forward.3} parent=0 // pred_fallthru
    _
  // Predicated region
  $region10: #{xlstm_forward.3} parent=0 // pred_check
    _
  $region11: #{xlstm_forward.3} parent=0 // pred_check_branch
    %16 = sbr.rel (0) target = $region13
  $region12: #{xlstm_forward.3} parent=0 // pred_region
    _
  $region13: #{xlstm_forward.3} parent=0 // pred_fallthru
    _
  // Predicated region
  $region14: #{xlstm_forward.3} parent=0 // pred_check
    _
  $region15: #{xlstm_forward.3} parent=0 // pred_check_branch
    %18 = sbr.rel (0) target = $region17
  $region16: #{xlstm_forward.3} parent=0 // pred_region
    _
  $region17: #{xlstm_forward.3} parent=0 // pred_fallthru
    _
  // Predicated region
  $region18: #{xlstm_forward.3} parent=0 // pred_check
    _
  $region19: #{xlstm_forward.3} parent=0 // pred_check_branch
    %20 = sbr.rel (0) target = $region21
  $region20: #{xlstm_forward.3} parent=0 // pred_region
    _
  $region21: #{xlstm_forward.3} parent=0 // pred_fallthru
    _
  // Predicated region
  $region22: #{xlstm_forward.3} parent=0 // pred_check
    _
  $region23: #{xlstm_forward.3} parent=0 // pred_check_branch
    %22 = sbr.rel (0) target = $region25
  $region24: #{xlstm_forward.3} parent=0 // pred_region
    _
  $region25: #{xlstm_forward.3} parent=0 // pred_fallthru
    _
  %p23 = scmp.eq.s32.totalorder 0, 0
  // Predicated region
  $region26: #{xlstm_forward.3} parent=0 // pred_check
    %p24 = pneg %p23
  $region27: #{xlstm_forward.3} parent=0 // pred_check_branch
    %26 = sbr.rel (%p24) target = $region29
  $region28: #{xlstm_forward.3} parent=0 // pred_region
    %27 = vst [vmem:[#allocation3] sm:$0xff] 0.0
    %28 = vst [vmem:[#allocation4] sm:$0xff] 0.0
  $region29: #{xlstm_forward.3} parent=0 // pred_fallthru
    _
  %v29 = vld [vmem:[%s0] sm:$0xff]
  %v30 = vld [vmem:[%s0 + $0x8] sm:$0xff]
  %v31 = vld [vmem:[%s0 + $0x10] sm:$0xff]
  %v32 = vld [vmem:[%s0 + $0x18] sm:$0xff]
  %v33 = vld [vmem:[%s0 + $0x20] sm:$0xff]
  %v34 = vld [vmem:[%s0 + $0x28] sm:$0xff]
  %v35 = vld [vmem:[%s0 + $0x30] sm:$0xff]
  %v36 = vld [vmem:[%s0 + $0x38] sm:$0xff]
  %v37 = vld [vmem:[%s1] sm:$0xff]
  %v38 = vld [vmem:[%s1 + $0x8] sm:$0xff]
  %v39 = vld [vmem:[%s1 + $0x10] sm:$0xff]
  %v40 = vld [vmem:[%s1 + $0x18] sm:$0xff]
  %v41 = vld [vmem:[%s1 + $0x20] sm:$0xff]
  %v42 = vld [vmem:[%s1 + $0x28] sm:$0xff]
  %v43 = vld [vmem:[%s1 + $0x30] sm:$0xff]
  %v44 = vld [vmem:[%s1 + $0x38] sm:$0xff]
  %v45 = vld [vmem:[%s3] sm:$0xf]
  %v47 = vperm.slane %v45, 0
  %v48 = vperm.slane %v45, 1
  %v49 = vperm.slane %v45, 2
  %v50 = vperm.slane %v45, 3
  %vm55 = vcmask 130048
  %v57 = vsel %vm55, %v29, 0
  %v60 = vsel %vm55, %v30, 0
  %v63 = vsel %vm55, %v31, 0
  %v66 = vsel %vm55, %v32, 0
  %v69 = vsel %vm55, %v33, 0
  %v72 = vsel %vm55, %v34, 0
  %v75 = vsel %vm55, %v35, 0
  %v78 = vsel %vm55, %v36, 0
  %80 = vmatpush.msra.mxu0 0.0
  %81 = vmatpush.msra.mxu0 0.0
  %82 = vmatpush.msra.mxu0 0.0
  %83 = vmatpush.msra.mxu0 0.0
  %84 = vmatpush.msra.mxu0 0.0
  %85 = vmatpush.msra.mxu0 0.0
  %86 = vmatpush.msra.mxu0 0.0
  %87 = vmatpush.msra.mxu0 0.0
  %88 = vmatpush.msra.mxu0 0.0
  %89 = vmatpush.msra.mxu0 0.0
  %90 = vmatpush.msra.mxu0 0.0
  %91 = vmatpush.msra.mxu0 0.0
  %92 = vmatpush.msra.mxu0 0.0
  %93 = vmatpush.msra.mxu0 0.0
  %94 = vmatpush.msra.mxu0 %v41
  %95 = vmatpush.msra.mxu0 %v37
  %96 = vmatmul.f32.gmra.mxu0 %v57
  %v97 = vpop.f32.mrf.mxu0
  %v98 = vadd.f32 %v47, %v97
  %99 = vmatmul.f32.gmra.mxu0 %v60
  %v100 = vpop.f32.mrf.mxu0
  %v101 = vadd.f32 %v47, %v100
  %102 = vmatmul.f32.gmra.mxu0 %v63
  %v103 = vpop.f32.mrf.mxu0
  %v104 = vadd.f32 %v47, %v103
  %105 = vmatmul.f32.gmra.mxu0 %v66
  %v106 = vpop.f32.mrf.mxu0
  %v107 = vadd.f32 %v47, %v106
  %108 = vmatmul.f32.gmra.mxu0 %v69
  %v109 = vpop.f32.mrf.mxu0
  %v110 = vadd.f32 %v47, %v109
  %111 = vmatmul.f32.gmra.mxu0 %v72
  %v112 = vpop.f32.mrf.mxu0
  %v113 = vadd.f32 %v47, %v112
  %114 = vmatmul.f32.gmra.mxu0 %v75
  %v115 = vpop.f32.mrf.mxu0
  %v116 = vadd.f32 %v47, %v115
  %117 = vmatmul.f32.gmra.mxu0 %v78
  %v118 = vpop.f32.mrf.mxu0
  %v119 = vadd.f32 %v47, %v118
  %120 = vdwg.mxu0
  %121 = vmatpush.msra.mxu0 0.0
  %122 = vmatpush.msra.mxu0 0.0
  %123 = vmatpush.msra.mxu0 0.0
  %124 = vmatpush.msra.mxu0 0.0
  %125 = vmatpush.msra.mxu0 0.0
  %126 = vmatpush.msra.mxu0 0.0
  %127 = vmatpush.msra.mxu0 0.0
  %128 = vmatpush.msra.mxu0 0.0
  %129 = vmatpush.msra.mxu0 0.0
  %130 = vmatpush.msra.mxu0 0.0
  %131 = vmatpush.msra.mxu0 0.0
  %132 = vmatpush.msra.mxu0 0.0
  %133 = vmatpush.msra.mxu0 0.0
  %134 = vmatpush.msra.mxu0 0.0
  %135 = vmatpush.msra.mxu0 %v42
  %136 = vmatpush.msra.mxu0 %v38
  %137 = vmatmul.f32.gmra.mxu0 %v57
  %v138 = vpop.f32.mrf.mxu0
  %v139 = vadd.f32 %v48, %v138
  %140 = vmatmul.f32.gmra.mxu0 %v60
  %v141 = vpop.f32.mrf.mxu0
  %v142 = vadd.f32 %v48, %v141
  %143 = vmatmul.f32.gmra.mxu0 %v63
  %v144 = vpop.f32.mrf.mxu0
  %v145 = vadd.f32 %v48, %v144
  %146 = vmatmul.f32.gmra.mxu0 %v66
  %v147 = vpop.f32.mrf.mxu0
  %v148 = vadd.f32 %v48, %v147
  %149 = vmatmul.f32.gmra.mxu0 %v69
  %v150 = vpop.f32.mrf.mxu0
  %v151 = vadd.f32 %v48, %v150
  %152 = vmatmul.f32.gmra.mxu0 %v72
  %v153 = vpop.f32.mrf.mxu0
  %v154 = vadd.f32 %v48, %v153
  %155 = vmatmul.f32.gmra.mxu0 %v75
  %v156 = vpop.f32.mrf.mxu0
  %v157 = vadd.f32 %v48, %v156
  %158 = vmatmul.f32.gmra.mxu0 %v78
  %v159 = vpop.f32.mrf.mxu0
  %v160 = vadd.f32 %v48, %v159
  %161 = vdwg.mxu0
  %162 = vmatpush.msra.mxu0 0.0
  %163 = vmatpush.msra.mxu0 0.0
  %164 = vmatpush.msra.mxu0 0.0
  %165 = vmatpush.msra.mxu0 0.0
  %166 = vmatpush.msra.mxu0 0.0
  %167 = vmatpush.msra.mxu0 0.0
  %168 = vmatpush.msra.mxu0 0.0
  %169 = vmatpush.msra.mxu0 0.0
  %170 = vmatpush.msra.mxu0 0.0
  %171 = vmatpush.msra.mxu0 0.0
  %172 = vmatpush.msra.mxu0 0.0
  %173 = vmatpush.msra.mxu0 0.0
  %174 = vmatpush.msra.mxu0 0.0
  %175 = vmatpush.msra.mxu0 0.0
  %176 = vmatpush.msra.mxu0 %v43
  %177 = vmatpush.msra.mxu0 %v39
  %178 = vmatmul.f32.gmra.mxu0 %v57
  %v179 = vpop.f32.mrf.mxu0
  %v180 = vadd.f32 %v49, %v179
  %181 = vmatmul.f32.gmra.mxu0 %v60
  %v182 = vpop.f32.mrf.mxu0
  %v183 = vadd.f32 %v49, %v182
  %184 = vmatmul.f32.gmra.mxu0 %v63
  %v185 = vpop.f32.mrf.mxu0
  %v186 = vadd.f32 %v49, %v185
  %187 = vmatmul.f32.gmra.mxu0 %v66
  %v188 = vpop.f32.mrf.mxu0
  %v189 = vadd.f32 %v49, %v188
  %190 = vmatmul.f32.gmra.mxu0 %v69
  %v191 = vpop.f32.mrf.mxu0
  %v192 = vadd.f32 %v49, %v191
  %193 = vmatmul.f32.gmra.mxu0 %v72
  %v194 = vpop.f32.mrf.mxu0
  %v195 = vadd.f32 %v49, %v194
  %196 = vmatmul.f32.gmra.mxu0 %v75
  %v197 = vpop.f32.mrf.mxu0
  %v198 = vadd.f32 %v49, %v197
  %199 = vmatmul.f32.gmra.mxu0 %v78
  %v200 = vpop.f32.mrf.mxu0
  %v201 = vadd.f32 %v49, %v200
  %202 = vdwg.mxu0
  %203 = vmatpush.msra.mxu0 0.0
  %204 = vmatpush.msra.mxu0 0.0
  %205 = vmatpush.msra.mxu0 0.0
  %206 = vmatpush.msra.mxu0 0.0
  %207 = vmatpush.msra.mxu0 0.0
  %208 = vmatpush.msra.mxu0 0.0
  %209 = vmatpush.msra.mxu0 0.0
  %210 = vmatpush.msra.mxu0 0.0
  %211 = vmatpush.msra.mxu0 0.0
  %212 = vmatpush.msra.mxu0 0.0
  %213 = vmatpush.msra.mxu0 0.0
  %214 = vmatpush.msra.mxu0 0.0
  %215 = vmatpush.msra.mxu0 0.0
  %216 = vmatpush.msra.mxu0 0.0
  %217 = vmatpush.msra.mxu0 %v44
  %218 = vmatpush.msra.mxu0 %v40
  %219 = vmatmul.f32.gmra.mxu0 %v57
  %v220 = vpop.f32.mrf.mxu0
  %v221 = vadd.f32 %v50, %v220
  %222 = vmatmul.f32.gmra.mxu0 %v60
  %v223 = vpop.f32.mrf.mxu0
  %v224 = vadd.f32 %v50, %v223
  %225 = vmatmul.f32.gmra.mxu0 %v63
  %v226 = vpop.f32.mrf.mxu0
  %v227 = vadd.f32 %v50, %v226
  %228 = vmatmul.f32.gmra.mxu0 %v66
  %v229 = vpop.f32.mrf.mxu0
  %v230 = vadd.f32 %v50, %v229
  %231 = vmatmul.f32.gmra.mxu0 %v69
  %v232 = vpop.f32.mrf.mxu0
  %v233 = vadd.f32 %v50, %v232
  %234 = vmatmul.f32.gmra.mxu0 %v72
  %v235 = vpop.f32.mrf.mxu0
  %v236 = vadd.f32 %v50, %v235
  %237 = vmatmul.f32.gmra.mxu0 %v75
  %v238 = vpop.f32.mrf.mxu0
  %v239 = vadd.f32 %v50, %v238
  %240 = vmatmul.f32.gmra.mxu0 %v78
  %v241 = vpop.f32.mrf.mxu0
  %v242 = vadd.f32 %v50, %v241
  %243 = vdwg.mxu0
  %244 = vst [vmem:[#allocation2] sm:$0xff] %v98
  %245 = vst [vmem:[#allocation2 + $0x8] sm:$0xff] %v139
  %246 = vst [vmem:[#allocation2 + $0x10] sm:$0xff] %v180
  %247 = vst [vmem:[#allocation2 + $0x18] sm:$0xff] %v221
  %248 = vst [vmem:[#allocation2 + $0x20] sm:$0xff] %v101
  %249 = vst [vmem:[#allocation2 + $0x28] sm:$0xff] %v142
  %250 = vst [vmem:[#allocation2 + $0x30] sm:$0xff] %v183
  %251 = vst [vmem:[#allocation2 + $0x38] sm:$0xff] %v224
  %252 = vst [vmem:[#allocation2 + $0x40] sm:$0xff] %v104
  %253 = vst [vmem:[#allocation2 + $0x48] sm:$0xff] %v145
  %254 = vst [vmem:[#allocation2 + $0x50] sm:$0xff] %v186
  %255 = vst [vmem:[#allocation2 + $0x58] sm:$0xff] %v227
  %256 = vst [vmem:[#allocation2 + $0x60] sm:$0xff] %v107
  %257 = vst [vmem:[#allocation2 + $0x68] sm:$0xff] %v148
  %258 = vst [vmem:[#allocation2 + $0x70] sm:$0xff] %v189
  %259 = vst [vmem:[#allocation2 + $0x78] sm:$0xff] %v230
  %260 = vst [vmem:[#allocation2 + $0x80] sm:$0xff] %v110
  %261 = vst [vmem:[#allocation2 + $0x88] sm:$0xff] %v151
  %262 = vst [vmem:[#allocation2 + $0x90] sm:$0xff] %v192
  %263 = vst [vmem:[#allocation2 + $0x98] sm:$0xff] %v233
  %264 = vst [vmem:[#allocation2 + $0xa0] sm:$0xff] %v113
  %265 = vst [vmem:[#allocation2 + $0xa8] sm:$0xff] %v154
  %266 = vst [vmem:[#allocation2 + $0xb0] sm:$0xff] %v195
  %267 = vst [vmem:[#allocation2 + $0xb8] sm:$0xff] %v236
  %268 = vst [vmem:[#allocation2 + $0xc0] sm:$0xff] %v116
  %269 = vst [vmem:[#allocation2 + $0xc8] sm:$0xff] %v157
  %270 = vst [vmem:[#allocation2 + $0xd0] sm:$0xff] %v198
  %271 = vst [vmem:[#allocation2 + $0xd8] sm:$0xff] %v239
  %272 = vst [vmem:[#allocation2 + $0xe0] sm:$0xff] %v119
  %273 = vst [vmem:[#allocation2 + $0xe8] sm:$0xff] %v160
  %274 = vst [vmem:[#allocation2 + $0xf0] sm:$0xff] %v201
  %275 = vst [vmem:[#allocation2 + $0xf8] sm:$0xff] %v242
  %v276 = vld [vmem:[%s2] sm:$0xff]
  %v277 = vld [vmem:[%s2 + $0x8] sm:$0xff]
  %v278 = vld [vmem:[%s2 + $0x10] sm:$0xff]
  %v279 = vld [vmem:[%s2 + $0x18] sm:$0xff]
  %v280 = vld [vmem:[%s2 + $0x20] sm:$0xff]
  %v281 = vld [vmem:[%s2 + $0x28] sm:$0xff]
  %v282 = vld [vmem:[%s2 + $0x30] sm:$0xff]
  %v283 = vld [vmem:[%s2 + $0x38] sm:$0xff]
  %v284 = vld [vmem:[%s2 + $0x40] sm:$0xff]
  %v285 = vld [vmem:[%s2 + $0x48] sm:$0xff]
  %v286 = vld [vmem:[%s2 + $0x50] sm:$0xff]
  %v287 = vld [vmem:[%s2 + $0x58] sm:$0xff]
  %v288 = vld [vmem:[%s2 + $0x60] sm:$0xff]
  %v289 = vld [vmem:[%s2 + $0x68] sm:$0xff]
  %v290 = vld [vmem:[%s2 + $0x70] sm:$0xff]
  %v291 = vld [vmem:[%s2 + $0x78] sm:$0xff]
  %v292 = vld [vmem:[%s2 + $0x80] sm:$0xff]
  %v293 = vld [vmem:[%s2 + $0x88] sm:$0xff]
  %v294 = vld [vmem:[%s2 + $0x90] sm:$0xff]
  %v295 = vld [vmem:[%s2 + $0x98] sm:$0xff]
  %v296 = vld [vmem:[%s2 + $0xa0] sm:$0xff]
  %v297 = vld [vmem:[%s2 + $0xa8] sm:$0xff]
  %v298 = vld [vmem:[%s2 + $0xb0] sm:$0xff]
  %v299 = vld [vmem:[%s2 + $0xb8] sm:$0xff]
  %v300 = vld [vmem:[%s2 + $0xc0] sm:$0xff]
  %v301 = vld [vmem:[%s2 + $0xc8] sm:$0xff]
  %v302 = vld [vmem:[%s2 + $0xd0] sm:$0xff]
  %v303 = vld [vmem:[%s2 + $0xd8] sm:$0xff]
  %v304 = vld [vmem:[%s2 + $0xe0] sm:$0xff]
  %v305 = vld [vmem:[%s2 + $0xe8] sm:$0xff]
  %v306 = vld [vmem:[%s2 + $0xf0] sm:$0xff]
  %v307 = vld [vmem:[%s2 + $0xf8] sm:$0xff]
  %v308 = vld [vmem:[%s2 + $0x100] sm:$0xff]
  %v309 = vld [vmem:[%s2 + $0x108] sm:$0xff]
  %v310 = vld [vmem:[%s2 + $0x110] sm:$0xff]
  %v311 = vld [vmem:[%s2 + $0x118] sm:$0xff]
  %v312 = vld [vmem:[%s2 + $0x120] sm:$0xff]
  %v313 = vld [vmem:[%s2 + $0x128] sm:$0xff]
  %v314 = vld [vmem:[%s2 + $0x130] sm:$0xff]
  %v315 = vld [vmem:[%s2 + $0x138] sm:$0xff]
  %v316 = vld [vmem:[%s2 + $0x140] sm:$0xff]
  %v317 = vld [vmem:[%s2 + $0x148] sm:$0xff]
  %v318 = vld [vmem:[%s2 + $0x150] sm:$0xff]
  %v319 = vld [vmem:[%s2 + $0x158] sm:$0xff]
  %v320 = vld [vmem:[%s2 + $0x160] sm:$0xff]
  %v321 = vld [vmem:[%s2 + $0x168] sm:$0xff]
  %v322 = vld [vmem:[%s2 + $0x170] sm:$0xff]
  %v323 = vld [vmem:[%s2 + $0x178] sm:$0xff]
  %v324 = vld [vmem:[%s2 + $0x180] sm:$0xff]
  %v325 = vld [vmem:[%s2 + $0x188] sm:$0xff]
  %v326 = vld [vmem:[%s2 + $0x190] sm:$0xff]
  %v327 = vld [vmem:[%s2 + $0x198] sm:$0xff]
  %v328 = vld [vmem:[%s2 + $0x1a0] sm:$0xff]
  %v329 = vld [vmem:[%s2 + $0x1a8] sm:$0xff]
  %v330 = vld [vmem:[%s2 + $0x1b0] sm:$0xff]
  %v331 = vld [vmem:[%s2 + $0x1b8] sm:$0xff]
  %v332 = vld [vmem:[%s2 + $0x1c0] sm:$0xff]
  %v333 = vld [vmem:[%s2 + $0x1c8] sm:$0xff]
  %v334 = vld [vmem:[%s2 + $0x1d0] sm:$0xff]
  %v335 = vld [vmem:[%s2 + $0x1d8] sm:$0xff]
  %v336 = vld [vmem:[%s2 + $0x1e0] sm:$0xff]
  %v337 = vld [vmem:[%s2 + $0x1e8] sm:$0xff]
  %v338 = vld [vmem:[%s2 + $0x1f0] sm:$0xff]
  %v339 = vld [vmem:[%s2 + $0x1f8] sm:$0xff]
  %v340 = vlaneseq
  %v341 = vand.u32 %v340, 127
  %v342 = vadd.s32 %v341, 128
  %v343 = vadd.s32 %v341, 256
  %v344 = vadd.s32 %v341, 384
  %vm345 = vcmp.ge.s32.totalorder %v341, 256
  %vm346 = vcmp.ge.s32.totalorder %v342, 256
  %vm347 = vcmp.ge.s32.totalorder %v343, 256
  %vm348 = vcmp.ge.s32.totalorder %v344, 256
  %vm349 = vcmp.lt.s32.totalorder %v341, 384
  %vm350 = vcmp.lt.s32.totalorder %v342, 384
  %vm351 = vcmp.lt.s32.totalorder %v343, 384
  %vm352 = vcmp.lt.s32.totalorder %v344, 384
  %vm353 = vmand %vm345, %vm349
  %vm354 = vmand %vm346, %vm350
  %vm355 = vmand %vm347, %vm351
  %vm356 = vmand %vm348, %vm352
  %v357 = vld [vmem:[#allocation3] sm:$0xff]
  %v358 = vld [vmem:[#allocation4] sm:$0xff]
  %s359 = smul.u32 0, 4
  %s360 = smul.addr %s359, 8
  %s361 = scalar_lea.vmem [#allocation2], %s360
  %v362 = vld [vmem:[%s361] sm:$0xff]
  %v363 = vld [vmem:[%s361 + $0x8] sm:$0xff]
  %v364 = vld [vmem:[%s361 + $0x10] sm:$0xff]
  %v365 = vld [vmem:[%s361 + $0x18] sm:$0xff]
  %366 = vmatpush.msra.mxu0 %v336
  %367 = vmatpush.msra.mxu0 %v332
  %368 = vmatpush.msra.mxu0 %v328
  %369 = vmatpush.msra.mxu0 %v324
  %370 = vmatpush.msra.mxu0 %v320
  %371 = vmatpush.msra.mxu0 %v316
  %372 = vmatpush.msra.mxu0 %v312
  %373 = vmatpush.msra.mxu0 %v308
  %374 = vmatpush.msra.mxu0 %v304
  %375 = vmatpush.msra.mxu0 %v300
  %376 = vmatpush.msra.mxu0 %v296
  %377 = vmatpush.msra.mxu0 %v292
  %378 = vmatpush.msra.mxu0 %v288
  %379 = vmatpush.msra.mxu0 %v284
  %380 = vmatpush.msra.mxu0 %v280
  %381 = vmatpush.msra.mxu0 %v276
  %382 = vmatmul.f32.gmra.mxu0 %v357
  %v383 = vpop.f32.mrf.mxu0
  %v384 = vadd.f32 0.0, %v383
  %385 = vdwg.mxu0
  %386 = vmatpush.msra.mxu0 %v337
  %387 = vmatpush.msra.mxu0 %v333
  %388 = vmatpush.msra.mxu0 %v329
  %389 = vmatpush.msra.mxu0 %v325
  %390 = vmatpush.msra.mxu0 %v321
  %391 = vmatpush.msra.mxu0 %v317
  %392 = vmatpush.msra.mxu0 %v313
  %393 = vmatpush.msra.mxu0 %v309
  %394 = vmatpush.msra.mxu0 %v305
  %395 = vmatpush.msra.mxu0 %v301
  %396 = vmatpush.msra.mxu0 %v297
  %397 = vmatpush.msra.mxu0 %v293
  %398 = vmatpush.msra.mxu0 %v289
  %399 = vmatpush.msra.mxu0 %v285
  %400 = vmatpush.msra.mxu0 %v281
  %401 = vmatpush.msra.mxu0 %v277
  %402 = vmatmul.f32.gmra.mxu0 %v357
  %v403 = vpop.f32.mrf.mxu0
  %v404 = vadd.f32 0.0, %v403
  %405 = vdwg.mxu0
  %406 = vmatpush.msra.mxu0 %v338
  %407 = vmatpush.msra.mxu0 %v334
  %408 = vmatpush.msra.mxu0 %v330
  %409 = vmatpush.msra.mxu0 %v326
  %410 = vmatpush.msra.mxu0 %v322
  %411 = vmatpush.msra.mxu0 %v318
  %412 = vmatpush.msra.mxu0 %v314
  %413 = vmatpush.msra.mxu0 %v310
  %414 = vmatpush.msra.mxu0 %v306
  %415 = vmatpush.msra.mxu0 %v302
  %416 = vmatpush.msra.mxu0 %v298
  %417 = vmatpush.msra.mxu0 %v294
  %418 = vmatpush.msra.mxu0 %v290
  %419 = vmatpush.msra.mxu0 %v286
  %420 = vmatpush.msra.mxu0 %v282
  %421 = vmatpush.msra.mxu0 %v278
  %422 = vmatmul.f32.gmra.mxu0 %v357
  %v423 = vpop.f32.mrf.mxu0
  %v424 = vadd.f32 0.0, %v423
  %425 = vdwg.mxu0
  %426 = vmatpush.msra.mxu0 %v339
  %427 = vmatpush.msra.mxu0 %v335
  %428 = vmatpush.msra.mxu0 %v331
  %429 = vmatpush.msra.mxu0 %v327
  %430 = vmatpush.msra.mxu0 %v323
  %431 = vmatpush.msra.mxu0 %v319
  %432 = vmatpush.msra.mxu0 %v315
  %433 = vmatpush.msra.mxu0 %v311
  %434 = vmatpush.msra.mxu0 %v307
  %435 = vmatpush.msra.mxu0 %v303
  %436 = vmatpush.msra.mxu0 %v299
  %437 = vmatpush.msra.mxu0 %v295
  %438 = vmatpush.msra.mxu0 %v291
  %439 = vmatpush.msra.mxu0 %v287
  %440 = vmatpush.msra.mxu0 %v283
  %441 = vmatpush.msra.mxu0 %v279
  %442 = vmatmul.f32.gmra.mxu0 %v357
  %v443 = vpop.f32.mrf.mxu0
  %v444 = vadd.f32 0.0, %v443
  %445 = vdwg.mxu0
  %v446 = vadd.f32 %v362, %v384
  %v447 = vadd.f32 %v363, %v404
  %v448 = vadd.f32 %v364, %v424
  %v449 = vadd.f32 %v365, %v444
  %v450 = vmul.f32 %v446, 0.5
  %v451 = vmul.f32 %v447, 0.5
  %v452 = vmul.f32 %v448, 0.5
  %v453 = vmul.f32 %v449, 0.5
  %v454 = vsel %vm353, %v446, %v450
  %v455 = vsel %vm354, %v447, %v451
  %v456 = vsel %vm355, %v448, %v452
  %v457 = vsel %vm356, %v449, %v453
  %v458 = vtanh.pop %v454
  %v459 = vtanh.pop %v455
  %v460 = vtanh.pop %v456
  %v461 = vtanh.pop %v457
  %v462 = vmul.f32 %v458, 0.5
  %v463 = vmul.f32 %v459, 0.5
  %v464 = vmul.f32 %v460, 0.5
  %v465 = vmul.f32 %v461, 0.5
  %v466 = vadd.f32 %v462, 0.5
  %v467 = vadd.f32 %v463, 0.5
  %v468 = vadd.f32 %v464, 0.5
  %v469 = vadd.f32 %v465, 0.5
  %v470 = vsel %vm353, %v458, %v466
  %v471 = vsel %vm354, %v459, %v467
  %v472 = vsel %vm355, %v460, %v468
  %v473 = vsel %vm356, %v461, %v469
  %v474 = vmul.f32 %v471, %v358
  %v475 = vmul.f32 %v470, %v472
  %v476 = vadd.f32 %v474, %v475
  %v477 = vtanh.pop %v476
  %v478 = vmul.f32 %v473, %v477
  %479 = vst [vmem:[#allocation5] sm:$0xff] %v478
  %s480 = smul.u32 1, 4
  %s481 = smul.addr %s480, 8
  %s482 = scalar_lea.vmem [#allocation2], %s481
  %v483 = vld [vmem:[%s482] sm:$0xff]
  %v484 = vld [vmem:[%s482 + $0x8] sm:$0xff]
  %v485 = vld [vmem:[%s482 + $0x10] sm:$0xff]
  %v486 = vld [vmem:[%s482 + $0x18] sm:$0xff]
  %487 = vmatpush.msra.mxu0 %v336
  %488 = vmatpush.msra.mxu0 %v332
  %489 = vmatpush.msra.mxu0 %v328
  %490 = vmatpush.msra.mxu0 %v324
  %491 = vmatpush.msra.mxu0 %v320
  %492 = vmatpush.msra.mxu0 %v316
  %493 = vmatpush.msra.mxu0 %v312
  %494 = vmatpush.msra.mxu0 %v308
  %495 = vmatpush.msra.mxu0 %v304
  %496 = vmatpush.msra.mxu0 %v300
  %497 = vmatpush.msra.mxu0 %v296
  %498 = vmatpush.msra.mxu0 %v292
  %499 = vmatpush.msra.mxu0 %v288
  %500 = vmatpush.msra.mxu0 %v284
  %501 = vmatpush.msra.mxu0 %v280
  %502 = vmatpush.msra.mxu0 %v276
  %503 = vmatmul.f32.gmra.mxu0 %v478
  %v504 = vpop.f32.mrf.mxu0
  %v505 = vadd.f32 0.0, %v504
  %506 = vdwg.mxu0
  %507 = vmatpush.msra.mxu0 %v337
  %508 = vmatpush.msra.mxu0 %v333
  %509 = vmatpush.msra.mxu0 %v329
  %510 = vmatpush.msra.mxu0 %v325
  %511 = vmatpush.msra.mxu0 %v321
  %512 = vmatpush.msra.mxu0 %v317
  %513 = vmatpush.msra.mxu0 %v313
  %514 = vmatpush.msra.mxu0 %v309
  %515 = vmatpush.msra.mxu0 %v305
  %516 = vmatpush.msra.mxu0 %v301
  %517 = vmatpush.msra.mxu0 %v297
  %518 = vmatpush.msra.mxu0 %v293
  %519 = vmatpush.msra.mxu0 %v289
  %520 = vmatpush.msra.mxu0 %v285
  %521 = vmatpush.msra.mxu0 %v281
  %522 = vmatpush.msra.mxu0 %v277
  %523 = vmatmul.f32.gmra.mxu0 %v478
  %v524 = vpop.f32.mrf.mxu0
  %v525 = vadd.f32 0.0, %v524
  %526 = vdwg.mxu0
  %527 = vmatpush.msra.mxu0 %v338
  %528 = vmatpush.msra.mxu0 %v334
  %529 = vmatpush.msra.mxu0 %v330
  %530 = vmatpush.msra.mxu0 %v326
  %531 = vmatpush.msra.mxu0 %v322
  %532 = vmatpush.msra.mxu0 %v318
  %533 = vmatpush.msra.mxu0 %v314
  %534 = vmatpush.msra.mxu0 %v310
  %535 = vmatpush.msra.mxu0 %v306
  %536 = vmatpush.msra.mxu0 %v302
  %537 = vmatpush.msra.mxu0 %v298
  %538 = vmatpush.msra.mxu0 %v294
  %539 = vmatpush.msra.mxu0 %v290
  %540 = vmatpush.msra.mxu0 %v286
  %541 = vmatpush.msra.mxu0 %v282
  %542 = vmatpush.msra.mxu0 %v278
  %543 = vmatmul.f32.gmra.mxu0 %v478
  %v544 = vpop.f32.mrf.mxu0
  %v545 = vadd.f32 0.0, %v544
  %546 = vdwg.mxu0
  %547 = vmatpush.msra.mxu0 %v339
  %548 = vmatpush.msra.mxu0 %v335
  %549 = vmatpush.msra.mxu0 %v331
  %550 = vmatpush.msra.mxu0 %v327
  %551 = vmatpush.msra.mxu0 %v323
  %552 = vmatpush.msra.mxu0 %v319
  %553 = vmatpush.msra.mxu0 %v315
  %554 = vmatpush.msra.mxu0 %v311
  %555 = vmatpush.msra.mxu0 %v307
  %556 = vmatpush.msra.mxu0 %v303
  %557 = vmatpush.msra.mxu0 %v299
  %558 = vmatpush.msra.mxu0 %v295
  %559 = vmatpush.msra.mxu0 %v291
  %560 = vmatpush.msra.mxu0 %v287
  %561 = vmatpush.msra.mxu0 %v283
  %562 = vmatpush.msra.mxu0 %v279
  %563 = vmatmul.f32.gmra.mxu0 %v478
  %v564 = vpop.f32.mrf.mxu0
  %v565 = vadd.f32 0.0, %v564
  %566 = vdwg.mxu0
  %v567 = vadd.f32 %v483, %v505
  %v568 = vadd.f32 %v484, %v525
  %v569 = vadd.f32 %v485, %v545
  %v570 = vadd.f32 %v486, %v565
  %v571 = vmul.f32 %v567, 0.5
  %v572 = vmul.f32 %v568, 0.5
  %v573 = vmul.f32 %v569, 0.5
  %v574 = vmul.f32 %v570, 0.5
  %v575 = vsel %vm353, %v567, %v571
  %v576 = vsel %vm354, %v568, %v572
  %v577 = vsel %vm355, %v569, %v573
  %v578 = vsel %vm356, %v570, %v574
  %v579 = vtanh.pop %v575
  %v580 = vtanh.pop %v576
  %v581 = vtanh.pop %v577
  %v582 = vtanh.pop %v578
  %v583 = vmul.f32 %v579, 0.5
  %v584 = vmul.f32 %v580, 0.5
  %v585 = vmul.f32 %v581, 0.5
  %v586 = vmul.f32 %v582, 0.5
  %v587 = vadd.f32 %v583, 0.5
  %v588 = vadd.f32 %v584, 0.5
  %v589 = vadd.f32 %v585, 0.5
  %v590 = vadd.f32 %v586, 0.5
  %v591 = vsel %vm353, %v579, %v587
  %v592 = vsel %vm354, %v580, %v588
  %v593 = vsel %vm355, %v581, %v589
  %v594 = vsel %vm356, %v582, %v590
  %v595 = vmul.f32 %v592, %v476
  %v596 = vmul.f32 %v591, %v593
  %v597 = vadd.f32 %v595, %v596
  %v598 = vtanh.pop %v597
  %v599 = vmul.f32 %v594, %v598
  %s600 = scalar_lea.vmem [#allocation5], 8
  %601 = vst [vmem:[%s600] sm:$0xff] %v599
  %s602 = smul.u32 2, 4
  %s603 = smul.addr %s602, 8
  %s604 = scalar_lea.vmem [#allocation2], %s603
  %v605 = vld [vmem:[%s604] sm:$0xff]
  %v606 = vld [vmem:[%s604 + $0x8] sm:$0xff]
  %v607 = vld [vmem:[%s604 + $0x10] sm:$0xff]
  %v608 = vld [vmem:[%s604 + $0x18] sm:$0xff]
  %609 = vmatpush.msra.mxu0 %v336
  %610 = vmatpush.msra.mxu0 %v332
  %611 = vmatpush.msra.mxu0 %v328
  %612 = vmatpush.msra.mxu0 %v324
  %613 = vmatpush.msra.mxu0 %v320
  %614 = vmatpush.msra.mxu0 %v316
  %615 = vmatpush.msra.mxu0 %v312
  %616 = vmatpush.msra.mxu0 %v308
  %617 = vmatpush.msra.mxu0 %v304
  %618 = vmatpush.msra.mxu0 %v300
  %619 = vmatpush.msra.mxu0 %v296
  %620 = vmatpush.msra.mxu0 %v292
  %621 = vmatpush.msra.mxu0 %v288
  %622 = vmatpush.msra.mxu0 %v284
  %623 = vmatpush.msra.mxu0 %v280
  %624 = vmatpush.msra.mxu0 %v276
  %625 = vmatmul.f32.gmra.mxu0 %v599
  %v626 = vpop.f32.mrf.mxu0
  %v627 = vadd.f32 0.0, %v626
  %628 = vdwg.mxu0
  %629 = vmatpush.msra.mxu0 %v337
  %630 = vmatpush.msra.mxu0 %v333
  %631 = vmatpush.msra.mxu0 %v329
  %632 = vmatpush.msra.mxu0 %v325
  %633 = vmatpush.msra.mxu0 %v321
  %634 = vmatpush.msra.mxu0 %v317
  %635 = vmatpush.msra.mxu0 %v313
  %636 = vmatpush.msra.mxu0 %v309
  %637 = vmatpush.msra.mxu0 %v305
  %638 = vmatpush.msra.mxu0 %v301
  %639 = vmatpush.msra.mxu0 %v297
  %640 = vmatpush.msra.mxu0 %v293
  %641 = vmatpush.msra.mxu0 %v289
  %642 = vmatpush.msra.mxu0 %v285
  %643 = vmatpush.msra.mxu0 %v281
  %644 = vmatpush.msra.mxu0 %v277
  %645 = vmatmul.f32.gmra.mxu0 %v599
  %v646 = vpop.f32.mrf.mxu0
  %v647 = vadd.f32 0.0, %v646
  %648 = vdwg.mxu0
  %649 = vmatpush.msra.mxu0 %v338
  %650 = vmatpush.msra.mxu0 %v334
  %651 = vmatpush.msra.mxu0 %v330
  %652 = vmatpush.msra.mxu0 %v326
  %653 = vmatpush.msra.mxu0 %v322
  %654 = vmatpush.msra.mxu0 %v318
  %655 = vmatpush.msra.mxu0 %v314
  %656 = vmatpush.msra.mxu0 %v310
  %657 = vmatpush.msra.mxu0 %v306
  %658 = vmatpush.msra.mxu0 %v302
  %659 = vmatpush.msra.mxu0 %v298
  %660 = vmatpush.msra.mxu0 %v294
  %661 = vmatpush.msra.mxu0 %v290
  %662 = vmatpush.msra.mxu0 %v286
  %663 = vmatpush.msra.mxu0 %v282
  %664 = vmatpush.msra.mxu0 %v278
  %665 = vmatmul.f32.gmra.mxu0 %v599
  %v666 = vpop.f32.mrf.mxu0
  %v667 = vadd.f32 0.0, %v666
  %668 = vdwg.mxu0
  %669 = vmatpush.msra.mxu0 %v339
  %670 = vmatpush.msra.mxu0 %v335
  %671 = vmatpush.msra.mxu0 %v331
  %672 = vmatpush.msra.mxu0 %v327
  %673 = vmatpush.msra.mxu0 %v323
  %674 = vmatpush.msra.mxu0 %v319
  %675 = vmatpush.msra.mxu0 %v315
  %676 = vmatpush.msra.mxu0 %v311
  %677 = vmatpush.msra.mxu0 %v307
  %678 = vmatpush.msra.mxu0 %v303
  %679 = vmatpush.msra.mxu0 %v299
  %680 = vmatpush.msra.mxu0 %v295
  %681 = vmatpush.msra.mxu0 %v291
  %682 = vmatpush.msra.mxu0 %v287
  %683 = vmatpush.msra.mxu0 %v283
  %684 = vmatpush.msra.mxu0 %v279
  %685 = vmatmul.f32.gmra.mxu0 %v599
  %v686 = vpop.f32.mrf.mxu0
  %v687 = vadd.f32 0.0, %v686
  %688 = vdwg.mxu0
  %v689 = vadd.f32 %v605, %v627
  %v690 = vadd.f32 %v606, %v647
  %v691 = vadd.f32 %v607, %v667
  %v692 = vadd.f32 %v608, %v687
  %v693 = vmul.f32 %v689, 0.5
  %v694 = vmul.f32 %v690, 0.5
  %v695 = vmul.f32 %v691, 0.5
  %v696 = vmul.f32 %v692, 0.5
  %v697 = vsel %vm353, %v689, %v693
  %v698 = vsel %vm354, %v690, %v694
  %v699 = vsel %vm355, %v691, %v695
  %v700 = vsel %vm356, %v692, %v696
  %v701 = vtanh.pop %v697
  %v702 = vtanh.pop %v698
  %v703 = vtanh.pop %v699
  %v704 = vtanh.pop %v700
  %v705 = vmul.f32 %v701, 0.5
  %v706 = vmul.f32 %v702, 0.5
  %v707 = vmul.f32 %v703, 0.5
  %v708 = vmul.f32 %v704, 0.5
  %v709 = vadd.f32 %v705, 0.5
  %v710 = vadd.f32 %v706, 0.5
  %v711 = vadd.f32 %v707, 0.5
  %v712 = vadd.f32 %v708, 0.5
  %v713 = vsel %vm353, %v701, %v709
  %v714 = vsel %vm354, %v702, %v710
  %v715 = vsel %vm355, %v703, %v711
  %v716 = vsel %vm356, %v704, %v712
  %v717 = vmul.f32 %v714, %v597
  %v718 = vmul.f32 %v713, %v715
  %v719 = vadd.f32 %v717, %v718
  %v720 = vtanh.pop %v719
  %v721 = vmul.f32 %v716, %v720
  %s722 = scalar_lea.vmem [#allocation5], 16
  %723 = vst [vmem:[%s722] sm:$0xff] %v721
  %s724 = smul.u32 3, 4
  %s725 = smul.addr %s724, 8
  %s726 = scalar_lea.vmem [#allocation2], %s725
  %v727 = vld [vmem:[%s726] sm:$0xff]
  %v728 = vld [vmem:[%s726 + $0x8] sm:$0xff]
  %v729 = vld [vmem:[%s726 + $0x10] sm:$0xff]
  %v730 = vld [vmem:[%s726 + $0x18] sm:$0xff]
  %731 = vmatpush.msra.mxu0 %v336
  %732 = vmatpush.msra.mxu0 %v332
  %733 = vmatpush.msra.mxu0 %v328
  %734 = vmatpush.msra.mxu0 %v324
  %735 = vmatpush.msra.mxu0 %v320
  %736 = vmatpush.msra.mxu0 %v316
  %737 = vmatpush.msra.mxu0 %v312
  %738 = vmatpush.msra.mxu0 %v308
  %739 = vmatpush.msra.mxu0 %v304
  %740 = vmatpush.msra.mxu0 %v300
  %741 = vmatpush.msra.mxu0 %v296
  %742 = vmatpush.msra.mxu0 %v292
  %743 = vmatpush.msra.mxu0 %v288
  %744 = vmatpush.msra.mxu0 %v284
  %745 = vmatpush.msra.mxu0 %v280
  %746 = vmatpush.msra.mxu0 %v276
  %747 = vmatmul.f32.gmra.mxu0 %v721
  %v748 = vpop.f32.mrf.mxu0
  %v749 = vadd.f32 0.0, %v748
  %750 = vdwg.mxu0
  %751 = vmatpush.msra.mxu0 %v337
  %752 = vmatpush.msra.mxu0 %v333
  %753 = vmatpush.msra.mxu0 %v329
  %754 = vmatpush.msra.mxu0 %v325
  %755 = vmatpush.msra.mxu0 %v321
  %756 = vmatpush.msra.mxu0 %v317
  %757 = vmatpush.msra.mxu0 %v313
  %758 = vmatpush.msra.mxu0 %v309
  %759 = vmatpush.msra.mxu0 %v305
  %760 = vmatpush.msra.mxu0 %v301
  %761 = vmatpush.msra.mxu0 %v297
  %762 = vmatpush.msra.mxu0 %v293
  %763 = vmatpush.msra.mxu0 %v289
  %764 = vmatpush.msra.mxu0 %v285
  %765 = vmatpush.msra.mxu0 %v281
  %766 = vmatpush.msra.mxu0 %v277
  %767 = vmatmul.f32.gmra.mxu0 %v721
  %v768 = vpop.f32.mrf.mxu0
  %v769 = vadd.f32 0.0, %v768
  %770 = vdwg.mxu0
  %771 = vmatpush.msra.mxu0 %v338
  %772 = vmatpush.msra.mxu0 %v334
  %773 = vmatpush.msra.mxu0 %v330
  %774 = vmatpush.msra.mxu0 %v326
  %775 = vmatpush.msra.mxu0 %v322
  %776 = vmatpush.msra.mxu0 %v318
  %777 = vmatpush.msra.mxu0 %v314
  %778 = vmatpush.msra.mxu0 %v310
  %779 = vmatpush.msra.mxu0 %v306
  %780 = vmatpush.msra.mxu0 %v302
  %781 = vmatpush.msra.mxu0 %v298
  %782 = vmatpush.msra.mxu0 %v294
  %783 = vmatpush.msra.mxu0 %v290
  %784 = vmatpush.msra.mxu0 %v286
  %785 = vmatpush.msra.mxu0 %v282
  %786 = vmatpush.msra.mxu0 %v278
  %787 = vmatmul.f32.gmra.mxu0 %v721
  %v788 = vpop.f32.mrf.mxu0
  %v789 = vadd.f32 0.0, %v788
  %790 = vdwg.mxu0
  %791 = vmatpush.msra.mxu0 %v339
  %792 = vmatpush.msra.mxu0 %v335
  %793 = vmatpush.msra.mxu0 %v331
  %794 = vmatpush.msra.mxu0 %v327
  %795 = vmatpush.msra.mxu0 %v323
  %796 = vmatpush.msra.mxu0 %v319
  %797 = vmatpush.msra.mxu0 %v315
  %798 = vmatpush.msra.mxu0 %v311
  %799 = vmatpush.msra.mxu0 %v307
  %800 = vmatpush.msra.mxu0 %v303
  %801 = vmatpush.msra.mxu0 %v299
  %802 = vmatpush.msra.mxu0 %v295
  %803 = vmatpush.msra.mxu0 %v291
  %804 = vmatpush.msra.mxu0 %v287
  %805 = vmatpush.msra.mxu0 %v283
  %806 = vmatpush.msra.mxu0 %v279
  %807 = vmatmul.f32.gmra.mxu0 %v721
  %v808 = vpop.f32.mrf.mxu0
  %v809 = vadd.f32 0.0, %v808
  %810 = vdwg.mxu0
  %v811 = vadd.f32 %v727, %v749
  %v812 = vadd.f32 %v728, %v769
  %v813 = vadd.f32 %v729, %v789
  %v814 = vadd.f32 %v730, %v809
  %v815 = vmul.f32 %v811, 0.5
  %v816 = vmul.f32 %v812, 0.5
  %v817 = vmul.f32 %v813, 0.5
  %v818 = vmul.f32 %v814, 0.5
  %v819 = vsel %vm353, %v811, %v815
  %v820 = vsel %vm354, %v812, %v816
  %v821 = vsel %vm355, %v813, %v817
  %v822 = vsel %vm356, %v814, %v818
  %v823 = vtanh.pop %v819
  %v824 = vtanh.pop %v820
  %v825 = vtanh.pop %v821
  %v826 = vtanh.pop %v822
  %v827 = vmul.f32 %v823, 0.5
  %v828 = vmul.f32 %v824, 0.5
  %v829 = vmul.f32 %v825, 0.5
  %v830 = vmul.f32 %v826, 0.5
  %v831 = vadd.f32 %v827, 0.5
  %v832 = vadd.f32 %v828, 0.5
  %v833 = vadd.f32 %v829, 0.5
  %v834 = vadd.f32 %v830, 0.5
  %v835 = vsel %vm353, %v823, %v831
  %v836 = vsel %vm354, %v824, %v832
  %v837 = vsel %vm355, %v825, %v833
  %v838 = vsel %vm356, %v826, %v834
  %v839 = vmul.f32 %v836, %v719
  %v840 = vmul.f32 %v835, %v837
  %v841 = vadd.f32 %v839, %v840
  %v842 = vtanh.pop %v841
  %v843 = vmul.f32 %v838, %v842
  %s844 = scalar_lea.vmem [#allocation5], 24
  %845 = vst [vmem:[%s844] sm:$0xff] %v843
  %s846 = smul.u32 4, 4
  %s847 = smul.addr %s846, 8
  %s848 = scalar_lea.vmem [#allocation2], %s847
  %v849 = vld [vmem:[%s848] sm:$0xff]
  %v850 = vld [vmem:[%s848 + $0x8] sm:$0xff]
  %v851 = vld [vmem:[%s848 + $0x10] sm:$0xff]
  %v852 = vld [vmem:[%s848 + $0x18] sm:$0xff]
  %853 = vmatpush.msra.mxu0 %v336
  %854 = vmatpush.msra.mxu0 %v332
  %855 = vmatpush.msra.mxu0 %v328
  %856 = vmatpush.msra.mxu0 %v324
  %857 = vmatpush.msra.mxu0 %v320
  %858 = vmatpush.msra.mxu0 %v316
  %859 = vmatpush.msra.mxu0 %v312
  %860 = vmatpush.msra.mxu0 %v308
  %861 = vmatpush.msra.mxu0 %v304
  %862 = vmatpush.msra.mxu0 %v300
  %863 = vmatpush.msra.mxu0 %v296
  %864 = vmatpush.msra.mxu0 %v292
  %865 = vmatpush.msra.mxu0 %v288
  %866 = vmatpush.msra.mxu0 %v284
  %867 = vmatpush.msra.mxu0 %v280
  %868 = vmatpush.msra.mxu0 %v276
  %869 = vmatmul.f32.gmra.mxu0 %v843
  %v870 = vpop.f32.mrf.mxu0
  %v871 = vadd.f32 0.0, %v870
  %872 = vdwg.mxu0
  %873 = vmatpush.msra.mxu0 %v337
  %874 = vmatpush.msra.mxu0 %v333
  %875 = vmatpush.msra.mxu0 %v329
  %876 = vmatpush.msra.mxu0 %v325
  %877 = vmatpush.msra.mxu0 %v321
  %878 = vmatpush.msra.mxu0 %v317
  %879 = vmatpush.msra.mxu0 %v313
  %880 = vmatpush.msra.mxu0 %v309
  %881 = vmatpush.msra.mxu0 %v305
  %882 = vmatpush.msra.mxu0 %v301
  %883 = vmatpush.msra.mxu0 %v297
  %884 = vmatpush.msra.mxu0 %v293
  %885 = vmatpush.msra.mxu0 %v289
  %886 = vmatpush.msra.mxu0 %v285
  %887 = vmatpush.msra.mxu0 %v281
  %888 = vmatpush.msra.mxu0 %v277
  %889 = vmatmul.f32.gmra.mxu0 %v843
  %v890 = vpop.f32.mrf.mxu0
  %v891 = vadd.f32 0.0, %v890
  %892 = vdwg.mxu0
  %893 = vmatpush.msra.mxu0 %v338
  %894 = vmatpush.msra.mxu0 %v334
  %895 = vmatpush.msra.mxu0 %v330
  %896 = vmatpush.msra.mxu0 %v326
  %897 = vmatpush.msra.mxu0 %v322
  %898 = vmatpush.msra.mxu0 %v318
  %899 = vmatpush.msra.mxu0 %v314
  %900 = vmatpush.msra.mxu0 %v310
  %901 = vmatpush.msra.mxu0 %v306
  %902 = vmatpush.msra.mxu0 %v302
  %903 = vmatpush.msra.mxu0 %v298
  %904 = vmatpush.msra.mxu0 %v294
  %905 = vmatpush.msra.mxu0 %v290
  %906 = vmatpush.msra.mxu0 %v286
  %907 = vmatpush.msra.mxu0 %v282
  %908 = vmatpush.msra.mxu0 %v278
  %909 = vmatmul.f32.gmra.mxu0 %v843
  %v910 = vpop.f32.mrf.mxu0
  %v911 = vadd.f32 0.0, %v910
  %912 = vdwg.mxu0
  %913 = vmatpush.msra.mxu0 %v339
  %914 = vmatpush.msra.mxu0 %v335
  %915 = vmatpush.msra.mxu0 %v331
  %916 = vmatpush.msra.mxu0 %v327
  %917 = vmatpush.msra.mxu0 %v323
  %918 = vmatpush.msra.mxu0 %v319
  %919 = vmatpush.msra.mxu0 %v315
  %920 = vmatpush.msra.mxu0 %v311
  %921 = vmatpush.msra.mxu0 %v307
  %922 = vmatpush.msra.mxu0 %v303
  %923 = vmatpush.msra.mxu0 %v299
  %924 = vmatpush.msra.mxu0 %v295
  %925 = vmatpush.msra.mxu0 %v291
  %926 = vmatpush.msra.mxu0 %v287
  %927 = vmatpush.msra.mxu0 %v283
  %928 = vmatpush.msra.mxu0 %v279
  %929 = vmatmul.f32.gmra.mxu0 %v843
  %v930 = vpop.f32.mrf.mxu0
  %v931 = vadd.f32 0.0, %v930
  %932 = vdwg.mxu0
  %v933 = vadd.f32 %v849, %v871
  %v934 = vadd.f32 %v850, %v891
  %v935 = vadd.f32 %v851, %v911
  %v936 = vadd.f32 %v852, %v931
  %v937 = vmul.f32 %v933, 0.5
  %v938 = vmul.f32 %v934, 0.5
  %v939 = vmul.f32 %v935, 0.5
  %v940 = vmul.f32 %v936, 0.5
  %v941 = vsel %vm353, %v933, %v937
  %v942 = vsel %vm354, %v934, %v938
  %v943 = vsel %vm355, %v935, %v939
  %v944 = vsel %vm356, %v936, %v940
  %v945 = vtanh.pop %v941
  %v946 = vtanh.pop %v942
  %v947 = vtanh.pop %v943
  %v948 = vtanh.pop %v944
  %v949 = vmul.f32 %v945, 0.5
  %v950 = vmul.f32 %v946, 0.5
  %v951 = vmul.f32 %v947, 0.5
  %v952 = vmul.f32 %v948, 0.5
  %v953 = vadd.f32 %v949, 0.5
  %v954 = vadd.f32 %v950, 0.5
  %v955 = vadd.f32 %v951, 0.5
  %v956 = vadd.f32 %v952, 0.5
  %v957 = vsel %vm353, %v945, %v953
  %v958 = vsel %vm354, %v946, %v954
  %v959 = vsel %vm355, %v947, %v955
  %v960 = vsel %vm356, %v948, %v956
  %v961 = vmul.f32 %v958, %v841
  %v962 = vmul.f32 %v957, %v959
  %v963 = vadd.f32 %v961, %v962
  %v964 = vtanh.pop %v963
  %v965 = vmul.f32 %v960, %v964
  %s966 = scalar_lea.vmem [#allocation5], 32
  %967 = vst [vmem:[%s966] sm:$0xff] %v965
  %s968 = smul.u32 5, 4
  %s969 = smul.addr %s968, 8
  %s970 = scalar_lea.vmem [#allocation2], %s969
  %v971 = vld [vmem:[%s970] sm:$0xff]
  %v972 = vld [vmem:[%s970 + $0x8] sm:$0xff]
  %v973 = vld [vmem:[%s970 + $0x10] sm:$0xff]
  %v974 = vld [vmem:[%s970 + $0x18] sm:$0xff]
  %975 = vmatpush.msra.mxu0 %v336
  %976 = vmatpush.msra.mxu0 %v332
  %977 = vmatpush.msra.mxu0 %v328
  %978 = vmatpush.msra.mxu0 %v324
  %979 = vmatpush.msra.mxu0 %v320
  %980 = vmatpush.msra.mxu0 %v316
  %981 = vmatpush.msra.mxu0 %v312
  %982 = vmatpush.msra.mxu0 %v308
  %983 = vmatpush.msra.mxu0 %v304
  %984 = vmatpush.msra.mxu0 %v300
  %985 = vmatpush.msra.mxu0 %v296
  %986 = vmatpush.msra.mxu0 %v292
  %987 = vmatpush.msra.mxu0 %v288
  %988 = vmatpush.msra.mxu0 %v284
  %989 = vmatpush.msra.mxu0 %v280
  %990 = vmatpush.msra.mxu0 %v276
  %991 = vmatmul.f32.gmra.mxu0 %v965
  %v992 = vpop.f32.mrf.mxu0
  %v993 = vadd.f32 0.0, %v992
  %994 = vdwg.mxu0
  %995 = vmatpush.msra.mxu0 %v337
  %996 = vmatpush.msra.mxu0 %v333
  %997 = vmatpush.msra.mxu0 %v329
  %998 = vmatpush.msra.mxu0 %v325
  %999 = vmatpush.msra.mxu0 %v321
  %1000 = vmatpush.msra.mxu0 %v317
  %1001 = vmatpush.msra.mxu0 %v313
  %1002 = vmatpush.msra.mxu0 %v309
  %1003 = vmatpush.msra.mxu0 %v305
  %1004 = vmatpush.msra.mxu0 %v301
  %1005 = vmatpush.msra.mxu0 %v297
  %1006 = vmatpush.msra.mxu0 %v293
  %1007 = vmatpush.msra.mxu0 %v289
  %1008 = vmatpush.msra.mxu0 %v285
  %1009 = vmatpush.msra.mxu0 %v281
  %1010 = vmatpush.msra.mxu0 %v277
  %1011 = vmatmul.f32.gmra.mxu0 %v965
  %v1012 = vpop.f32.mrf.mxu0
  %v1013 = vadd.f32 0.0, %v1012
  %1014 = vdwg.mxu0
  %1015 = vmatpush.msra.mxu0 %v338
  %1016 = vmatpush.msra.mxu0 %v334
  %1017 = vmatpush.msra.mxu0 %v330
  %1018 = vmatpush.msra.mxu0 %v326
  %1019 = vmatpush.msra.mxu0 %v322
  %1020 = vmatpush.msra.mxu0 %v318
  %1021 = vmatpush.msra.mxu0 %v314
  %1022 = vmatpush.msra.mxu0 %v310
  %1023 = vmatpush.msra.mxu0 %v306
  %1024 = vmatpush.msra.mxu0 %v302
  %1025 = vmatpush.msra.mxu0 %v298
  %1026 = vmatpush.msra.mxu0 %v294
  %1027 = vmatpush.msra.mxu0 %v290
  %1028 = vmatpush.msra.mxu0 %v286
  %1029 = vmatpush.msra.mxu0 %v282
  %1030 = vmatpush.msra.mxu0 %v278
  %1031 = vmatmul.f32.gmra.mxu0 %v965
  %v1032 = vpop.f32.mrf.mxu0
  %v1033 = vadd.f32 0.0, %v1032
  %1034 = vdwg.mxu0
  %1035 = vmatpush.msra.mxu0 %v339
  %1036 = vmatpush.msra.mxu0 %v335
  %1037 = vmatpush.msra.mxu0 %v331
  %1038 = vmatpush.msra.mxu0 %v327
  %1039 = vmatpush.msra.mxu0 %v323
  %1040 = vmatpush.msra.mxu0 %v319
  %1041 = vmatpush.msra.mxu0 %v315
  %1042 = vmatpush.msra.mxu0 %v311
  %1043 = vmatpush.msra.mxu0 %v307
  %1044 = vmatpush.msra.mxu0 %v303
  %1045 = vmatpush.msra.mxu0 %v299
  %1046 = vmatpush.msra.mxu0 %v295
  %1047 = vmatpush.msra.mxu0 %v291
  %1048 = vmatpush.msra.mxu0 %v287
  %1049 = vmatpush.msra.mxu0 %v283
  %1050 = vmatpush.msra.mxu0 %v279
  %1051 = vmatmul.f32.gmra.mxu0 %v965
  %v1052 = vpop.f32.mrf.mxu0
  %v1053 = vadd.f32 0.0, %v1052
  %1054 = vdwg.mxu0
  %v1055 = vadd.f32 %v971, %v993
  %v1056 = vadd.f32 %v972, %v1013
  %v1057 = vadd.f32 %v973, %v1033
  %v1058 = vadd.f32 %v974, %v1053
  %v1059 = vmul.f32 %v1055, 0.5
  %v1060 = vmul.f32 %v1056, 0.5
  %v1061 = vmul.f32 %v1057, 0.5
  %v1062 = vmul.f32 %v1058, 0.5
  %v1063 = vsel %vm353, %v1055, %v1059
  %v1064 = vsel %vm354, %v1056, %v1060
  %v1065 = vsel %vm355, %v1057, %v1061
  %v1066 = vsel %vm356, %v1058, %v1062
  %v1067 = vtanh.pop %v1063
  %v1068 = vtanh.pop %v1064
  %v1069 = vtanh.pop %v1065
  %v1070 = vtanh.pop %v1066
  %v1071 = vmul.f32 %v1067, 0.5
  %v1072 = vmul.f32 %v1068, 0.5
  %v1073 = vmul.f32 %v1069, 0.5
  %v1074 = vmul.f32 %v1070, 0.5
  %v1075 = vadd.f32 %v1071, 0.5
  %v1076 = vadd.f32 %v1072, 0.5
  %v1077 = vadd.f32 %v1073, 0.5
  %v1078 = vadd.f32 %v1074, 0.5
  %v1079 = vsel %vm353, %v1067, %v1075
  %v1080 = vsel %vm354, %v1068, %v1076
  %v1081 = vsel %vm355, %v1069, %v1077
  %v1082 = vsel %vm356, %v1070, %v1078
  %v1083 = vmul.f32 %v1080, %v963
  %v1084 = vmul.f32 %v1079, %v1081
  %v1085 = vadd.f32 %v1083, %v1084
  %v1086 = vtanh.pop %v1085
  %v1087 = vmul.f32 %v1082, %v1086
  %s1088 = scalar_lea.vmem [#allocation5], 40
  %1089 = vst [vmem:[%s1088] sm:$0xff] %v1087
  %s1090 = smul.u32 6, 4
  %s1091 = smul.addr %s1090, 8
  %s1092 = scalar_lea.vmem [#allocation2], %s1091
  %v1093 = vld [vmem:[%s1092] sm:$0xff]
  %v1094 = vld [vmem:[%s1092 + $0x8] sm:$0xff]
  %v1095 = vld [vmem:[%s1092 + $0x10] sm:$0xff]
  %v1096 = vld [vmem:[%s1092 + $0x18] sm:$0xff]
  %1097 = vmatpush.msra.mxu0 %v336
  %1098 = vmatpush.msra.mxu0 %v332
  %1099 = vmatpush.msra.mxu0 %v328
  %1100 = vmatpush.msra.mxu0 %v324
  %1101 = vmatpush.msra.mxu0 %v320
  %1102 = vmatpush.msra.mxu0 %v316
  %1103 = vmatpush.msra.mxu0 %v312
  %1104 = vmatpush.msra.mxu0 %v308
  %1105 = vmatpush.msra.mxu0 %v304
  %1106 = vmatpush.msra.mxu0 %v300
  %1107 = vmatpush.msra.mxu0 %v296
  %1108 = vmatpush.msra.mxu0 %v292
  %1109 = vmatpush.msra.mxu0 %v288
  %1110 = vmatpush.msra.mxu0 %v284
  %1111 = vmatpush.msra.mxu0 %v280
  %1112 = vmatpush.msra.mxu0 %v276
  %1113 = vmatmul.f32.gmra.mxu0 %v1087
  %v1114 = vpop.f32.mrf.mxu0
  %v1115 = vadd.f32 0.0, %v1114
  %1116 = vdwg.mxu0
  %1117 = vmatpush.msra.mxu0 %v337
  %1118 = vmatpush.msra.mxu0 %v333
  %1119 = vmatpush.msra.mxu0 %v329
  %1120 = vmatpush.msra.mxu0 %v325
  %1121 = vmatpush.msra.mxu0 %v321
  %1122 = vmatpush.msra.mxu0 %v317
  %1123 = vmatpush.msra.mxu0 %v313
  %1124 = vmatpush.msra.mxu0 %v309
  %1125 = vmatpush.msra.mxu0 %v305
  %1126 = vmatpush.msra.mxu0 %v301
  %1127 = vmatpush.msra.mxu0 %v297
  %1128 = vmatpush.msra.mxu0 %v293
  %1129 = vmatpush.msra.mxu0 %v289
  %1130 = vmatpush.msra.mxu0 %v285
  %1131 = vmatpush.msra.mxu0 %v281
  %1132 = vmatpush.msra.mxu0 %v277
  %1133 = vmatmul.f32.gmra.mxu0 %v1087
  %v1134 = vpop.f32.mrf.mxu0
  %v1135 = vadd.f32 0.0, %v1134
  %1136 = vdwg.mxu0
  %1137 = vmatpush.msra.mxu0 %v338
  %1138 = vmatpush.msra.mxu0 %v334
  %1139 = vmatpush.msra.mxu0 %v330
  %1140 = vmatpush.msra.mxu0 %v326
  %1141 = vmatpush.msra.mxu0 %v322
  %1142 = vmatpush.msra.mxu0 %v318
  %1143 = vmatpush.msra.mxu0 %v314
  %1144 = vmatpush.msra.mxu0 %v310
  %1145 = vmatpush.msra.mxu0 %v306
  %1146 = vmatpush.msra.mxu0 %v302
  %1147 = vmatpush.msra.mxu0 %v298
  %1148 = vmatpush.msra.mxu0 %v294
  %1149 = vmatpush.msra.mxu0 %v290
  %1150 = vmatpush.msra.mxu0 %v286
  %1151 = vmatpush.msra.mxu0 %v282
  %1152 = vmatpush.msra.mxu0 %v278
  %1153 = vmatmul.f32.gmra.mxu0 %v1087
  %v1154 = vpop.f32.mrf.mxu0
  %v1155 = vadd.f32 0.0, %v1154
  %1156 = vdwg.mxu0
  %1157 = vmatpush.msra.mxu0 %v339
  %1158 = vmatpush.msra.mxu0 %v335
  %1159 = vmatpush.msra.mxu0 %v331
  %1160 = vmatpush.msra.mxu0 %v327
  %1161 = vmatpush.msra.mxu0 %v323
  %1162 = vmatpush.msra.mxu0 %v319
  %1163 = vmatpush.msra.mxu0 %v315
  %1164 = vmatpush.msra.mxu0 %v311
  %1165 = vmatpush.msra.mxu0 %v307
  %1166 = vmatpush.msra.mxu0 %v303
  %1167 = vmatpush.msra.mxu0 %v299
  %1168 = vmatpush.msra.mxu0 %v295
  %1169 = vmatpush.msra.mxu0 %v291
  %1170 = vmatpush.msra.mxu0 %v287
  %1171 = vmatpush.msra.mxu0 %v283
  %1172 = vmatpush.msra.mxu0 %v279
  %1173 = vmatmul.f32.gmra.mxu0 %v1087
  %v1174 = vpop.f32.mrf.mxu0
  %v1175 = vadd.f32 0.0, %v1174
  %1176 = vdwg.mxu0
  %v1177 = vadd.f32 %v1093, %v1115
  %v1178 = vadd.f32 %v1094, %v1135
  %v1179 = vadd.f32 %v1095, %v1155
  %v1180 = vadd.f32 %v1096, %v1175
  %v1181 = vmul.f32 %v1177, 0.5
  %v1182 = vmul.f32 %v1178, 0.5
  %v1183 = vmul.f32 %v1179, 0.5
  %v1184 = vmul.f32 %v1180, 0.5
  %v1185 = vsel %vm353, %v1177, %v1181
  %v1186 = vsel %vm354, %v1178, %v1182
  %v1187 = vsel %vm355, %v1179, %v1183
  %v1188 = vsel %vm356, %v1180, %v1184
  %v1189 = vtanh.pop %v1185
  %v1190 = vtanh.pop %v1186
  %v1191 = vtanh.pop %v1187
  %v1192 = vtanh.pop %v1188
  %v1193 = vmul.f32 %v1189, 0.5
  %v1194 = vmul.f32 %v1190, 0.5
  %v1195 = vmul.f32 %v1191, 0.5
  %v1196 = vmul.f32 %v1192, 0.5
  %v1197 = vadd.f32 %v1193, 0.5
  %v1198 = vadd.f32 %v1194, 0.5
  %v1199 = vadd.f32 %v1195, 0.5
  %v1200 = vadd.f32 %v1196, 0.5
  %v1201 = vsel %vm353, %v1189, %v1197
  %v1202 = vsel %vm354, %v1190, %v1198
  %v1203 = vsel %vm355, %v1191, %v1199
  %v1204 = vsel %vm356, %v1192, %v1200
  %v1205 = vmul.f32 %v1202, %v1085
  %v1206 = vmul.f32 %v1201, %v1203
  %v1207 = vadd.f32 %v1205, %v1206
  %v1208 = vtanh.pop %v1207
  %v1209 = vmul.f32 %v1204, %v1208
  %s1210 = scalar_lea.vmem [#allocation5], 48
  %1211 = vst [vmem:[%s1210] sm:$0xff] %v1209
  %s1212 = smul.u32 7, 4
  %s1213 = smul.addr %s1212, 8
  %s1214 = scalar_lea.vmem [#allocation2], %s1213
  %v1215 = vld [vmem:[%s1214] sm:$0xff]
  %v1216 = vld [vmem:[%s1214 + $0x8] sm:$0xff]
  %v1217 = vld [vmem:[%s1214 + $0x10] sm:$0xff]
  %v1218 = vld [vmem:[%s1214 + $0x18] sm:$0xff]
  %1219 = vmatpush.msra.mxu0 %v336
  %1220 = vmatpush.msra.mxu0 %v332
  %1221 = vmatpush.msra.mxu0 %v328
  %1222 = vmatpush.msra.mxu0 %v324
  %1223 = vmatpush.msra.mxu0 %v320
  %1224 = vmatpush.msra.mxu0 %v316
  %1225 = vmatpush.msra.mxu0 %v312
  %1226 = vmatpush.msra.mxu0 %v308
  %1227 = vmatpush.msra.mxu0 %v304
  %1228 = vmatpush.msra.mxu0 %v300
  %1229 = vmatpush.msra.mxu0 %v296
  %1230 = vmatpush.msra.mxu0 %v292
  %1231 = vmatpush.msra.mxu0 %v288
  %1232 = vmatpush.msra.mxu0 %v284
  %1233 = vmatpush.msra.mxu0 %v280
  %1234 = vmatpush.msra.mxu0 %v276
  %1235 = vmatmul.f32.gmra.mxu0 %v1209
  %v1236 = vpop.f32.mrf.mxu0
  %v1237 = vadd.f32 0.0, %v1236
  %1238 = vdwg.mxu0
  %1239 = vmatpush.msra.mxu0 %v337
  %1240 = vmatpush.msra.mxu0 %v333
  %1241 = vmatpush.msra.mxu0 %v329
  %1242 = vmatpush.msra.mxu0 %v325
  %1243 = vmatpush.msra.mxu0 %v321
  %1244 = vmatpush.msra.mxu0 %v317
  %1245 = vmatpush.msra.mxu0 %v313
  %1246 = vmatpush.msra.mxu0 %v309
  %1247 = vmatpush.msra.mxu0 %v305
  %1248 = vmatpush.msra.mxu0 %v301
  %1249 = vmatpush.msra.mxu0 %v297
  %1250 = vmatpush.msra.mxu0 %v293
  %1251 = vmatpush.msra.mxu0 %v289
  %1252 = vmatpush.msra.mxu0 %v285
  %1253 = vmatpush.msra.mxu0 %v281
  %1254 = vmatpush.msra.mxu0 %v277
  %1255 = vmatmul.f32.gmra.mxu0 %v1209
  %v1256 = vpop.f32.mrf.mxu0
  %v1257 = vadd.f32 0.0, %v1256
  %1258 = vdwg.mxu0
  %1259 = vmatpush.msra.mxu0 %v338
  %1260 = vmatpush.msra.mxu0 %v334
  %1261 = vmatpush.msra.mxu0 %v330
  %1262 = vmatpush.msra.mxu0 %v326
  %1263 = vmatpush.msra.mxu0 %v322
  %1264 = vmatpush.msra.mxu0 %v318
  %1265 = vmatpush.msra.mxu0 %v314
  %1266 = vmatpush.msra.mxu0 %v310
  %1267 = vmatpush.msra.mxu0 %v306
  %1268 = vmatpush.msra.mxu0 %v302
  %1269 = vmatpush.msra.mxu0 %v298
  %1270 = vmatpush.msra.mxu0 %v294
  %1271 = vmatpush.msra.mxu0 %v290
  %1272 = vmatpush.msra.mxu0 %v286
  %1273 = vmatpush.msra.mxu0 %v282
  %1274 = vmatpush.msra.mxu0 %v278
  %1275 = vmatmul.f32.gmra.mxu0 %v1209
  %v1276 = vpop.f32.mrf.mxu0
  %v1277 = vadd.f32 0.0, %v1276
  %1278 = vdwg.mxu0
  %1279 = vmatpush.msra.mxu0 %v339
  %1280 = vmatpush.msra.mxu0 %v335
  %1281 = vmatpush.msra.mxu0 %v331
  %1282 = vmatpush.msra.mxu0 %v327
  %1283 = vmatpush.msra.mxu0 %v323
  %1284 = vmatpush.msra.mxu0 %v319
  %1285 = vmatpush.msra.mxu0 %v315
  %1286 = vmatpush.msra.mxu0 %v311
  %1287 = vmatpush.msra.mxu0 %v307
  %1288 = vmatpush.msra.mxu0 %v303
  %1289 = vmatpush.msra.mxu0 %v299
  %1290 = vmatpush.msra.mxu0 %v295
  %1291 = vmatpush.msra.mxu0 %v291
  %1292 = vmatpush.msra.mxu0 %v287
  %1293 = vmatpush.msra.mxu0 %v283
  %1294 = vmatpush.msra.mxu0 %v279
  %1295 = vmatmul.f32.gmra.mxu0 %v1209
  %v1296 = vpop.f32.mrf.mxu0
  %v1297 = vadd.f32 0.0, %v1296
  %1298 = vdwg.mxu0
  %v1299 = vadd.f32 %v1215, %v1237
  %v1300 = vadd.f32 %v1216, %v1257
  %v1301 = vadd.f32 %v1217, %v1277
  %v1302 = vadd.f32 %v1218, %v1297
  %v1303 = vmul.f32 %v1299, 0.5
  %v1304 = vmul.f32 %v1300, 0.5
  %v1305 = vmul.f32 %v1301, 0.5
  %v1306 = vmul.f32 %v1302, 0.5
  %v1307 = vsel %vm353, %v1299, %v1303
  %v1308 = vsel %vm354, %v1300, %v1304
  %v1309 = vsel %vm355, %v1301, %v1305
  %v1310 = vsel %vm356, %v1302, %v1306
  %v1311 = vtanh.pop %v1307
  %v1312 = vtanh.pop %v1308
  %v1313 = vtanh.pop %v1309
  %v1314 = vtanh.pop %v1310
  %v1315 = vmul.f32 %v1311, 0.5
  %v1316 = vmul.f32 %v1312, 0.5
  %v1317 = vmul.f32 %v1313, 0.5
  %v1318 = vmul.f32 %v1314, 0.5
  %v1319 = vadd.f32 %v1315, 0.5
  %v1320 = vadd.f32 %v1316, 0.5
  %v1321 = vadd.f32 %v1317, 0.5
  %v1322 = vadd.f32 %v1318, 0.5
  %v1323 = vsel %vm353, %v1311, %v1319
  %v1324 = vsel %vm354, %v1312, %v1320
  %v1325 = vsel %vm355, %v1313, %v1321
  %v1326 = vsel %vm356, %v1314, %v1322
  %v1327 = vmul.f32 %v1324, %v1207
  %v1328 = vmul.f32 %v1323, %v1325
  %v1329 = vadd.f32 %v1327, %v1328
  %v1330 = vtanh.pop %v1329
  %v1331 = vmul.f32 %v1326, %v1330
  %s1332 = scalar_lea.vmem [#allocation5], 56
  %1333 = vst [vmem:[%s1332] sm:$0xff] %v1331
  %1334 = vst [vmem:[#allocation3] sm:$0xff] %v1331
  %1335 = vst [vmem:[#allocation4] sm:$0xff] %v1329
  %v1336 = vld [vmem:[#allocation5] sm:$0xff]
  %v1337 = vld [vmem:[#allocation5 + $0x8] sm:$0xff]
  %v1338 = vld [vmem:[#allocation5 + $0x10] sm:$0xff]
  %v1339 = vld [vmem:[#allocation5 + $0x18] sm:$0xff]
  %v1340 = vld [vmem:[#allocation5 + $0x20] sm:$0xff]
  %v1341 = vld [vmem:[#allocation5 + $0x28] sm:$0xff]
  %v1342 = vld [vmem:[#allocation5 + $0x30] sm:$0xff]
  %v1343 = vld [vmem:[#allocation5 + $0x38] sm:$0xff]
  %v1344 = vld [vmem:[%s4] sm:$0xff]
  %v1345 = vld [vmem:[%s4 + $0x8] sm:$0xff]
  %v1346 = vld [vmem:[%s4 + $0x10] sm:$0xff]
  %v1347 = vld [vmem:[%s4 + $0x18] sm:$0xff]
  %v1348 = vld [vmem:[%s4 + $0x20] sm:$0xff]
  %v1349 = vld [vmem:[%s4 + $0x28] sm:$0xff]
  %v1350 = vld [vmem:[%s4 + $0x30] sm:$0xff]
  %v1351 = vld [vmem:[%s4 + $0x38] sm:$0xff]
  %v1352 = vld [vmem:[%s4 + $0x40] sm:$0xff]
  %v1353 = vld [vmem:[%s4 + $0x48] sm:$0xff]
  %v1354 = vld [vmem:[%s4 + $0x50] sm:$0xff]
  %v1355 = vld [vmem:[%s4 + $0x58] sm:$0xff]
  %v1356 = vld [vmem:[%s4 + $0x60] sm:$0xff]
  %v1357 = vld [vmem:[%s4 + $0x68] sm:$0xff]
  %v1358 = vld [vmem:[%s4 + $0x70] sm:$0xff]
  %v1359 = vld [vmem:[%s4 + $0x78] sm:$0xff]
  %v1360 = vld [vmem:[%s5] sm:$0x1]
  %v1362 = vperm.slane %v1360, 0
  %1364 = vmatpush.msra.mxu0 %v1359
  %1365 = vmatpush.msra.mxu0 %v1358
  %1366 = vmatpush.msra.mxu0 %v1357
  %1367 = vmatpush.msra.mxu0 %v1356
  %1368 = vmatpush.msra.mxu0 %v1355
  %1369 = vmatpush.msra.mxu0 %v1354
  %1370 = vmatpush.msra.mxu0 %v1353
  %1371 = vmatpush.msra.mxu0 %v1352
  %1372 = vmatpush.msra.mxu0 %v1351
  %1373 = vmatpush.msra.mxu0 %v1350
  %1374 = vmatpush.msra.mxu0 %v1349
  %1375 = vmatpush.msra.mxu0 %v1348
  %1376 = vmatpush.msra.mxu0 %v1347
  %1377 = vmatpush.msra.mxu0 %v1346
  %1378 = vmatpush.msra.mxu0 %v1345
  %1379 = vmatpush.msra.mxu0 %v1344
  %1380 = vmatmul.f32.gmra.mxu0 %v1336
  %v1381 = vpop.f32.mrf.mxu0
  %v1382 = vadd.f32 %v1362, %v1381
  %1383 = vmatmul.f32.gmra.mxu0 %v1337
  %v1384 = vpop.f32.mrf.mxu0
  %v1385 = vadd.f32 %v1362, %v1384
  %1386 = vmatmul.f32.gmra.mxu0 %v1338
  %v1387 = vpop.f32.mrf.mxu0
  %v1388 = vadd.f32 %v1362, %v1387
  %1389 = vmatmul.f32.gmra.mxu0 %v1339
  %v1390 = vpop.f32.mrf.mxu0
  %v1391 = vadd.f32 %v1362, %v1390
  %1392 = vmatmul.f32.gmra.mxu0 %v1340
  %v1393 = vpop.f32.mrf.mxu0
  %v1394 = vadd.f32 %v1362, %v1393
  %1395 = vmatmul.f32.gmra.mxu0 %v1341
  %v1396 = vpop.f32.mrf.mxu0
  %v1397 = vadd.f32 %v1362, %v1396
  %1398 = vmatmul.f32.gmra.mxu0 %v1342
  %v1399 = vpop.f32.mrf.mxu0
  %v1400 = vadd.f32 %v1362, %v1399
  %1401 = vmatmul.f32.gmra.mxu0 %v1343
  %v1402 = vpop.f32.mrf.mxu0
  %v1403 = vadd.f32 %v1362, %v1402
  %1404 = vdwg.mxu0
  %v1405 = vmax.f32 %v1382, 0.0
  %v1406 = vmax.f32 %v1385, 0.0
  %v1407 = vmax.f32 %v1388, 0.0
  %v1408 = vmax.f32 %v1391, 0.0
  %v1409 = vmax.f32 %v1394, 0.0
  %v1410 = vmax.f32 %v1397, 0.0
  %v1411 = vmax.f32 %v1400, 0.0
  %v1412 = vmax.f32 %v1403, 0.0
  %1413 = vst [vmem:[%s6] sm:$0xff] %v1405
  %1414 = vst [vmem:[%s6 + $0x8] sm:$0xff] %v1406
  %1415 = vst [vmem:[%s6 + $0x10] sm:$0xff] %v1407
  %1416 = vst [vmem:[%s6 + $0x18] sm:$0xff] %v1408
  %1417 = vst [vmem:[%s6 + $0x20] sm:$0xff] %v1409
  %1418 = vst [vmem:[%s6 + $0x28] sm:$0xff] %v1410
  %1419 = vst [vmem:[%s6 + $0x30] sm:$0xff] %v1411
  %1420 = vst [vmem:[%s6 + $0x38] sm:$0xff] %v1412
  // Predicated region
  $region30: #{xlstm_forward.3} parent=0 // pred_check
    _
  $region31: #{xlstm_forward.3} parent=0 // pred_check_branch
    %1422 = sbr.rel (0) target = $region33
  $region32: #{xlstm_forward.3} parent=0 // pred_region
    _
  $region33: #{xlstm_forward.3} parent=0 // pred_fallthru
    _
  // Predicated region
  $region34: #{xlstm_forward.3} parent=0 // pred_check
    _
  $region35: #{xlstm_forward.3} parent=0 // pred_check_branch
    %1424 = sbr.rel (0) target = $region37
  $region36: #{xlstm_forward.3} parent=0 // pred_region
    _
  $region37: #{xlstm_forward.3} parent=0 // pred_fallthru
    _

// kernel: xlstm_forward.4
$region0: #{xlstm_forward.4}
  #allocation0 [shape = 'u32[]', space=smem, size = 0x4, offset = 0x4, fixed_abs, tag = 'smem constant byte address 0x4 - core index']
  #allocation1 [shape = 'u32[72,128]{1,0:T(1,128)}', space=vmem, size = 0x9000, scoped, tag = 'internal scratch']
  #allocation2 [shape = 'f32[64,512]{1,0:T(8,128)}', space=vmem, size = 0x20000, scoped, tag = 'scratch operand']
  #allocation3 [shape = 'f32[8,128]{1,0:T(8,128)}', space=vmem, size = 0x1000, scoped, tag = 'scratch operand']
  #allocation4 [shape = 'f32[8,128]{1,0:T(8,128)}', space=vmem, size = 0x1000, scoped, tag = 'scratch operand']
  #allocation5 [shape = 'f32[64,128]{1,0:T(8,128)}', space=vmem, size = 0x8000, scoped, tag = 'scratch operand']
  %s0 = inlined_call_operand.vmem [shape: f32[1,64,128], index: 0, kind: input, shape index: {}]
  %s1 = inlined_call_operand.vmem [shape: f32[128,512], index: 1, kind: input, shape index: {}]
  %s2 = inlined_call_operand.vmem [shape: f32[128,512], index: 2, kind: input, shape index: {}]
  %s3 = inlined_call_operand.vmem [shape: f32[1,512], index: 3, kind: input, shape index: {}]
  %s4 = inlined_call_operand.vmem [shape: f32[128,128], index: 4, kind: input, shape index: {}]
  %s5 = inlined_call_operand.vmem [shape: f32[1,128], index: 5, kind: input, shape index: {}]
  %s6 = inlined_call_operand.vmem [shape: f32[1,64,128], index: 6, kind: output, shape index: {}]
  %s7 = sld [smem:[#allocation0]]
  $region38: #{xlstm_forward.4} parent=0
    _
  %s9 = ssub.s32 1, %s7
  %s10 = scalar_select 0, %s9, %s7
  // Predicated region
  $region2: #{xlstm_forward.4} parent=0 // pred_check
    _
  $region3: #{xlstm_forward.4} parent=0 // pred_check_branch
    %12 = sbr.rel (0) target = $region5
  $region4: #{xlstm_forward.4} parent=0 // pred_region
    _
  $region5: #{xlstm_forward.4} parent=0 // pred_fallthru
    _
  // Predicated region
  $region6: #{xlstm_forward.4} parent=0 // pred_check
    _
  $region7: #{xlstm_forward.4} parent=0 // pred_check_branch
    %14 = sbr.rel (0) target = $region9
  $region8: #{xlstm_forward.4} parent=0 // pred_region
    _
  $region9: #{xlstm_forward.4} parent=0 // pred_fallthru
    _
  // Predicated region
  $region10: #{xlstm_forward.4} parent=0 // pred_check
    _
  $region11: #{xlstm_forward.4} parent=0 // pred_check_branch
    %16 = sbr.rel (0) target = $region13
  $region12: #{xlstm_forward.4} parent=0 // pred_region
    _
  $region13: #{xlstm_forward.4} parent=0 // pred_fallthru
    _
  // Predicated region
  $region14: #{xlstm_forward.4} parent=0 // pred_check
    _
  $region15: #{xlstm_forward.4} parent=0 // pred_check_branch
    %18 = sbr.rel (0) target = $region17
  $region16: #{xlstm_forward.4} parent=0 // pred_region
    _
  $region17: #{xlstm_forward.4} parent=0 // pred_fallthru
    _
  // Predicated region
  $region18: #{xlstm_forward.4} parent=0 // pred_check
    _
  $region19: #{xlstm_forward.4} parent=0 // pred_check_branch
    %20 = sbr.rel (0) target = $region21
  $region20: #{xlstm_forward.4} parent=0 // pred_region
    _
  $region21: #{xlstm_forward.4} parent=0 // pred_fallthru
    _
  // Predicated region
  $region22: #{xlstm_forward.4} parent=0 // pred_check
    _
  $region23: #{xlstm_forward.4} parent=0 // pred_check_branch
    %22 = sbr.rel (0) target = $region25
  $region24: #{xlstm_forward.4} parent=0 // pred_region
    _
  $region25: #{xlstm_forward.4} parent=0 // pred_fallthru
    _
  %p23 = scmp.eq.s32.totalorder 0, 0
  // Predicated region
  $region26: #{xlstm_forward.4} parent=0 // pred_check
    %p24 = pneg %p23
  $region27: #{xlstm_forward.4} parent=0 // pred_check_branch
    %26 = sbr.rel (%p24) target = $region29
  $region28: #{xlstm_forward.4} parent=0 // pred_region
    %27 = vst [vmem:[#allocation3] sm:$0xff] 0.0
    %28 = vst [vmem:[#allocation4] sm:$0xff] 0.0
  $region29: #{xlstm_forward.4} parent=0 // pred_fallthru
    _
  %v29 = vld [vmem:[%s0] sm:$0xff]
  %v30 = vld [vmem:[%s0 + $0x8] sm:$0xff]
  %v31 = vld [vmem:[%s0 + $0x10] sm:$0xff]
  %v32 = vld [vmem:[%s0 + $0x18] sm:$0xff]
  %v33 = vld [vmem:[%s0 + $0x20] sm:$0xff]
  %v34 = vld [vmem:[%s0 + $0x28] sm:$0xff]
  %v35 = vld [vmem:[%s0 + $0x30] sm:$0xff]
  %v36 = vld [vmem:[%s0 + $0x38] sm:$0xff]
  %v37 = vld [vmem:[%s1] sm:$0xff]
  %v38 = vld [vmem:[%s1 + $0x8] sm:$0xff]
  %v39 = vld [vmem:[%s1 + $0x10] sm:$0xff]
  %v40 = vld [vmem:[%s1 + $0x18] sm:$0xff]
  %v41 = vld [vmem:[%s1 + $0x20] sm:$0xff]
  %v42 = vld [vmem:[%s1 + $0x28] sm:$0xff]
  %v43 = vld [vmem:[%s1 + $0x30] sm:$0xff]
  %v44 = vld [vmem:[%s1 + $0x38] sm:$0xff]
  %v45 = vld [vmem:[%s1 + $0x40] sm:$0xff]
  %v46 = vld [vmem:[%s1 + $0x48] sm:$0xff]
  %v47 = vld [vmem:[%s1 + $0x50] sm:$0xff]
  %v48 = vld [vmem:[%s1 + $0x58] sm:$0xff]
  %v49 = vld [vmem:[%s1 + $0x60] sm:$0xff]
  %v50 = vld [vmem:[%s1 + $0x68] sm:$0xff]
  %v51 = vld [vmem:[%s1 + $0x70] sm:$0xff]
  %v52 = vld [vmem:[%s1 + $0x78] sm:$0xff]
  %v53 = vld [vmem:[%s1 + $0x80] sm:$0xff]
  %v54 = vld [vmem:[%s1 + $0x88] sm:$0xff]
  %v55 = vld [vmem:[%s1 + $0x90] sm:$0xff]
  %v56 = vld [vmem:[%s1 + $0x98] sm:$0xff]
  %v57 = vld [vmem:[%s1 + $0xa0] sm:$0xff]
  %v58 = vld [vmem:[%s1 + $0xa8] sm:$0xff]
  %v59 = vld [vmem:[%s1 + $0xb0] sm:$0xff]
  %v60 = vld [vmem:[%s1 + $0xb8] sm:$0xff]
  %v61 = vld [vmem:[%s1 + $0xc0] sm:$0xff]
  %v62 = vld [vmem:[%s1 + $0xc8] sm:$0xff]
  %v63 = vld [vmem:[%s1 + $0xd0] sm:$0xff]
  %v64 = vld [vmem:[%s1 + $0xd8] sm:$0xff]
  %v65 = vld [vmem:[%s1 + $0xe0] sm:$0xff]
  %v66 = vld [vmem:[%s1 + $0xe8] sm:$0xff]
  %v67 = vld [vmem:[%s1 + $0xf0] sm:$0xff]
  %v68 = vld [vmem:[%s1 + $0xf8] sm:$0xff]
  %v69 = vld [vmem:[%s1 + $0x100] sm:$0xff]
  %v70 = vld [vmem:[%s1 + $0x108] sm:$0xff]
  %v71 = vld [vmem:[%s1 + $0x110] sm:$0xff]
  %v72 = vld [vmem:[%s1 + $0x118] sm:$0xff]
  %v73 = vld [vmem:[%s1 + $0x120] sm:$0xff]
  %v74 = vld [vmem:[%s1 + $0x128] sm:$0xff]
  %v75 = vld [vmem:[%s1 + $0x130] sm:$0xff]
  %v76 = vld [vmem:[%s1 + $0x138] sm:$0xff]
  %v77 = vld [vmem:[%s1 + $0x140] sm:$0xff]
  %v78 = vld [vmem:[%s1 + $0x148] sm:$0xff]
  %v79 = vld [vmem:[%s1 + $0x150] sm:$0xff]
  %v80 = vld [vmem:[%s1 + $0x158] sm:$0xff]
  %v81 = vld [vmem:[%s1 + $0x160] sm:$0xff]
  %v82 = vld [vmem:[%s1 + $0x168] sm:$0xff]
  %v83 = vld [vmem:[%s1 + $0x170] sm:$0xff]
  %v84 = vld [vmem:[%s1 + $0x178] sm:$0xff]
  %v85 = vld [vmem:[%s1 + $0x180] sm:$0xff]
  %v86 = vld [vmem:[%s1 + $0x188] sm:$0xff]
  %v87 = vld [vmem:[%s1 + $0x190] sm:$0xff]
  %v88 = vld [vmem:[%s1 + $0x198] sm:$0xff]
  %v89 = vld [vmem:[%s1 + $0x1a0] sm:$0xff]
  %v90 = vld [vmem:[%s1 + $0x1a8] sm:$0xff]
  %v91 = vld [vmem:[%s1 + $0x1b0] sm:$0xff]
  %v92 = vld [vmem:[%s1 + $0x1b8] sm:$0xff]
  %v93 = vld [vmem:[%s1 + $0x1c0] sm:$0xff]
  %v94 = vld [vmem:[%s1 + $0x1c8] sm:$0xff]
  %v95 = vld [vmem:[%s1 + $0x1d0] sm:$0xff]
  %v96 = vld [vmem:[%s1 + $0x1d8] sm:$0xff]
  %v97 = vld [vmem:[%s1 + $0x1e0] sm:$0xff]
  %v98 = vld [vmem:[%s1 + $0x1e8] sm:$0xff]
  %v99 = vld [vmem:[%s1 + $0x1f0] sm:$0xff]
  %v100 = vld [vmem:[%s1 + $0x1f8] sm:$0xff]
  %v101 = vld [vmem:[%s3] sm:$0xf]
  %v103 = vperm.slane %v101, 0
  %v104 = vperm.slane %v101, 1
  %v105 = vperm.slane %v101, 2
  %v106 = vperm.slane %v101, 3
  %111 = vmatpush.msra.mxu0 %v97
  %112 = vmatpush.msra.mxu0 %v93
  %113 = vmatpush.msra.mxu0 %v89
  %114 = vmatpush.msra.mxu0 %v85
  %115 = vmatpush.msra.mxu0 %v81
  %116 = vmatpush.msra.mxu0 %v77
  %117 = vmatpush.msra.mxu0 %v73
  %118 = vmatpush.msra.mxu0 %v69
  %119 = vmatpush.msra.mxu0 %v65
  %120 = vmatpush.msra.mxu0 %v61
  %121 = vmatpush.msra.mxu0 %v57
  %122 = vmatpush.msra.mxu0 %v53
  %123 = vmatpush.msra.mxu0 %v49
  %124 = vmatpush.msra.mxu0 %v45
  %125 = vmatpush.msra.mxu0 %v41
  %126 = vmatpush.msra.mxu0 %v37
  %127 = vmatmul.f32.gmra.mxu0 %v29
  %v128 = vpop.f32.mrf.mxu0
  %v129 = vadd.f32 %v103, %v128
  %130 = vmatmul.f32.gmra.mxu0 %v30
  %v131 = vpop.f32.mrf.mxu0
  %v132 = vadd.f32 %v103, %v131
  %133 = vmatmul.f32.gmra.mxu0 %v31
  %v134 = vpop.f32.mrf.mxu0
  %v135 = vadd.f32 %v103, %v134
  %136 = vmatmul.f32.gmra.mxu0 %v32
  %v137 = vpop.f32.mrf.mxu0
  %v138 = vadd.f32 %v103, %v137
  %139 = vmatmul.f32.gmra.mxu0 %v33
  %v140 = vpop.f32.mrf.mxu0
  %v141 = vadd.f32 %v103, %v140
  %142 = vmatmul.f32.gmra.mxu0 %v34
  %v143 = vpop.f32.mrf.mxu0
  %v144 = vadd.f32 %v103, %v143
  %145 = vmatmul.f32.gmra.mxu0 %v35
  %v146 = vpop.f32.mrf.mxu0
  %v147 = vadd.f32 %v103, %v146
  %148 = vmatmul.f32.gmra.mxu0 %v36
  %v149 = vpop.f32.mrf.mxu0
  %v150 = vadd.f32 %v103, %v149
  %151 = vdwg.mxu0
  %152 = vmatpush.msra.mxu0 %v98
  %153 = vmatpush.msra.mxu0 %v94
  %154 = vmatpush.msra.mxu0 %v90
  %155 = vmatpush.msra.mxu0 %v86
  %156 = vmatpush.msra.mxu0 %v82
  %157 = vmatpush.msra.mxu0 %v78
  %158 = vmatpush.msra.mxu0 %v74
  %159 = vmatpush.msra.mxu0 %v70
  %160 = vmatpush.msra.mxu0 %v66
  %161 = vmatpush.msra.mxu0 %v62
  %162 = vmatpush.msra.mxu0 %v58
  %163 = vmatpush.msra.mxu0 %v54
  %164 = vmatpush.msra.mxu0 %v50
  %165 = vmatpush.msra.mxu0 %v46
  %166 = vmatpush.msra.mxu0 %v42
  %167 = vmatpush.msra.mxu0 %v38
  %168 = vmatmul.f32.gmra.mxu0 %v29
  %v169 = vpop.f32.mrf.mxu0
  %v170 = vadd.f32 %v104, %v169
  %171 = vmatmul.f32.gmra.mxu0 %v30
  %v172 = vpop.f32.mrf.mxu0
  %v173 = vadd.f32 %v104, %v172
  %174 = vmatmul.f32.gmra.mxu0 %v31
  %v175 = vpop.f32.mrf.mxu0
  %v176 = vadd.f32 %v104, %v175
  %177 = vmatmul.f32.gmra.mxu0 %v32
  %v178 = vpop.f32.mrf.mxu0
  %v179 = vadd.f32 %v104, %v178
  %180 = vmatmul.f32.gmra.mxu0 %v33
  %v181 = vpop.f32.mrf.mxu0
  %v182 = vadd.f32 %v104, %v181
  %183 = vmatmul.f32.gmra.mxu0 %v34
  %v184 = vpop.f32.mrf.mxu0
  %v185 = vadd.f32 %v104, %v184
  %186 = vmatmul.f32.gmra.mxu0 %v35
  %v187 = vpop.f32.mrf.mxu0
  %v188 = vadd.f32 %v104, %v187
  %189 = vmatmul.f32.gmra.mxu0 %v36
  %v190 = vpop.f32.mrf.mxu0
  %v191 = vadd.f32 %v104, %v190
  %192 = vdwg.mxu0
  %193 = vmatpush.msra.mxu0 %v99
  %194 = vmatpush.msra.mxu0 %v95
  %195 = vmatpush.msra.mxu0 %v91
  %196 = vmatpush.msra.mxu0 %v87
  %197 = vmatpush.msra.mxu0 %v83
  %198 = vmatpush.msra.mxu0 %v79
  %199 = vmatpush.msra.mxu0 %v75
  %200 = vmatpush.msra.mxu0 %v71
  %201 = vmatpush.msra.mxu0 %v67
  %202 = vmatpush.msra.mxu0 %v63
  %203 = vmatpush.msra.mxu0 %v59
  %204 = vmatpush.msra.mxu0 %v55
  %205 = vmatpush.msra.mxu0 %v51
  %206 = vmatpush.msra.mxu0 %v47
  %207 = vmatpush.msra.mxu0 %v43
  %208 = vmatpush.msra.mxu0 %v39
  %209 = vmatmul.f32.gmra.mxu0 %v29
  %v210 = vpop.f32.mrf.mxu0
  %v211 = vadd.f32 %v105, %v210
  %212 = vmatmul.f32.gmra.mxu0 %v30
  %v213 = vpop.f32.mrf.mxu0
  %v214 = vadd.f32 %v105, %v213
  %215 = vmatmul.f32.gmra.mxu0 %v31
  %v216 = vpop.f32.mrf.mxu0
  %v217 = vadd.f32 %v105, %v216
  %218 = vmatmul.f32.gmra.mxu0 %v32
  %v219 = vpop.f32.mrf.mxu0
  %v220 = vadd.f32 %v105, %v219
  %221 = vmatmul.f32.gmra.mxu0 %v33
  %v222 = vpop.f32.mrf.mxu0
  %v223 = vadd.f32 %v105, %v222
  %224 = vmatmul.f32.gmra.mxu0 %v34
  %v225 = vpop.f32.mrf.mxu0
  %v226 = vadd.f32 %v105, %v225
  %227 = vmatmul.f32.gmra.mxu0 %v35
  %v228 = vpop.f32.mrf.mxu0
  %v229 = vadd.f32 %v105, %v228
  %230 = vmatmul.f32.gmra.mxu0 %v36
  %v231 = vpop.f32.mrf.mxu0
  %v232 = vadd.f32 %v105, %v231
  %233 = vdwg.mxu0
  %234 = vmatpush.msra.mxu0 %v100
  %235 = vmatpush.msra.mxu0 %v96
  %236 = vmatpush.msra.mxu0 %v92
  %237 = vmatpush.msra.mxu0 %v88
  %238 = vmatpush.msra.mxu0 %v84
  %239 = vmatpush.msra.mxu0 %v80
  %240 = vmatpush.msra.mxu0 %v76
  %241 = vmatpush.msra.mxu0 %v72
  %242 = vmatpush.msra.mxu0 %v68
  %243 = vmatpush.msra.mxu0 %v64
  %244 = vmatpush.msra.mxu0 %v60
  %245 = vmatpush.msra.mxu0 %v56
  %246 = vmatpush.msra.mxu0 %v52
  %247 = vmatpush.msra.mxu0 %v48
  %248 = vmatpush.msra.mxu0 %v44
  %249 = vmatpush.msra.mxu0 %v40
  %250 = vmatmul.f32.gmra.mxu0 %v29
  %v251 = vpop.f32.mrf.mxu0
  %v252 = vadd.f32 %v106, %v251
  %253 = vmatmul.f32.gmra.mxu0 %v30
  %v254 = vpop.f32.mrf.mxu0
  %v255 = vadd.f32 %v106, %v254
  %256 = vmatmul.f32.gmra.mxu0 %v31
  %v257 = vpop.f32.mrf.mxu0
  %v258 = vadd.f32 %v106, %v257
  %259 = vmatmul.f32.gmra.mxu0 %v32
  %v260 = vpop.f32.mrf.mxu0
  %v261 = vadd.f32 %v106, %v260
  %262 = vmatmul.f32.gmra.mxu0 %v33
  %v263 = vpop.f32.mrf.mxu0
  %v264 = vadd.f32 %v106, %v263
  %265 = vmatmul.f32.gmra.mxu0 %v34
  %v266 = vpop.f32.mrf.mxu0
  %v267 = vadd.f32 %v106, %v266
  %268 = vmatmul.f32.gmra.mxu0 %v35
  %v269 = vpop.f32.mrf.mxu0
  %v270 = vadd.f32 %v106, %v269
  %271 = vmatmul.f32.gmra.mxu0 %v36
  %v272 = vpop.f32.mrf.mxu0
  %v273 = vadd.f32 %v106, %v272
  %274 = vdwg.mxu0
  %275 = vst [vmem:[#allocation2] sm:$0xff] %v129
  %276 = vst [vmem:[#allocation2 + $0x8] sm:$0xff] %v170
  %277 = vst [vmem:[#allocation2 + $0x10] sm:$0xff] %v211
  %278 = vst [vmem:[#allocation2 + $0x18] sm:$0xff] %v252
  %279 = vst [vmem:[#allocation2 + $0x20] sm:$0xff] %v132
  %280 = vst [vmem:[#allocation2 + $0x28] sm:$0xff] %v173
  %281 = vst [vmem:[#allocation2 + $0x30] sm:$0xff] %v214
  %282 = vst [vmem:[#allocation2 + $0x38] sm:$0xff] %v255
  %283 = vst [vmem:[#allocation2 + $0x40] sm:$0xff] %v135
  %284 = vst [vmem:[#allocation2 + $0x48] sm:$0xff] %v176
  %285 = vst [vmem:[#allocation2 + $0x50] sm:$0xff] %v217
  %286 = vst [vmem:[#allocation2 + $0x58] sm:$0xff] %v258
  %287 = vst [vmem:[#allocation2 + $0x60] sm:$0xff] %v138
  %288 = vst [vmem:[#allocation2 + $0x68] sm:$0xff] %v179
  %289 = vst [vmem:[#allocation2 + $0x70] sm:$0xff] %v220
  %290 = vst [vmem:[#allocation2 + $0x78] sm:$0xff] %v261
  %291 = vst [vmem:[#allocation2 + $0x80] sm:$0xff] %v141
  %292 = vst [vmem:[#allocation2 + $0x88] sm:$0xff] %v182
  %293 = vst [vmem:[#allocation2 + $0x90] sm:$0xff] %v223
  %294 = vst [vmem:[#allocation2 + $0x98] sm:$0xff] %v264
  %295 = vst [vmem:[#allocation2 + $0xa0] sm:$0xff] %v144
  %296 = vst [vmem:[#allocation2 + $0xa8] sm:$0xff] %v185
  %297 = vst [vmem:[#allocation2 + $0xb0] sm:$0xff] %v226
  %298 = vst [vmem:[#allocation2 + $0xb8] sm:$0xff] %v267
  %299 = vst [vmem:[#allocation2 + $0xc0] sm:$0xff] %v147
  %300 = vst [vmem:[#allocation2 + $0xc8] sm:$0xff] %v188
  %301 = vst [vmem:[#allocation2 + $0xd0] sm:$0xff] %v229
  %302 = vst [vmem:[#allocation2 + $0xd8] sm:$0xff] %v270
  %303 = vst [vmem:[#allocation2 + $0xe0] sm:$0xff] %v150
  %304 = vst [vmem:[#allocation2 + $0xe8] sm:$0xff] %v191
  %305 = vst [vmem:[#allocation2 + $0xf0] sm:$0xff] %v232
  %306 = vst [vmem:[#allocation2 + $0xf8] sm:$0xff] %v273
  %v307 = vld [vmem:[%s2] sm:$0xff]
  %v308 = vld [vmem:[%s2 + $0x8] sm:$0xff]
  %v309 = vld [vmem:[%s2 + $0x10] sm:$0xff]
  %v310 = vld [vmem:[%s2 + $0x18] sm:$0xff]
  %v311 = vld [vmem:[%s2 + $0x20] sm:$0xff]
  %v312 = vld [vmem:[%s2 + $0x28] sm:$0xff]
  %v313 = vld [vmem:[%s2 + $0x30] sm:$0xff]
  %v314 = vld [vmem:[%s2 + $0x38] sm:$0xff]
  %v315 = vld [vmem:[%s2 + $0x40] sm:$0xff]
  %v316 = vld [vmem:[%s2 + $0x48] sm:$0xff]
  %v317 = vld [vmem:[%s2 + $0x50] sm:$0xff]
  %v318 = vld [vmem:[%s2 + $0x58] sm:$0xff]
  %v319 = vld [vmem:[%s2 + $0x60] sm:$0xff]
  %v320 = vld [vmem:[%s2 + $0x68] sm:$0xff]
  %v321 = vld [vmem:[%s2 + $0x70] sm:$0xff]
  %v322 = vld [vmem:[%s2 + $0x78] sm:$0xff]
  %v323 = vld [vmem:[%s2 + $0x80] sm:$0xff]
  %v324 = vld [vmem:[%s2 + $0x88] sm:$0xff]
  %v325 = vld [vmem:[%s2 + $0x90] sm:$0xff]
  %v326 = vld [vmem:[%s2 + $0x98] sm:$0xff]
  %v327 = vld [vmem:[%s2 + $0xa0] sm:$0xff]
  %v328 = vld [vmem:[%s2 + $0xa8] sm:$0xff]
  %v329 = vld [vmem:[%s2 + $0xb0] sm:$0xff]
  %v330 = vld [vmem:[%s2 + $0xb8] sm:$0xff]
  %v331 = vld [vmem:[%s2 + $0xc0] sm:$0xff]
  %v332 = vld [vmem:[%s2 + $0xc8] sm:$0xff]
  %v333 = vld [vmem:[%s2 + $0xd0] sm:$0xff]
  %v334 = vld [vmem:[%s2 + $0xd8] sm:$0xff]
  %v335 = vld [vmem:[%s2 + $0xe0] sm:$0xff]
  %v336 = vld [vmem:[%s2 + $0xe8] sm:$0xff]
  %v337 = vld [vmem:[%s2 + $0xf0] sm:$0xff]
  %v338 = vld [vmem:[%s2 + $0xf8] sm:$0xff]
  %v339 = vld [vmem:[%s2 + $0x100] sm:$0xff]
  %v340 = vld [vmem:[%s2 + $0x108] sm:$0xff]
  %v341 = vld [vmem:[%s2 + $0x110] sm:$0xff]
  %v342 = vld [vmem:[%s2 + $0x118] sm:$0xff]
  %v343 = vld [vmem:[%s2 + $0x120] sm:$0xff]
  %v344 = vld [vmem:[%s2 + $0x128] sm:$0xff]
  %v345 = vld [vmem:[%s2 + $0x130] sm:$0xff]
  %v346 = vld [vmem:[%s2 + $0x138] sm:$0xff]
  %v347 = vld [vmem:[%s2 + $0x140] sm:$0xff]
  %v348 = vld [vmem:[%s2 + $0x148] sm:$0xff]
  %v349 = vld [vmem:[%s2 + $0x150] sm:$0xff]
  %v350 = vld [vmem:[%s2 + $0x158] sm:$0xff]
  %v351 = vld [vmem:[%s2 + $0x160] sm:$0xff]
  %v352 = vld [vmem:[%s2 + $0x168] sm:$0xff]
  %v353 = vld [vmem:[%s2 + $0x170] sm:$0xff]
  %v354 = vld [vmem:[%s2 + $0x178] sm:$0xff]
  %v355 = vld [vmem:[%s2 + $0x180] sm:$0xff]
  %v356 = vld [vmem:[%s2 + $0x188] sm:$0xff]
  %v357 = vld [vmem:[%s2 + $0x190] sm:$0xff]
  %v358 = vld [vmem:[%s2 + $0x198] sm:$0xff]
  %v359 = vld [vmem:[%s2 + $0x1a0] sm:$0xff]
  %v360 = vld [vmem:[%s2 + $0x1a8] sm:$0xff]
  %v361 = vld [vmem:[%s2 + $0x1b0] sm:$0xff]
  %v362 = vld [vmem:[%s2 + $0x1b8] sm:$0xff]
  %v363 = vld [vmem:[%s2 + $0x1c0] sm:$0xff]
  %v364 = vld [vmem:[%s2 + $0x1c8] sm:$0xff]
  %v365 = vld [vmem:[%s2 + $0x1d0] sm:$0xff]
  %v366 = vld [vmem:[%s2 + $0x1d8] sm:$0xff]
  %v367 = vld [vmem:[%s2 + $0x1e0] sm:$0xff]
  %v368 = vld [vmem:[%s2 + $0x1e8] sm:$0xff]
  %v369 = vld [vmem:[%s2 + $0x1f0] sm:$0xff]
  %v370 = vld [vmem:[%s2 + $0x1f8] sm:$0xff]
  %v371 = vlaneseq
  %v372 = vand.u32 %v371, 127
  %v373 = vadd.s32 %v372, 128
  %v374 = vadd.s32 %v372, 256
  %v375 = vadd.s32 %v372, 384
  %vm376 = vcmp.ge.s32.totalorder %v372, 256
  %vm377 = vcmp.ge.s32.totalorder %v373, 256
  %vm378 = vcmp.ge.s32.totalorder %v374, 256
  %vm379 = vcmp.ge.s32.totalorder %v375, 256
  %vm380 = vcmp.lt.s32.totalorder %v372, 384
  %vm381 = vcmp.lt.s32.totalorder %v373, 384
  %vm382 = vcmp.lt.s32.totalorder %v374, 384
  %vm383 = vcmp.lt.s32.totalorder %v375, 384
  %vm384 = vmand %vm376, %vm380
  %vm385 = vmand %vm377, %vm381
  %vm386 = vmand %vm378, %vm382
  %vm387 = vmand %vm379, %vm383
  %v388 = vld [vmem:[#allocation3] sm:$0xff]
  %v389 = vld [vmem:[#allocation4] sm:$0xff]
  %s390 = smul.u32 0, 4
  %s391 = smul.addr %s390, 8
  %s392 = scalar_lea.vmem [#allocation2], %s391
  %v393 = vld [vmem:[%s392] sm:$0xff]
  %v394 = vld [vmem:[%s392 + $0x8] sm:$0xff]
  %v395 = vld [vmem:[%s392 + $0x10] sm:$0xff]
  %v396 = vld [vmem:[%s392 + $0x18] sm:$0xff]
  %397 = vmatpush.msra.mxu0 %v367
  %398 = vmatpush.msra.mxu0 %v363
  %399 = vmatpush.msra.mxu0 %v359
  %400 = vmatpush.msra.mxu0 %v355
  %401 = vmatpush.msra.mxu0 %v351
  %402 = vmatpush.msra.mxu0 %v347
  %403 = vmatpush.msra.mxu0 %v343
  %404 = vmatpush.msra.mxu0 %v339
  %405 = vmatpush.msra.mxu0 %v335
  %406 = vmatpush.msra.mxu0 %v331
  %407 = vmatpush.msra.mxu0 %v327
  %408 = vmatpush.msra.mxu0 %v323
  %409 = vmatpush.msra.mxu0 %v319
  %410 = vmatpush.msra.mxu0 %v315
  %411 = vmatpush.msra.mxu0 %v311
  %412 = vmatpush.msra.mxu0 %v307
  %413 = vmatmul.f32.gmra.mxu0 %v388
  %v414 = vpop.f32.mrf.mxu0
  %v415 = vadd.f32 0.0, %v414
  %416 = vdwg.mxu0
  %417 = vmatpush.msra.mxu0 %v368
  %418 = vmatpush.msra.mxu0 %v364
  %419 = vmatpush.msra.mxu0 %v360
  %420 = vmatpush.msra.mxu0 %v356
  %421 = vmatpush.msra.mxu0 %v352
  %422 = vmatpush.msra.mxu0 %v348
  %423 = vmatpush.msra.mxu0 %v344
  %424 = vmatpush.msra.mxu0 %v340
  %425 = vmatpush.msra.mxu0 %v336
  %426 = vmatpush.msra.mxu0 %v332
  %427 = vmatpush.msra.mxu0 %v328
  %428 = vmatpush.msra.mxu0 %v324
  %429 = vmatpush.msra.mxu0 %v320
  %430 = vmatpush.msra.mxu0 %v316
  %431 = vmatpush.msra.mxu0 %v312
  %432 = vmatpush.msra.mxu0 %v308
  %433 = vmatmul.f32.gmra.mxu0 %v388
  %v434 = vpop.f32.mrf.mxu0
  %v435 = vadd.f32 0.0, %v434
  %436 = vdwg.mxu0
  %437 = vmatpush.msra.mxu0 %v369
  %438 = vmatpush.msra.mxu0 %v365
  %439 = vmatpush.msra.mxu0 %v361
  %440 = vmatpush.msra.mxu0 %v357
  %441 = vmatpush.msra.mxu0 %v353
  %442 = vmatpush.msra.mxu0 %v349
  %443 = vmatpush.msra.mxu0 %v345
  %444 = vmatpush.msra.mxu0 %v341
  %445 = vmatpush.msra.mxu0 %v337
  %446 = vmatpush.msra.mxu0 %v333
  %447 = vmatpush.msra.mxu0 %v329
  %448 = vmatpush.msra.mxu0 %v325
  %449 = vmatpush.msra.mxu0 %v321
  %450 = vmatpush.msra.mxu0 %v317
  %451 = vmatpush.msra.mxu0 %v313
  %452 = vmatpush.msra.mxu0 %v309
  %453 = vmatmul.f32.gmra.mxu0 %v388
  %v454 = vpop.f32.mrf.mxu0
  %v455 = vadd.f32 0.0, %v454
  %456 = vdwg.mxu0
  %457 = vmatpush.msra.mxu0 %v370
  %458 = vmatpush.msra.mxu0 %v366
  %459 = vmatpush.msra.mxu0 %v362
  %460 = vmatpush.msra.mxu0 %v358
  %461 = vmatpush.msra.mxu0 %v354
  %462 = vmatpush.msra.mxu0 %v350
  %463 = vmatpush.msra.mxu0 %v346
  %464 = vmatpush.msra.mxu0 %v342
  %465 = vmatpush.msra.mxu0 %v338
  %466 = vmatpush.msra.mxu0 %v334
  %467 = vmatpush.msra.mxu0 %v330
  %468 = vmatpush.msra.mxu0 %v326
  %469 = vmatpush.msra.mxu0 %v322
  %470 = vmatpush.msra.mxu0 %v318
  %471 = vmatpush.msra.mxu0 %v314
  %472 = vmatpush.msra.mxu0 %v310
  %473 = vmatmul.f32.gmra.mxu0 %v388
  %v474 = vpop.f32.mrf.mxu0
  %v475 = vadd.f32 0.0, %v474
  %476 = vdwg.mxu0
  %v477 = vadd.f32 %v393, %v415
  %v478 = vadd.f32 %v394, %v435
  %v479 = vadd.f32 %v395, %v455
  %v480 = vadd.f32 %v396, %v475
  %v481 = vmul.f32 %v477, 0.5
  %v482 = vmul.f32 %v478, 0.5
  %v483 = vmul.f32 %v479, 0.5
  %v484 = vmul.f32 %v480, 0.5
  %v485 = vsel %vm384, %v477, %v481
  %v486 = vsel %vm385, %v478, %v482
  %v487 = vsel %vm386, %v479, %v483
  %v488 = vsel %vm387, %v480, %v484
  %v489 = vtanh.pop %v485
  %v490 = vtanh.pop %v486
  %v491 = vtanh.pop %v487
  %v492 = vtanh.pop %v488
  %v493 = vmul.f32 %v489, 0.5
  %v494 = vmul.f32 %v490, 0.5
  %v495 = vmul.f32 %v491, 0.5
  %v496 = vmul.f32 %v492, 0.5
  %v497 = vadd.f32 %v493, 0.5
  %v498 = vadd.f32 %v494, 0.5
  %v499 = vadd.f32 %v495, 0.5
  %v500 = vadd.f32 %v496, 0.5
  %v501 = vsel %vm384, %v489, %v497
  %v502 = vsel %vm385, %v490, %v498
  %v503 = vsel %vm386, %v491, %v499
  %v504 = vsel %vm387, %v492, %v500
  %v505 = vmul.f32 %v502, %v389
  %v506 = vmul.f32 %v501, %v503
  %v507 = vadd.f32 %v505, %v506
  %v508 = vtanh.pop %v507
  %v509 = vmul.f32 %v504, %v508
  %510 = vst [vmem:[#allocation5] sm:$0xff] %v509
  %s511 = smul.u32 1, 4
  %s512 = smul.addr %s511, 8
  %s513 = scalar_lea.vmem [#allocation2], %s512
  %v514 = vld [vmem:[%s513] sm:$0xff]
  %v515 = vld [vmem:[%s513 + $0x8] sm:$0xff]
  %v516 = vld [vmem:[%s513 + $0x10] sm:$0xff]
  %v517 = vld [vmem:[%s513 + $0x18] sm:$0xff]
  %518 = vmatpush.msra.mxu0 %v367
  %519 = vmatpush.msra.mxu0 %v363
  %520 = vmatpush.msra.mxu0 %v359
  %521 = vmatpush.msra.mxu0 %v355
  %522 = vmatpush.msra.mxu0 %v351
  %523 = vmatpush.msra.mxu0 %v347
  %524 = vmatpush.msra.mxu0 %v343
  %525 = vmatpush.msra.mxu0 %v339
  %526 = vmatpush.msra.mxu0 %v335
  %527 = vmatpush.msra.mxu0 %v331
  %528 = vmatpush.msra.mxu0 %v327
  %529 = vmatpush.msra.mxu0 %v323
  %530 = vmatpush.msra.mxu0 %v319
  %531 = vmatpush.msra.mxu0 %v315
  %532 = vmatpush.msra.mxu0 %v311
  %533 = vmatpush.msra.mxu0 %v307
  %534 = vmatmul.f32.gmra.mxu0 %v509
  %v535 = vpop.f32.mrf.mxu0
  %v536 = vadd.f32 0.0, %v535
  %537 = vdwg.mxu0
  %538 = vmatpush.msra.mxu0 %v368
  %539 = vmatpush.msra.mxu0 %v364
  %540 = vmatpush.msra.mxu0 %v360
  %541 = vmatpush.msra.mxu0 %v356
  %542 = vmatpush.msra.mxu0 %v352
  %543 = vmatpush.msra.mxu0 %v348
  %544 = vmatpush.msra.mxu0 %v344
  %545 = vmatpush.msra.mxu0 %v340
  %546 = vmatpush.msra.mxu0 %v336
  %547 = vmatpush.msra.mxu0 %v332
  %548 = vmatpush.msra.mxu0 %v328
  %549 = vmatpush.msra.mxu0 %v324
  %550 = vmatpush.msra.mxu0 %v320
  %551 = vmatpush.msra.mxu0 %v316
  %552 = vmatpush.msra.mxu0 %v312
  %553 = vmatpush.msra.mxu0 %v308
  %554 = vmatmul.f32.gmra.mxu0 %v509
  %v555 = vpop.f32.mrf.mxu0
  %v556 = vadd.f32 0.0, %v555
  %557 = vdwg.mxu0
  %558 = vmatpush.msra.mxu0 %v369
  %559 = vmatpush.msra.mxu0 %v365
  %560 = vmatpush.msra.mxu0 %v361
  %561 = vmatpush.msra.mxu0 %v357
  %562 = vmatpush.msra.mxu0 %v353
  %563 = vmatpush.msra.mxu0 %v349
  %564 = vmatpush.msra.mxu0 %v345
  %565 = vmatpush.msra.mxu0 %v341
  %566 = vmatpush.msra.mxu0 %v337
  %567 = vmatpush.msra.mxu0 %v333
  %568 = vmatpush.msra.mxu0 %v329
  %569 = vmatpush.msra.mxu0 %v325
  %570 = vmatpush.msra.mxu0 %v321
  %571 = vmatpush.msra.mxu0 %v317
  %572 = vmatpush.msra.mxu0 %v313
  %573 = vmatpush.msra.mxu0 %v309
  %574 = vmatmul.f32.gmra.mxu0 %v509
  %v575 = vpop.f32.mrf.mxu0
  %v576 = vadd.f32 0.0, %v575
  %577 = vdwg.mxu0
  %578 = vmatpush.msra.mxu0 %v370
  %579 = vmatpush.msra.mxu0 %v366
  %580 = vmatpush.msra.mxu0 %v362
  %581 = vmatpush.msra.mxu0 %v358
  %582 = vmatpush.msra.mxu0 %v354
  %583 = vmatpush.msra.mxu0 %v350
  %584 = vmatpush.msra.mxu0 %v346
  %585 = vmatpush.msra.mxu0 %v342
  %586 = vmatpush.msra.mxu0 %v338
  %587 = vmatpush.msra.mxu0 %v334
  %588 = vmatpush.msra.mxu0 %v330
  %589 = vmatpush.msra.mxu0 %v326
  %590 = vmatpush.msra.mxu0 %v322
  %591 = vmatpush.msra.mxu0 %v318
  %592 = vmatpush.msra.mxu0 %v314
  %593 = vmatpush.msra.mxu0 %v310
  %594 = vmatmul.f32.gmra.mxu0 %v509
  %v595 = vpop.f32.mrf.mxu0
  %v596 = vadd.f32 0.0, %v595
  %597 = vdwg.mxu0
  %v598 = vadd.f32 %v514, %v536
  %v599 = vadd.f32 %v515, %v556
  %v600 = vadd.f32 %v516, %v576
  %v601 = vadd.f32 %v517, %v596
  %v602 = vmul.f32 %v598, 0.5
  %v603 = vmul.f32 %v599, 0.5
  %v604 = vmul.f32 %v600, 0.5
  %v605 = vmul.f32 %v601, 0.5
  %v606 = vsel %vm384, %v598, %v602
  %v607 = vsel %vm385, %v599, %v603
  %v608 = vsel %vm386, %v600, %v604
  %v609 = vsel %vm387, %v601, %v605
  %v610 = vtanh.pop %v606
  %v611 = vtanh.pop %v607
  %v612 = vtanh.pop %v608
  %v613 = vtanh.pop %v609
  %v614 = vmul.f32 %v610, 0.5
  %v615 = vmul.f32 %v611, 0.5
  %v616 = vmul.f32 %v612, 0.5
  %v617 = vmul.f32 %v613, 0.5
  %v618 = vadd.f32 %v614, 0.5
  %v619 = vadd.f32 %v615, 0.5
  %v620 = vadd.f32 %v616, 0.5
  %v621 = vadd.f32 %v617, 0.5
  %v622 = vsel %vm384, %v610, %v618
  %v623 = vsel %vm385, %v611, %v619
  %v624 = vsel %vm386, %v612, %v620
  %v625 = vsel %vm387, %v613, %v621
  %v626 = vmul.f32 %v623, %v507
  %v627 = vmul.f32 %v622, %v624
  %v628 = vadd.f32 %v626, %v627
  %v629 = vtanh.pop %v628
  %v630 = vmul.f32 %v625, %v629
  %s631 = scalar_lea.vmem [#allocation5], 8
  %632 = vst [vmem:[%s631] sm:$0xff] %v630
  %s633 = smul.u32 2, 4
  %s634 = smul.addr %s633, 8
  %s635 = scalar_lea.vmem [#allocation2], %s634
  %v636 = vld [vmem:[%s635] sm:$0xff]
  %v637 = vld [vmem:[%s635 + $0x8] sm:$0xff]
  %v638 = vld [vmem:[%s635 + $0x10] sm:$0xff]
  %v639 = vld [vmem:[%s635 + $0x18] sm:$0xff]
  %640 = vmatpush.msra.mxu0 %v367
  %641 = vmatpush.msra.mxu0 %v363
  %642 = vmatpush.msra.mxu0 %v359
  %643 = vmatpush.msra.mxu0 %v355
  %644 = vmatpush.msra.mxu0 %v351
  %645 = vmatpush.msra.mxu0 %v347
  %646 = vmatpush.msra.mxu0 %v343
  %647 = vmatpush.msra.mxu0 %v339
  %648 = vmatpush.msra.mxu0 %v335
  %649 = vmatpush.msra.mxu0 %v331
  %650 = vmatpush.msra.mxu0 %v327
  %651 = vmatpush.msra.mxu0 %v323
  %652 = vmatpush.msra.mxu0 %v319
  %653 = vmatpush.msra.mxu0 %v315
  %654 = vmatpush.msra.mxu0 %v311
  %655 = vmatpush.msra.mxu0 %v307
  %656 = vmatmul.f32.gmra.mxu0 %v630
  %v657 = vpop.f32.mrf.mxu0
  %v658 = vadd.f32 0.0, %v657
  %659 = vdwg.mxu0
  %660 = vmatpush.msra.mxu0 %v368
  %661 = vmatpush.msra.mxu0 %v364
  %662 = vmatpush.msra.mxu0 %v360
  %663 = vmatpush.msra.mxu0 %v356
  %664 = vmatpush.msra.mxu0 %v352
  %665 = vmatpush.msra.mxu0 %v348
  %666 = vmatpush.msra.mxu0 %v344
  %667 = vmatpush.msra.mxu0 %v340
  %668 = vmatpush.msra.mxu0 %v336
  %669 = vmatpush.msra.mxu0 %v332
  %670 = vmatpush.msra.mxu0 %v328
  %671 = vmatpush.msra.mxu0 %v324
  %672 = vmatpush.msra.mxu0 %v320
  %673 = vmatpush.msra.mxu0 %v316
  %674 = vmatpush.msra.mxu0 %v312
  %675 = vmatpush.msra.mxu0 %v308
  %676 = vmatmul.f32.gmra.mxu0 %v630
  %v677 = vpop.f32.mrf.mxu0
  %v678 = vadd.f32 0.0, %v677
  %679 = vdwg.mxu0
  %680 = vmatpush.msra.mxu0 %v369
  %681 = vmatpush.msra.mxu0 %v365
  %682 = vmatpush.msra.mxu0 %v361
  %683 = vmatpush.msra.mxu0 %v357
  %684 = vmatpush.msra.mxu0 %v353
  %685 = vmatpush.msra.mxu0 %v349
  %686 = vmatpush.msra.mxu0 %v345
  %687 = vmatpush.msra.mxu0 %v341
  %688 = vmatpush.msra.mxu0 %v337
  %689 = vmatpush.msra.mxu0 %v333
  %690 = vmatpush.msra.mxu0 %v329
  %691 = vmatpush.msra.mxu0 %v325
  %692 = vmatpush.msra.mxu0 %v321
  %693 = vmatpush.msra.mxu0 %v317
  %694 = vmatpush.msra.mxu0 %v313
  %695 = vmatpush.msra.mxu0 %v309
  %696 = vmatmul.f32.gmra.mxu0 %v630
  %v697 = vpop.f32.mrf.mxu0
  %v698 = vadd.f32 0.0, %v697
  %699 = vdwg.mxu0
  %700 = vmatpush.msra.mxu0 %v370
  %701 = vmatpush.msra.mxu0 %v366
  %702 = vmatpush.msra.mxu0 %v362
  %703 = vmatpush.msra.mxu0 %v358
  %704 = vmatpush.msra.mxu0 %v354
  %705 = vmatpush.msra.mxu0 %v350
  %706 = vmatpush.msra.mxu0 %v346
  %707 = vmatpush.msra.mxu0 %v342
  %708 = vmatpush.msra.mxu0 %v338
  %709 = vmatpush.msra.mxu0 %v334
  %710 = vmatpush.msra.mxu0 %v330
  %711 = vmatpush.msra.mxu0 %v326
  %712 = vmatpush.msra.mxu0 %v322
  %713 = vmatpush.msra.mxu0 %v318
  %714 = vmatpush.msra.mxu0 %v314
  %715 = vmatpush.msra.mxu0 %v310
  %716 = vmatmul.f32.gmra.mxu0 %v630
  %v717 = vpop.f32.mrf.mxu0
  %v718 = vadd.f32 0.0, %v717
  %719 = vdwg.mxu0
  %v720 = vadd.f32 %v636, %v658
  %v721 = vadd.f32 %v637, %v678
  %v722 = vadd.f32 %v638, %v698
  %v723 = vadd.f32 %v639, %v718
  %v724 = vmul.f32 %v720, 0.5
  %v725 = vmul.f32 %v721, 0.5
  %v726 = vmul.f32 %v722, 0.5
  %v727 = vmul.f32 %v723, 0.5
  %v728 = vsel %vm384, %v720, %v724
  %v729 = vsel %vm385, %v721, %v725
  %v730 = vsel %vm386, %v722, %v726
  %v731 = vsel %vm387, %v723, %v727
  %v732 = vtanh.pop %v728
  %v733 = vtanh.pop %v729
  %v734 = vtanh.pop %v730
  %v735 = vtanh.pop %v731
  %v736 = vmul.f32 %v732, 0.5
  %v737 = vmul.f32 %v733, 0.5
  %v738 = vmul.f32 %v734, 0.5
  %v739 = vmul.f32 %v735, 0.5
  %v740 = vadd.f32 %v736, 0.5
  %v741 = vadd.f32 %v737, 0.5
  %v742 = vadd.f32 %v738, 0.5
  %v743 = vadd.f32 %v739, 0.5
  %v744 = vsel %vm384, %v732, %v740
  %v745 = vsel %vm385, %v733, %v741
  %v746 = vsel %vm386, %v734, %v742
  %v747 = vsel %vm387, %v735, %v743
  %v748 = vmul.f32 %v745, %v628
  %v749 = vmul.f32 %v744, %v746
  %v750 = vadd.f32 %v748, %v749
  %v751 = vtanh.pop %v750
  %v752 = vmul.f32 %v747, %v751
  %s753 = scalar_lea.vmem [#allocation5], 16
  %754 = vst [vmem:[%s753] sm:$0xff] %v752
  %s755 = smul.u32 3, 4
  %s756 = smul.addr %s755, 8
  %s757 = scalar_lea.vmem [#allocation2], %s756
  %v758 = vld [vmem:[%s757] sm:$0xff]
  %v759 = vld [vmem:[%s757 + $0x8] sm:$0xff]
  %v760 = vld [vmem:[%s757 + $0x10] sm:$0xff]
  %v761 = vld [vmem:[%s757 + $0x18] sm:$0xff]
  %762 = vmatpush.msra.mxu0 %v367
  %763 = vmatpush.msra.mxu0 %v363
  %764 = vmatpush.msra.mxu0 %v359
  %765 = vmatpush.msra.mxu0 %v355
  %766 = vmatpush.msra.mxu0 %v351
  %767 = vmatpush.msra.mxu0 %v347
  %768 = vmatpush.msra.mxu0 %v343
  %769 = vmatpush.msra.mxu0 %v339
  %770 = vmatpush.msra.mxu0 %v335
  %771 = vmatpush.msra.mxu0 %v331
  %772 = vmatpush.msra.mxu0 %v327
  %773 = vmatpush.msra.mxu0 %v323
  %774 = vmatpush.msra.mxu0 %v319
  %775 = vmatpush.msra.mxu0 %v315
  %776 = vmatpush.msra.mxu0 %v311
  %777 = vmatpush.msra.mxu0 %v307
  %778 = vmatmul.f32.gmra.mxu0 %v752
  %v779 = vpop.f32.mrf.mxu0
  %v780 = vadd.f32 0.0, %v779
  %781 = vdwg.mxu0
  %782 = vmatpush.msra.mxu0 %v368
  %783 = vmatpush.msra.mxu0 %v364
  %784 = vmatpush.msra.mxu0 %v360
  %785 = vmatpush.msra.mxu0 %v356
  %786 = vmatpush.msra.mxu0 %v352
  %787 = vmatpush.msra.mxu0 %v348
  %788 = vmatpush.msra.mxu0 %v344
  %789 = vmatpush.msra.mxu0 %v340
  %790 = vmatpush.msra.mxu0 %v336
  %791 = vmatpush.msra.mxu0 %v332
  %792 = vmatpush.msra.mxu0 %v328
  %793 = vmatpush.msra.mxu0 %v324
  %794 = vmatpush.msra.mxu0 %v320
  %795 = vmatpush.msra.mxu0 %v316
  %796 = vmatpush.msra.mxu0 %v312
  %797 = vmatpush.msra.mxu0 %v308
  %798 = vmatmul.f32.gmra.mxu0 %v752
  %v799 = vpop.f32.mrf.mxu0
  %v800 = vadd.f32 0.0, %v799
  %801 = vdwg.mxu0
  %802 = vmatpush.msra.mxu0 %v369
  %803 = vmatpush.msra.mxu0 %v365
  %804 = vmatpush.msra.mxu0 %v361
  %805 = vmatpush.msra.mxu0 %v357
  %806 = vmatpush.msra.mxu0 %v353
  %807 = vmatpush.msra.mxu0 %v349
  %808 = vmatpush.msra.mxu0 %v345
  %809 = vmatpush.msra.mxu0 %v341
  %810 = vmatpush.msra.mxu0 %v337
  %811 = vmatpush.msra.mxu0 %v333
  %812 = vmatpush.msra.mxu0 %v329
  %813 = vmatpush.msra.mxu0 %v325
  %814 = vmatpush.msra.mxu0 %v321
  %815 = vmatpush.msra.mxu0 %v317
  %816 = vmatpush.msra.mxu0 %v313
  %817 = vmatpush.msra.mxu0 %v309
  %818 = vmatmul.f32.gmra.mxu0 %v752
  %v819 = vpop.f32.mrf.mxu0
  %v820 = vadd.f32 0.0, %v819
  %821 = vdwg.mxu0
  %822 = vmatpush.msra.mxu0 %v370
  %823 = vmatpush.msra.mxu0 %v366
  %824 = vmatpush.msra.mxu0 %v362
  %825 = vmatpush.msra.mxu0 %v358
  %826 = vmatpush.msra.mxu0 %v354
  %827 = vmatpush.msra.mxu0 %v350
  %828 = vmatpush.msra.mxu0 %v346
  %829 = vmatpush.msra.mxu0 %v342
  %830 = vmatpush.msra.mxu0 %v338
  %831 = vmatpush.msra.mxu0 %v334
  %832 = vmatpush.msra.mxu0 %v330
  %833 = vmatpush.msra.mxu0 %v326
  %834 = vmatpush.msra.mxu0 %v322
  %835 = vmatpush.msra.mxu0 %v318
  %836 = vmatpush.msra.mxu0 %v314
  %837 = vmatpush.msra.mxu0 %v310
  %838 = vmatmul.f32.gmra.mxu0 %v752
  %v839 = vpop.f32.mrf.mxu0
  %v840 = vadd.f32 0.0, %v839
  %841 = vdwg.mxu0
  %v842 = vadd.f32 %v758, %v780
  %v843 = vadd.f32 %v759, %v800
  %v844 = vadd.f32 %v760, %v820
  %v845 = vadd.f32 %v761, %v840
  %v846 = vmul.f32 %v842, 0.5
  %v847 = vmul.f32 %v843, 0.5
  %v848 = vmul.f32 %v844, 0.5
  %v849 = vmul.f32 %v845, 0.5
  %v850 = vsel %vm384, %v842, %v846
  %v851 = vsel %vm385, %v843, %v847
  %v852 = vsel %vm386, %v844, %v848
  %v853 = vsel %vm387, %v845, %v849
  %v854 = vtanh.pop %v850
  %v855 = vtanh.pop %v851
  %v856 = vtanh.pop %v852
  %v857 = vtanh.pop %v853
  %v858 = vmul.f32 %v854, 0.5
  %v859 = vmul.f32 %v855, 0.5
  %v860 = vmul.f32 %v856, 0.5
  %v861 = vmul.f32 %v857, 0.5
  %v862 = vadd.f32 %v858, 0.5
  %v863 = vadd.f32 %v859, 0.5
  %v864 = vadd.f32 %v860, 0.5
  %v865 = vadd.f32 %v861, 0.5
  %v866 = vsel %vm384, %v854, %v862
  %v867 = vsel %vm385, %v855, %v863
  %v868 = vsel %vm386, %v856, %v864
  %v869 = vsel %vm387, %v857, %v865
  %v870 = vmul.f32 %v867, %v750
  %v871 = vmul.f32 %v866, %v868
  %v872 = vadd.f32 %v870, %v871
  %v873 = vtanh.pop %v872
  %v874 = vmul.f32 %v869, %v873
  %s875 = scalar_lea.vmem [#allocation5], 24
  %876 = vst [vmem:[%s875] sm:$0xff] %v874
  %s877 = smul.u32 4, 4
  %s878 = smul.addr %s877, 8
  %s879 = scalar_lea.vmem [#allocation2], %s878
  %v880 = vld [vmem:[%s879] sm:$0xff]
  %v881 = vld [vmem:[%s879 + $0x8] sm:$0xff]
  %v882 = vld [vmem:[%s879 + $0x10] sm:$0xff]
  %v883 = vld [vmem:[%s879 + $0x18] sm:$0xff]
  %884 = vmatpush.msra.mxu0 %v367
  %885 = vmatpush.msra.mxu0 %v363
  %886 = vmatpush.msra.mxu0 %v359
  %887 = vmatpush.msra.mxu0 %v355
  %888 = vmatpush.msra.mxu0 %v351
  %889 = vmatpush.msra.mxu0 %v347
  %890 = vmatpush.msra.mxu0 %v343
  %891 = vmatpush.msra.mxu0 %v339
  %892 = vmatpush.msra.mxu0 %v335
  %893 = vmatpush.msra.mxu0 %v331
  %894 = vmatpush.msra.mxu0 %v327
  %895 = vmatpush.msra.mxu0 %v323
  %896 = vmatpush.msra.mxu0 %v319
  %897 = vmatpush.msra.mxu0 %v315
  %898 = vmatpush.msra.mxu0 %v311
  %899 = vmatpush.msra.mxu0 %v307
  %900 = vmatmul.f32.gmra.mxu0 %v874
  %v901 = vpop.f32.mrf.mxu0
  %v902 = vadd.f32 0.0, %v901
  %903 = vdwg.mxu0
  %904 = vmatpush.msra.mxu0 %v368
  %905 = vmatpush.msra.mxu0 %v364
  %906 = vmatpush.msra.mxu0 %v360
  %907 = vmatpush.msra.mxu0 %v356
  %908 = vmatpush.msra.mxu0 %v352
  %909 = vmatpush.msra.mxu0 %v348
  %910 = vmatpush.msra.mxu0 %v344
  %911 = vmatpush.msra.mxu0 %v340
  %912 = vmatpush.msra.mxu0 %v336
  %913 = vmatpush.msra.mxu0 %v332
  %914 = vmatpush.msra.mxu0 %v328
  %915 = vmatpush.msra.mxu0 %v324
  %916 = vmatpush.msra.mxu0 %v320
  %917 = vmatpush.msra.mxu0 %v316
  %918 = vmatpush.msra.mxu0 %v312
  %919 = vmatpush.msra.mxu0 %v308
  %920 = vmatmul.f32.gmra.mxu0 %v874
  %v921 = vpop.f32.mrf.mxu0
  %v922 = vadd.f32 0.0, %v921
  %923 = vdwg.mxu0
  %924 = vmatpush.msra.mxu0 %v369
  %925 = vmatpush.msra.mxu0 %v365
  %926 = vmatpush.msra.mxu0 %v361
  %927 = vmatpush.msra.mxu0 %v357
  %928 = vmatpush.msra.mxu0 %v353
  %929 = vmatpush.msra.mxu0 %v349
  %930 = vmatpush.msra.mxu0 %v345
  %931 = vmatpush.msra.mxu0 %v341
  %932 = vmatpush.msra.mxu0 %v337
  %933 = vmatpush.msra.mxu0 %v333
  %934 = vmatpush.msra.mxu0 %v329
  %935 = vmatpush.msra.mxu0 %v325
  %936 = vmatpush.msra.mxu0 %v321
  %937 = vmatpush.msra.mxu0 %v317
  %938 = vmatpush.msra.mxu0 %v313
  %939 = vmatpush.msra.mxu0 %v309
  %940 = vmatmul.f32.gmra.mxu0 %v874
  %v941 = vpop.f32.mrf.mxu0
  %v942 = vadd.f32 0.0, %v941
  %943 = vdwg.mxu0
  %944 = vmatpush.msra.mxu0 %v370
  %945 = vmatpush.msra.mxu0 %v366
  %946 = vmatpush.msra.mxu0 %v362
  %947 = vmatpush.msra.mxu0 %v358
  %948 = vmatpush.msra.mxu0 %v354
  %949 = vmatpush.msra.mxu0 %v350
  %950 = vmatpush.msra.mxu0 %v346
  %951 = vmatpush.msra.mxu0 %v342
  %952 = vmatpush.msra.mxu0 %v338
  %953 = vmatpush.msra.mxu0 %v334
  %954 = vmatpush.msra.mxu0 %v330
  %955 = vmatpush.msra.mxu0 %v326
  %956 = vmatpush.msra.mxu0 %v322
  %957 = vmatpush.msra.mxu0 %v318
  %958 = vmatpush.msra.mxu0 %v314
  %959 = vmatpush.msra.mxu0 %v310
  %960 = vmatmul.f32.gmra.mxu0 %v874
  %v961 = vpop.f32.mrf.mxu0
  %v962 = vadd.f32 0.0, %v961
  %963 = vdwg.mxu0
  %v964 = vadd.f32 %v880, %v902
  %v965 = vadd.f32 %v881, %v922
  %v966 = vadd.f32 %v882, %v942
  %v967 = vadd.f32 %v883, %v962
  %v968 = vmul.f32 %v964, 0.5
  %v969 = vmul.f32 %v965, 0.5
  %v970 = vmul.f32 %v966, 0.5
  %v971 = vmul.f32 %v967, 0.5
  %v972 = vsel %vm384, %v964, %v968
  %v973 = vsel %vm385, %v965, %v969
  %v974 = vsel %vm386, %v966, %v970
  %v975 = vsel %vm387, %v967, %v971
  %v976 = vtanh.pop %v972
  %v977 = vtanh.pop %v973
  %v978 = vtanh.pop %v974
  %v979 = vtanh.pop %v975
  %v980 = vmul.f32 %v976, 0.5
  %v981 = vmul.f32 %v977, 0.5
  %v982 = vmul.f32 %v978, 0.5
  %v983 = vmul.f32 %v979, 0.5
  %v984 = vadd.f32 %v980, 0.5
  %v985 = vadd.f32 %v981, 0.5
  %v986 = vadd.f32 %v982, 0.5
  %v987 = vadd.f32 %v983, 0.5
  %v988 = vsel %vm384, %v976, %v984
  %v989 = vsel %vm385, %v977, %v985
  %v990 = vsel %vm386, %v978, %v986
  %v991 = vsel %vm387, %v979, %v987
  %v992 = vmul.f32 %v989, %v872
  %v993 = vmul.f32 %v988, %v990
  %v994 = vadd.f32 %v992, %v993
  %v995 = vtanh.pop %v994
  %v996 = vmul.f32 %v991, %v995
  %s997 = scalar_lea.vmem [#allocation5], 32
  %998 = vst [vmem:[%s997] sm:$0xff] %v996
  %s999 = smul.u32 5, 4
  %s1000 = smul.addr %s999, 8
  %s1001 = scalar_lea.vmem [#allocation2], %s1000
  %v1002 = vld [vmem:[%s1001] sm:$0xff]
  %v1003 = vld [vmem:[%s1001 + $0x8] sm:$0xff]
  %v1004 = vld [vmem:[%s1001 + $0x10] sm:$0xff]
  %v1005 = vld [vmem:[%s1001 + $0x18] sm:$0xff]
  %1006 = vmatpush.msra.mxu0 %v367
  %1007 = vmatpush.msra.mxu0 %v363
  %1008 = vmatpush.msra.mxu0 %v359
  %1009 = vmatpush.msra.mxu0 %v355
  %1010 = vmatpush.msra.mxu0 %v351
  %1011 = vmatpush.msra.mxu0 %v347
  %1012 = vmatpush.msra.mxu0 %v343
  %1013 = vmatpush.msra.mxu0 %v339
  %1014 = vmatpush.msra.mxu0 %v335
  %1015 = vmatpush.msra.mxu0 %v331
  %1016 = vmatpush.msra.mxu0 %v327
  %1017 = vmatpush.msra.mxu0 %v323
  %1018 = vmatpush.msra.mxu0 %v319
  %1019 = vmatpush.msra.mxu0 %v315
  %1020 = vmatpush.msra.mxu0 %v311
  %1021 = vmatpush.msra.mxu0 %v307
  %1022 = vmatmul.f32.gmra.mxu0 %v996
  %v1023 = vpop.f32.mrf.mxu0
  %v1024 = vadd.f32 0.0, %v1023
  %1025 = vdwg.mxu0
  %1026 = vmatpush.msra.mxu0 %v368
  %1027 = vmatpush.msra.mxu0 %v364
  %1028 = vmatpush.msra.mxu0 %v360
  %1029 = vmatpush.msra.mxu0 %v356
  %1030 = vmatpush.msra.mxu0 %v352
  %1031 = vmatpush.msra.mxu0 %v348
  %1032 = vmatpush.msra.mxu0 %v344
  %1033 = vmatpush.msra.mxu0 %v340
  %1034 = vmatpush.msra.mxu0 %v336
  %1035 = vmatpush.msra.mxu0 %v332
  %1036 = vmatpush.msra.mxu0 %v328
  %1037 = vmatpush.msra.mxu0 %v324
  %1038 = vmatpush.msra.mxu0 %v320
  %1039 = vmatpush.msra.mxu0 %v316
  %1040 = vmatpush.msra.mxu0 %v312
  %1041 = vmatpush.msra.mxu0 %v308
  %1042 = vmatmul.f32.gmra.mxu0 %v996
  %v1043 = vpop.f32.mrf.mxu0
  %v1044 = vadd.f32 0.0, %v1043
  %1045 = vdwg.mxu0
  %1046 = vmatpush.msra.mxu0 %v369
  %1047 = vmatpush.msra.mxu0 %v365
  %1048 = vmatpush.msra.mxu0 %v361
  %1049 = vmatpush.msra.mxu0 %v357
  %1050 = vmatpush.msra.mxu0 %v353
  %1051 = vmatpush.msra.mxu0 %v349
  %1052 = vmatpush.msra.mxu0 %v345
  %1053 = vmatpush.msra.mxu0 %v341
  %1054 = vmatpush.msra.mxu0 %v337
  %1055 = vmatpush.msra.mxu0 %v333
  %1056 = vmatpush.msra.mxu0 %v329
  %1057 = vmatpush.msra.mxu0 %v325
  %1058 = vmatpush.msra.mxu0 %v321
  %1059 = vmatpush.msra.mxu0 %v317
  %1060 = vmatpush.msra.mxu0 %v313
  %1061 = vmatpush.msra.mxu0 %v309
  %1062 = vmatmul.f32.gmra.mxu0 %v996
  %v1063 = vpop.f32.mrf.mxu0
  %v1064 = vadd.f32 0.0, %v1063
  %1065 = vdwg.mxu0
  %1066 = vmatpush.msra.mxu0 %v370
  %1067 = vmatpush.msra.mxu0 %v366
  %1068 = vmatpush.msra.mxu0 %v362
  %1069 = vmatpush.msra.mxu0 %v358
  %1070 = vmatpush.msra.mxu0 %v354
  %1071 = vmatpush.msra.mxu0 %v350
  %1072 = vmatpush.msra.mxu0 %v346
  %1073 = vmatpush.msra.mxu0 %v342
  %1074 = vmatpush.msra.mxu0 %v338
  %1075 = vmatpush.msra.mxu0 %v334
  %1076 = vmatpush.msra.mxu0 %v330
  %1077 = vmatpush.msra.mxu0 %v326
  %1078 = vmatpush.msra.mxu0 %v322
  %1079 = vmatpush.msra.mxu0 %v318
  %1080 = vmatpush.msra.mxu0 %v314
  %1081 = vmatpush.msra.mxu0 %v310
  %1082 = vmatmul.f32.gmra.mxu0 %v996
  %v1083 = vpop.f32.mrf.mxu0
  %v1084 = vadd.f32 0.0, %v1083
  %1085 = vdwg.mxu0
  %v1086 = vadd.f32 %v1002, %v1024
  %v1087 = vadd.f32 %v1003, %v1044
  %v1088 = vadd.f32 %v1004, %v1064
  %v1089 = vadd.f32 %v1005, %v1084
  %v1090 = vmul.f32 %v1086, 0.5
  %v1091 = vmul.f32 %v1087, 0.5
  %v1092 = vmul.f32 %v1088, 0.5
  %v1093 = vmul.f32 %v1089, 0.5
  %v1094 = vsel %vm384, %v1086, %v1090
  %v1095 = vsel %vm385, %v1087, %v1091
  %v1096 = vsel %vm386, %v1088, %v1092
  %v1097 = vsel %vm387, %v1089, %v1093
  %v1098 = vtanh.pop %v1094
  %v1099 = vtanh.pop %v1095
  %v1100 = vtanh.pop %v1096
  %v1101 = vtanh.pop %v1097
  %v1102 = vmul.f32 %v1098, 0.5
  %v1103 = vmul.f32 %v1099, 0.5
  %v1104 = vmul.f32 %v1100, 0.5
  %v1105 = vmul.f32 %v1101, 0.5
  %v1106 = vadd.f32 %v1102, 0.5
  %v1107 = vadd.f32 %v1103, 0.5
  %v1108 = vadd.f32 %v1104, 0.5
  %v1109 = vadd.f32 %v1105, 0.5
  %v1110 = vsel %vm384, %v1098, %v1106
  %v1111 = vsel %vm385, %v1099, %v1107
  %v1112 = vsel %vm386, %v1100, %v1108
  %v1113 = vsel %vm387, %v1101, %v1109
  %v1114 = vmul.f32 %v1111, %v994
  %v1115 = vmul.f32 %v1110, %v1112
  %v1116 = vadd.f32 %v1114, %v1115
  %v1117 = vtanh.pop %v1116
  %v1118 = vmul.f32 %v1113, %v1117
  %s1119 = scalar_lea.vmem [#allocation5], 40
  %1120 = vst [vmem:[%s1119] sm:$0xff] %v1118
  %s1121 = smul.u32 6, 4
  %s1122 = smul.addr %s1121, 8
  %s1123 = scalar_lea.vmem [#allocation2], %s1122
  %v1124 = vld [vmem:[%s1123] sm:$0xff]
  %v1125 = vld [vmem:[%s1123 + $0x8] sm:$0xff]
  %v1126 = vld [vmem:[%s1123 + $0x10] sm:$0xff]
  %v1127 = vld [vmem:[%s1123 + $0x18] sm:$0xff]
  %1128 = vmatpush.msra.mxu0 %v367
  %1129 = vmatpush.msra.mxu0 %v363
  %1130 = vmatpush.msra.mxu0 %v359
  %1131 = vmatpush.msra.mxu0 %v355
  %1132 = vmatpush.msra.mxu0 %v351
  %1133 = vmatpush.msra.mxu0 %v347
  %1134 = vmatpush.msra.mxu0 %v343
  %1135 = vmatpush.msra.mxu0 %v339
  %1136 = vmatpush.msra.mxu0 %v335
  %1137 = vmatpush.msra.mxu0 %v331
  %1138 = vmatpush.msra.mxu0 %v327
  %1139 = vmatpush.msra.mxu0 %v323
  %1140 = vmatpush.msra.mxu0 %v319
  %1141 = vmatpush.msra.mxu0 %v315
  %1142 = vmatpush.msra.mxu0 %v311
  %1143 = vmatpush.msra.mxu0 %v307
  %1144 = vmatmul.f32.gmra.mxu0 %v1118
  %v1145 = vpop.f32.mrf.mxu0
  %v1146 = vadd.f32 0.0, %v1145
  %1147 = vdwg.mxu0
  %1148 = vmatpush.msra.mxu0 %v368
  %1149 = vmatpush.msra.mxu0 %v364
  %1150 = vmatpush.msra.mxu0 %v360
  %1151 = vmatpush.msra.mxu0 %v356
  %1152 = vmatpush.msra.mxu0 %v352
  %1153 = vmatpush.msra.mxu0 %v348
  %1154 = vmatpush.msra.mxu0 %v344
  %1155 = vmatpush.msra.mxu0 %v340
  %1156 = vmatpush.msra.mxu0 %v336
  %1157 = vmatpush.msra.mxu0 %v332
  %1158 = vmatpush.msra.mxu0 %v328
  %1159 = vmatpush.msra.mxu0 %v324
  %1160 = vmatpush.msra.mxu0 %v320
  %1161 = vmatpush.msra.mxu0 %v316
  %1162 = vmatpush.msra.mxu0 %v312
  %1163 = vmatpush.msra.mxu0 %v308
  %1164 = vmatmul.f32.gmra.mxu0 %v1118
  %v1165 = vpop.f32.mrf.mxu0
  %v1166 = vadd.f32 0.0, %v1165
  %1167 = vdwg.mxu0
  %1168 = vmatpush.msra.mxu0 %v369
  %1169 = vmatpush.msra.mxu0 %v365
  %1170 = vmatpush.msra.mxu0 %v361
  %1171 = vmatpush.msra.mxu0 %v357
  %1172 = vmatpush.msra.mxu0 %v353
  %1173 = vmatpush.msra.mxu0 %v349
  %1174 = vmatpush.msra.mxu0 %v345
  %1175 = vmatpush.msra.mxu0 %v341
  %1176 = vmatpush.msra.mxu0 %v337
  %1177 = vmatpush.msra.mxu0 %v333
  %1178 = vmatpush.msra.mxu0 %v329
  %1179 = vmatpush.msra.mxu0 %v325
  %1180 = vmatpush.msra.mxu0 %v321
  %1181 = vmatpush.msra.mxu0 %v317
  %1182 = vmatpush.msra.mxu0 %v313
  %1183 = vmatpush.msra.mxu0 %v309
  %1184 = vmatmul.f32.gmra.mxu0 %v1118
  %v1185 = vpop.f32.mrf.mxu0
  %v1186 = vadd.f32 0.0, %v1185
  %1187 = vdwg.mxu0
  %1188 = vmatpush.msra.mxu0 %v370
  %1189 = vmatpush.msra.mxu0 %v366
  %1190 = vmatpush.msra.mxu0 %v362
  %1191 = vmatpush.msra.mxu0 %v358
  %1192 = vmatpush.msra.mxu0 %v354
  %1193 = vmatpush.msra.mxu0 %v350
  %1194 = vmatpush.msra.mxu0 %v346
  %1195 = vmatpush.msra.mxu0 %v342
  %1196 = vmatpush.msra.mxu0 %v338
  %1197 = vmatpush.msra.mxu0 %v334
  %1198 = vmatpush.msra.mxu0 %v330
  %1199 = vmatpush.msra.mxu0 %v326
  %1200 = vmatpush.msra.mxu0 %v322
  %1201 = vmatpush.msra.mxu0 %v318
  %1202 = vmatpush.msra.mxu0 %v314
  %1203 = vmatpush.msra.mxu0 %v310
  %1204 = vmatmul.f32.gmra.mxu0 %v1118
  %v1205 = vpop.f32.mrf.mxu0
  %v1206 = vadd.f32 0.0, %v1205
  %1207 = vdwg.mxu0
  %v1208 = vadd.f32 %v1124, %v1146
  %v1209 = vadd.f32 %v1125, %v1166
  %v1210 = vadd.f32 %v1126, %v1186
  %v1211 = vadd.f32 %v1127, %v1206
  %v1212 = vmul.f32 %v1208, 0.5
  %v1213 = vmul.f32 %v1209, 0.5
  %v1214 = vmul.f32 %v1210, 0.5
  %v1215 = vmul.f32 %v1211, 0.5
  %v1216 = vsel %vm384, %v1208, %v1212
  %v1217 = vsel %vm385, %v1209, %v1213
  %v1218 = vsel %vm386, %v1210, %v1214
  %v1219 = vsel %vm387, %v1211, %v1215
  %v1220 = vtanh.pop %v1216
  %v1221 = vtanh.pop %v1217
  %v1222 = vtanh.pop %v1218
  %v1223 = vtanh.pop %v1219
  %v1224 = vmul.f32 %v1220, 0.5
  %v1225 = vmul.f32 %v1221, 0.5
  %v1226 = vmul.f32 %v1222, 0.5
  %v1227 = vmul.f32 %v1223, 0.5
  %v1228 = vadd.f32 %v1224, 0.5
  %v1229 = vadd.f32 %v1225, 0.5
  %v1230 = vadd.f32 %v1226, 0.5
  %v1231 = vadd.f32 %v1227, 0.5
  %v1232 = vsel %vm384, %v1220, %v1228
  %v1233 = vsel %vm385, %v1221, %v1229
  %v1234 = vsel %vm386, %v1222, %v1230
  %v1235 = vsel %vm387, %v1223, %v1231
  %v1236 = vmul.f32 %v1233, %v1116
  %v1237 = vmul.f32 %v1232, %v1234
  %v1238 = vadd.f32 %v1236, %v1237
  %v1239 = vtanh.pop %v1238
  %v1240 = vmul.f32 %v1235, %v1239
  %s1241 = scalar_lea.vmem [#allocation5], 48
  %1242 = vst [vmem:[%s1241] sm:$0xff] %v1240
  %s1243 = smul.u32 7, 4
  %s1244 = smul.addr %s1243, 8
  %s1245 = scalar_lea.vmem [#allocation2], %s1244
  %v1246 = vld [vmem:[%s1245] sm:$0xff]
  %v1247 = vld [vmem:[%s1245 + $0x8] sm:$0xff]
  %v1248 = vld [vmem:[%s1245 + $0x10] sm:$0xff]
  %v1249 = vld [vmem:[%s1245 + $0x18] sm:$0xff]
  %1250 = vmatpush.msra.mxu0 %v367
  %1251 = vmatpush.msra.mxu0 %v363
  %1252 = vmatpush.msra.mxu0 %v359
  %1253 = vmatpush.msra.mxu0 %v355
  %1254 = vmatpush.msra.mxu0 %v351
  %1255 = vmatpush.msra.mxu0 %v347
  %1256 = vmatpush.msra.mxu0 %v343
  %1257 = vmatpush.msra.mxu0 %v339
  %1258 = vmatpush.msra.mxu0 %v335
  %1259 = vmatpush.msra.mxu0 %v331
  %1260 = vmatpush.msra.mxu0 %v327
  %1261 = vmatpush.msra.mxu0 %v323
  %1262 = vmatpush.msra.mxu0 %v319
  %1263 = vmatpush.msra.mxu0 %v315
  %1264 = vmatpush.msra.mxu0 %v311
  %1265 = vmatpush.msra.mxu0 %v307
  %1266 = vmatmul.f32.gmra.mxu0 %v1240
  %v1267 = vpop.f32.mrf.mxu0
  %v1268 = vadd.f32 0.0, %v1267
  %1269 = vdwg.mxu0
  %1270 = vmatpush.msra.mxu0 %v368
  %1271 = vmatpush.msra.mxu0 %v364
  %1272 = vmatpush.msra.mxu0 %v360
  %1273 = vmatpush.msra.mxu0 %v356
  %1274 = vmatpush.msra.mxu0 %v352
  %1275 = vmatpush.msra.mxu0 %v348
  %1276 = vmatpush.msra.mxu0 %v344
  %1277 = vmatpush.msra.mxu0 %v340
  %1278 = vmatpush.msra.mxu0 %v336
  %1279 = vmatpush.msra.mxu0 %v332
  %1280 = vmatpush.msra.mxu0 %v328
  %1281 = vmatpush.msra.mxu0 %v324
  %1282 = vmatpush.msra.mxu0 %v320
  %1283 = vmatpush.msra.mxu0 %v316
  %1284 = vmatpush.msra.mxu0 %v312
  %1285 = vmatpush.msra.mxu0 %v308
  %1286 = vmatmul.f32.gmra.mxu0 %v1240
  %v1287 = vpop.f32.mrf.mxu0
  %v1288 = vadd.f32 0.0, %v1287
  %1289 = vdwg.mxu0
  %1290 = vmatpush.msra.mxu0 %v369
  %1291 = vmatpush.msra.mxu0 %v365
  %1292 = vmatpush.msra.mxu0 %v361
  %1293 = vmatpush.msra.mxu0 %v357
  %1294 = vmatpush.msra.mxu0 %v353
  %1295 = vmatpush.msra.mxu0 %v349
  %1296 = vmatpush.msra.mxu0 %v345
  %1297 = vmatpush.msra.mxu0 %v341
  %1298 = vmatpush.msra.mxu0 %v337
  %1299 = vmatpush.msra.mxu0 %v333
  %1300 = vmatpush.msra.mxu0 %v329
  %1301 = vmatpush.msra.mxu0 %v325
  %1302 = vmatpush.msra.mxu0 %v321
  %1303 = vmatpush.msra.mxu0 %v317
  %1304 = vmatpush.msra.mxu0 %v313
  %1305 = vmatpush.msra.mxu0 %v309
  %1306 = vmatmul.f32.gmra.mxu0 %v1240
  %v1307 = vpop.f32.mrf.mxu0
  %v1308 = vadd.f32 0.0, %v1307
  %1309 = vdwg.mxu0
  %1310 = vmatpush.msra.mxu0 %v370
  %1311 = vmatpush.msra.mxu0 %v366
  %1312 = vmatpush.msra.mxu0 %v362
  %1313 = vmatpush.msra.mxu0 %v358
  %1314 = vmatpush.msra.mxu0 %v354
  %1315 = vmatpush.msra.mxu0 %v350
  %1316 = vmatpush.msra.mxu0 %v346
  %1317 = vmatpush.msra.mxu0 %v342
  %1318 = vmatpush.msra.mxu0 %v338
  %1319 = vmatpush.msra.mxu0 %v334
  %1320 = vmatpush.msra.mxu0 %v330
  %1321 = vmatpush.msra.mxu0 %v326
  %1322 = vmatpush.msra.mxu0 %v322
  %1323 = vmatpush.msra.mxu0 %v318
  %1324 = vmatpush.msra.mxu0 %v314
  %1325 = vmatpush.msra.mxu0 %v310
  %1326 = vmatmul.f32.gmra.mxu0 %v1240
  %v1327 = vpop.f32.mrf.mxu0
  %v1328 = vadd.f32 0.0, %v1327
  %1329 = vdwg.mxu0
  %v1330 = vadd.f32 %v1246, %v1268
  %v1331 = vadd.f32 %v1247, %v1288
  %v1332 = vadd.f32 %v1248, %v1308
  %v1333 = vadd.f32 %v1249, %v1328
  %v1334 = vmul.f32 %v1330, 0.5
  %v1335 = vmul.f32 %v1331, 0.5
  %v1336 = vmul.f32 %v1332, 0.5
  %v1337 = vmul.f32 %v1333, 0.5
  %v1338 = vsel %vm384, %v1330, %v1334
  %v1339 = vsel %vm385, %v1331, %v1335
  %v1340 = vsel %vm386, %v1332, %v1336
  %v1341 = vsel %vm387, %v1333, %v1337
  %v1342 = vtanh.pop %v1338
  %v1343 = vtanh.pop %v1339
  %v1344 = vtanh.pop %v1340
  %v1345 = vtanh.pop %v1341
  %v1346 = vmul.f32 %v1342, 0.5
  %v1347 = vmul.f32 %v1343, 0.5
  %v1348 = vmul.f32 %v1344, 0.5
  %v1349 = vmul.f32 %v1345, 0.5
  %v1350 = vadd.f32 %v1346, 0.5
  %v1351 = vadd.f32 %v1347, 0.5
  %v1352 = vadd.f32 %v1348, 0.5
  %v1353 = vadd.f32 %v1349, 0.5
  %v1354 = vsel %vm384, %v1342, %v1350
  %v1355 = vsel %vm385, %v1343, %v1351
  %v1356 = vsel %vm386, %v1344, %v1352
  %v1357 = vsel %vm387, %v1345, %v1353
  %v1358 = vmul.f32 %v1355, %v1238
  %v1359 = vmul.f32 %v1354, %v1356
  %v1360 = vadd.f32 %v1358, %v1359
  %v1361 = vtanh.pop %v1360
  %v1362 = vmul.f32 %v1357, %v1361
  %s1363 = scalar_lea.vmem [#allocation5], 56
  %1364 = vst [vmem:[%s1363] sm:$0xff] %v1362
  %1365 = vst [vmem:[#allocation3] sm:$0xff] %v1362
  %1366 = vst [vmem:[#allocation4] sm:$0xff] %v1360
  %v1367 = vld [vmem:[#allocation5] sm:$0xff]
  %v1368 = vld [vmem:[#allocation5 + $0x8] sm:$0xff]
  %v1369 = vld [vmem:[#allocation5 + $0x10] sm:$0xff]
  %v1370 = vld [vmem:[#allocation5 + $0x18] sm:$0xff]
  %v1371 = vld [vmem:[#allocation5 + $0x20] sm:$0xff]
  %v1372 = vld [vmem:[#allocation5 + $0x28] sm:$0xff]
  %v1373 = vld [vmem:[#allocation5 + $0x30] sm:$0xff]
  %v1374 = vld [vmem:[#allocation5 + $0x38] sm:$0xff]
  %v1375 = vld [vmem:[%s4] sm:$0xff]
  %v1376 = vld [vmem:[%s4 + $0x8] sm:$0xff]
  %v1377 = vld [vmem:[%s4 + $0x10] sm:$0xff]
  %v1378 = vld [vmem:[%s4 + $0x18] sm:$0xff]
  %v1379 = vld [vmem:[%s4 + $0x20] sm:$0xff]
  %v1380 = vld [vmem:[%s4 + $0x28] sm:$0xff]
  %v1381 = vld [vmem:[%s4 + $0x30] sm:$0xff]
  %v1382 = vld [vmem:[%s4 + $0x38] sm:$0xff]
  %v1383 = vld [vmem:[%s4 + $0x40] sm:$0xff]
  %v1384 = vld [vmem:[%s4 + $0x48] sm:$0xff]
  %v1385 = vld [vmem:[%s4 + $0x50] sm:$0xff]
  %v1386 = vld [vmem:[%s4 + $0x58] sm:$0xff]
  %v1387 = vld [vmem:[%s4 + $0x60] sm:$0xff]
  %v1388 = vld [vmem:[%s4 + $0x68] sm:$0xff]
  %v1389 = vld [vmem:[%s4 + $0x70] sm:$0xff]
  %v1390 = vld [vmem:[%s4 + $0x78] sm:$0xff]
  %v1391 = vld [vmem:[%s5] sm:$0x1]
  %v1393 = vperm.slane %v1391, 0
  %1395 = vmatpush.msra.mxu0 %v1390
  %1396 = vmatpush.msra.mxu0 %v1389
  %1397 = vmatpush.msra.mxu0 %v1388
  %1398 = vmatpush.msra.mxu0 %v1387
  %1399 = vmatpush.msra.mxu0 %v1386
  %1400 = vmatpush.msra.mxu0 %v1385
  %1401 = vmatpush.msra.mxu0 %v1384
  %1402 = vmatpush.msra.mxu0 %v1383
  %1403 = vmatpush.msra.mxu0 %v1382
  %1404 = vmatpush.msra.mxu0 %v1381
  %1405 = vmatpush.msra.mxu0 %v1380
  %1406 = vmatpush.msra.mxu0 %v1379
  %1407 = vmatpush.msra.mxu0 %v1378
  %1408 = vmatpush.msra.mxu0 %v1377
  %1409 = vmatpush.msra.mxu0 %v1376
  %1410 = vmatpush.msra.mxu0 %v1375
  %1411 = vmatmul.f32.gmra.mxu0 %v1367
  %v1412 = vpop.f32.mrf.mxu0
  %v1413 = vadd.f32 %v1393, %v1412
  %1414 = vmatmul.f32.gmra.mxu0 %v1368
  %v1415 = vpop.f32.mrf.mxu0
  %v1416 = vadd.f32 %v1393, %v1415
  %1417 = vmatmul.f32.gmra.mxu0 %v1369
  %v1418 = vpop.f32.mrf.mxu0
  %v1419 = vadd.f32 %v1393, %v1418
  %1420 = vmatmul.f32.gmra.mxu0 %v1370
  %v1421 = vpop.f32.mrf.mxu0
  %v1422 = vadd.f32 %v1393, %v1421
  %1423 = vmatmul.f32.gmra.mxu0 %v1371
  %v1424 = vpop.f32.mrf.mxu0
  %v1425 = vadd.f32 %v1393, %v1424
  %1426 = vmatmul.f32.gmra.mxu0 %v1372
  %v1427 = vpop.f32.mrf.mxu0
  %v1428 = vadd.f32 %v1393, %v1427
  %1429 = vmatmul.f32.gmra.mxu0 %v1373
  %v1430 = vpop.f32.mrf.mxu0
  %v1431 = vadd.f32 %v1393, %v1430
  %1432 = vmatmul.f32.gmra.mxu0 %v1374
  %v1433 = vpop.f32.mrf.mxu0
  %v1434 = vadd.f32 %v1393, %v1433
  %1435 = vdwg.mxu0
  %v1436 = vmax.f32 %v1413, 0.0
  %v1437 = vmax.f32 %v1416, 0.0
  %v1438 = vmax.f32 %v1419, 0.0
  %v1439 = vmax.f32 %v1422, 0.0
  %v1440 = vmax.f32 %v1425, 0.0
  %v1441 = vmax.f32 %v1428, 0.0
  %v1442 = vmax.f32 %v1431, 0.0
  %v1443 = vmax.f32 %v1434, 0.0
  %1444 = vst [vmem:[%s6] sm:$0xff] %v1436
  %1445 = vst [vmem:[%s6 + $0x8] sm:$0xff] %v1437
  %1446 = vst [vmem:[%s6 + $0x10] sm:$0xff] %v1438
  %1447 = vst [vmem:[%s6 + $0x18] sm:$0xff] %v1439
  %1448 = vst [vmem:[%s6 + $0x20] sm:$0xff] %v1440
  %1449 = vst [vmem:[%s6 + $0x28] sm:$0xff] %v1441
  %1450 = vst [vmem:[%s6 + $0x30] sm:$0xff] %v1442
  %1451 = vst [vmem:[%s6 + $0x38] sm:$0xff] %v1443
  // Predicated region
  $region30: #{xlstm_forward.4} parent=0 // pred_check
    _
  $region31: #{xlstm_forward.4} parent=0 // pred_check_branch
    %1453 = sbr.rel (0) target = $region33
  $region32: #{xlstm_forward.4} parent=0 // pred_region
    _
  $region33: #{xlstm_forward.4} parent=0 // pred_fallthru
    _
  // Predicated region
  $region34: #{xlstm_forward.4} parent=0 // pred_check
    _
  $region35: #{xlstm_forward.4} parent=0 // pred_check_branch
    %1455 = sbr.rel (0) target = $region37
  $region36: #{xlstm_forward.4} parent=0 // pred_region
    _
  $region37: #{xlstm_forward.4} parent=0 // pred_fallthru
    _

// kernel: xlstm_forward.5
$region0: #{xlstm_forward.5}
  #allocation0 [shape = 'u32[]', space=smem, size = 0x4, offset = 0x4, fixed_abs, tag = 'smem constant byte address 0x4 - core index']
  #allocation1 [shape = 'u32[72,128]{1,0:T(1,128)}', space=vmem, size = 0x9000, scoped, tag = 'internal scratch']
  #allocation2 [shape = 'f32[64,512]{1,0:T(8,128)}', space=vmem, size = 0x20000, scoped, tag = 'scratch operand']
  #allocation3 [shape = 'f32[8,128]{1,0:T(8,128)}', space=vmem, size = 0x1000, scoped, tag = 'scratch operand']
  #allocation4 [shape = 'f32[8,128]{1,0:T(8,128)}', space=vmem, size = 0x1000, scoped, tag = 'scratch operand']
  %s0 = inlined_call_operand.vmem [shape: f32[1,64,128], index: 0, kind: input, shape index: {}]
  %s1 = inlined_call_operand.vmem [shape: f32[128,512], index: 1, kind: input, shape index: {}]
  %s2 = inlined_call_operand.vmem [shape: f32[128,512], index: 2, kind: input, shape index: {}]
  %s3 = inlined_call_operand.vmem [shape: f32[1,512], index: 3, kind: input, shape index: {}]
  %s4 = inlined_call_operand.vmem [shape: f32[1,64,128], index: 4, kind: output, shape index: {}]
  %s5 = sld [smem:[#allocation0]]
  $region30: #{xlstm_forward.5} parent=0
    _
  %s7 = ssub.s32 1, %s5
  %s8 = scalar_select 0, %s7, %s5
  // Predicated region
  $region2: #{xlstm_forward.5} parent=0 // pred_check
    _
  $region3: #{xlstm_forward.5} parent=0 // pred_check_branch
    %10 = sbr.rel (0) target = $region5
  $region4: #{xlstm_forward.5} parent=0 // pred_region
    _
  $region5: #{xlstm_forward.5} parent=0 // pred_fallthru
    _
  // Predicated region
  $region6: #{xlstm_forward.5} parent=0 // pred_check
    _
  $region7: #{xlstm_forward.5} parent=0 // pred_check_branch
    %12 = sbr.rel (0) target = $region9
  $region8: #{xlstm_forward.5} parent=0 // pred_region
    _
  $region9: #{xlstm_forward.5} parent=0 // pred_fallthru
    _
  // Predicated region
  $region10: #{xlstm_forward.5} parent=0 // pred_check
    _
  $region11: #{xlstm_forward.5} parent=0 // pred_check_branch
    %14 = sbr.rel (0) target = $region13
  $region12: #{xlstm_forward.5} parent=0 // pred_region
    _
  $region13: #{xlstm_forward.5} parent=0 // pred_fallthru
    _
  // Predicated region
  $region14: #{xlstm_forward.5} parent=0 // pred_check
    _
  $region15: #{xlstm_forward.5} parent=0 // pred_check_branch
    %16 = sbr.rel (0) target = $region17
  $region16: #{xlstm_forward.5} parent=0 // pred_region
    _
  $region17: #{xlstm_forward.5} parent=0 // pred_fallthru
    _
  %p17 = scmp.eq.s32.totalorder 0, 0
  // Predicated region
  $region18: #{xlstm_forward.5} parent=0 // pred_check
    %p18 = pneg %p17
  $region19: #{xlstm_forward.5} parent=0 // pred_check_branch
    %20 = sbr.rel (%p18) target = $region21
  $region20: #{xlstm_forward.5} parent=0 // pred_region
    %21 = vst [vmem:[#allocation3] sm:$0xff] 0.0
    %22 = vst [vmem:[#allocation4] sm:$0xff] 0.0
  $region21: #{xlstm_forward.5} parent=0 // pred_fallthru
    _
  %v23 = vld [vmem:[%s0] sm:$0xff]
  %v24 = vld [vmem:[%s0 + $0x8] sm:$0xff]
  %v25 = vld [vmem:[%s0 + $0x10] sm:$0xff]
  %v26 = vld [vmem:[%s0 + $0x18] sm:$0xff]
  %v27 = vld [vmem:[%s0 + $0x20] sm:$0xff]
  %v28 = vld [vmem:[%s0 + $0x28] sm:$0xff]
  %v29 = vld [vmem:[%s0 + $0x30] sm:$0xff]
  %v30 = vld [vmem:[%s0 + $0x38] sm:$0xff]
  %v31 = vld [vmem:[%s1] sm:$0xff]
  %v32 = vld [vmem:[%s1 + $0x8] sm:$0xff]
  %v33 = vld [vmem:[%s1 + $0x10] sm:$0xff]
  %v34 = vld [vmem:[%s1 + $0x18] sm:$0xff]
  %v35 = vld [vmem:[%s1 + $0x20] sm:$0xff]
  %v36 = vld [vmem:[%s1 + $0x28] sm:$0xff]
  %v37 = vld [vmem:[%s1 + $0x30] sm:$0xff]
  %v38 = vld [vmem:[%s1 + $0x38] sm:$0xff]
  %v39 = vld [vmem:[%s1 + $0x40] sm:$0xff]
  %v40 = vld [vmem:[%s1 + $0x48] sm:$0xff]
  %v41 = vld [vmem:[%s1 + $0x50] sm:$0xff]
  %v42 = vld [vmem:[%s1 + $0x58] sm:$0xff]
  %v43 = vld [vmem:[%s1 + $0x60] sm:$0xff]
  %v44 = vld [vmem:[%s1 + $0x68] sm:$0xff]
  %v45 = vld [vmem:[%s1 + $0x70] sm:$0xff]
  %v46 = vld [vmem:[%s1 + $0x78] sm:$0xff]
  %v47 = vld [vmem:[%s1 + $0x80] sm:$0xff]
  %v48 = vld [vmem:[%s1 + $0x88] sm:$0xff]
  %v49 = vld [vmem:[%s1 + $0x90] sm:$0xff]
  %v50 = vld [vmem:[%s1 + $0x98] sm:$0xff]
  %v51 = vld [vmem:[%s1 + $0xa0] sm:$0xff]
  %v52 = vld [vmem:[%s1 + $0xa8] sm:$0xff]
  %v53 = vld [vmem:[%s1 + $0xb0] sm:$0xff]
  %v54 = vld [vmem:[%s1 + $0xb8] sm:$0xff]
  %v55 = vld [vmem:[%s1 + $0xc0] sm:$0xff]
  %v56 = vld [vmem:[%s1 + $0xc8] sm:$0xff]
  %v57 = vld [vmem:[%s1 + $0xd0] sm:$0xff]
  %v58 = vld [vmem:[%s1 + $0xd8] sm:$0xff]
  %v59 = vld [vmem:[%s1 + $0xe0] sm:$0xff]
  %v60 = vld [vmem:[%s1 + $0xe8] sm:$0xff]
  %v61 = vld [vmem:[%s1 + $0xf0] sm:$0xff]
  %v62 = vld [vmem:[%s1 + $0xf8] sm:$0xff]
  %v63 = vld [vmem:[%s1 + $0x100] sm:$0xff]
  %v64 = vld [vmem:[%s1 + $0x108] sm:$0xff]
  %v65 = vld [vmem:[%s1 + $0x110] sm:$0xff]
  %v66 = vld [vmem:[%s1 + $0x118] sm:$0xff]
  %v67 = vld [vmem:[%s1 + $0x120] sm:$0xff]
  %v68 = vld [vmem:[%s1 + $0x128] sm:$0xff]
  %v69 = vld [vmem:[%s1 + $0x130] sm:$0xff]
  %v70 = vld [vmem:[%s1 + $0x138] sm:$0xff]
  %v71 = vld [vmem:[%s1 + $0x140] sm:$0xff]
  %v72 = vld [vmem:[%s1 + $0x148] sm:$0xff]
  %v73 = vld [vmem:[%s1 + $0x150] sm:$0xff]
  %v74 = vld [vmem:[%s1 + $0x158] sm:$0xff]
  %v75 = vld [vmem:[%s1 + $0x160] sm:$0xff]
  %v76 = vld [vmem:[%s1 + $0x168] sm:$0xff]
  %v77 = vld [vmem:[%s1 + $0x170] sm:$0xff]
  %v78 = vld [vmem:[%s1 + $0x178] sm:$0xff]
  %v79 = vld [vmem:[%s1 + $0x180] sm:$0xff]
  %v80 = vld [vmem:[%s1 + $0x188] sm:$0xff]
  %v81 = vld [vmem:[%s1 + $0x190] sm:$0xff]
  %v82 = vld [vmem:[%s1 + $0x198] sm:$0xff]
  %v83 = vld [vmem:[%s1 + $0x1a0] sm:$0xff]
  %v84 = vld [vmem:[%s1 + $0x1a8] sm:$0xff]
  %v85 = vld [vmem:[%s1 + $0x1b0] sm:$0xff]
  %v86 = vld [vmem:[%s1 + $0x1b8] sm:$0xff]
  %v87 = vld [vmem:[%s1 + $0x1c0] sm:$0xff]
  %v88 = vld [vmem:[%s1 + $0x1c8] sm:$0xff]
  %v89 = vld [vmem:[%s1 + $0x1d0] sm:$0xff]
  %v90 = vld [vmem:[%s1 + $0x1d8] sm:$0xff]
  %v91 = vld [vmem:[%s1 + $0x1e0] sm:$0xff]
  %v92 = vld [vmem:[%s1 + $0x1e8] sm:$0xff]
  %v93 = vld [vmem:[%s1 + $0x1f0] sm:$0xff]
  %v94 = vld [vmem:[%s1 + $0x1f8] sm:$0xff]
  %v95 = vld [vmem:[%s3] sm:$0xf]
  %v97 = vperm.slane %v95, 0
  %v98 = vperm.slane %v95, 1
  %v99 = vperm.slane %v95, 2
  %v100 = vperm.slane %v95, 3
  %105 = vmatpush.msra.mxu0 %v91
  %106 = vmatpush.msra.mxu0 %v87
  %107 = vmatpush.msra.mxu0 %v83
  %108 = vmatpush.msra.mxu0 %v79
  %109 = vmatpush.msra.mxu0 %v75
  %110 = vmatpush.msra.mxu0 %v71
  %111 = vmatpush.msra.mxu0 %v67
  %112 = vmatpush.msra.mxu0 %v63
  %113 = vmatpush.msra.mxu0 %v59
  %114 = vmatpush.msra.mxu0 %v55
  %115 = vmatpush.msra.mxu0 %v51
  %116 = vmatpush.msra.mxu0 %v47
  %117 = vmatpush.msra.mxu0 %v43
  %118 = vmatpush.msra.mxu0 %v39
  %119 = vmatpush.msra.mxu0 %v35
  %120 = vmatpush.msra.mxu0 %v31
  %121 = vmatmul.f32.gmra.mxu0 %v23
  %v122 = vpop.f32.mrf.mxu0
  %v123 = vadd.f32 %v97, %v122
  %124 = vmatmul.f32.gmra.mxu0 %v24
  %v125 = vpop.f32.mrf.mxu0
  %v126 = vadd.f32 %v97, %v125
  %127 = vmatmul.f32.gmra.mxu0 %v25
  %v128 = vpop.f32.mrf.mxu0
  %v129 = vadd.f32 %v97, %v128
  %130 = vmatmul.f32.gmra.mxu0 %v26
  %v131 = vpop.f32.mrf.mxu0
  %v132 = vadd.f32 %v97, %v131
  %133 = vmatmul.f32.gmra.mxu0 %v27
  %v134 = vpop.f32.mrf.mxu0
  %v135 = vadd.f32 %v97, %v134
  %136 = vmatmul.f32.gmra.mxu0 %v28
  %v137 = vpop.f32.mrf.mxu0
  %v138 = vadd.f32 %v97, %v137
  %139 = vmatmul.f32.gmra.mxu0 %v29
  %v140 = vpop.f32.mrf.mxu0
  %v141 = vadd.f32 %v97, %v140
  %142 = vmatmul.f32.gmra.mxu0 %v30
  %v143 = vpop.f32.mrf.mxu0
  %v144 = vadd.f32 %v97, %v143
  %145 = vdwg.mxu0
  %146 = vmatpush.msra.mxu0 %v92
  %147 = vmatpush.msra.mxu0 %v88
  %148 = vmatpush.msra.mxu0 %v84
  %149 = vmatpush.msra.mxu0 %v80
  %150 = vmatpush.msra.mxu0 %v76
  %151 = vmatpush.msra.mxu0 %v72
  %152 = vmatpush.msra.mxu0 %v68
  %153 = vmatpush.msra.mxu0 %v64
  %154 = vmatpush.msra.mxu0 %v60
  %155 = vmatpush.msra.mxu0 %v56
  %156 = vmatpush.msra.mxu0 %v52
  %157 = vmatpush.msra.mxu0 %v48
  %158 = vmatpush.msra.mxu0 %v44
  %159 = vmatpush.msra.mxu0 %v40
  %160 = vmatpush.msra.mxu0 %v36
  %161 = vmatpush.msra.mxu0 %v32
  %162 = vmatmul.f32.gmra.mxu0 %v23
  %v163 = vpop.f32.mrf.mxu0
  %v164 = vadd.f32 %v98, %v163
  %165 = vmatmul.f32.gmra.mxu0 %v24
  %v166 = vpop.f32.mrf.mxu0
  %v167 = vadd.f32 %v98, %v166
  %168 = vmatmul.f32.gmra.mxu0 %v25
  %v169 = vpop.f32.mrf.mxu0
  %v170 = vadd.f32 %v98, %v169
  %171 = vmatmul.f32.gmra.mxu0 %v26
  %v172 = vpop.f32.mrf.mxu0
  %v173 = vadd.f32 %v98, %v172
  %174 = vmatmul.f32.gmra.mxu0 %v27
  %v175 = vpop.f32.mrf.mxu0
  %v176 = vadd.f32 %v98, %v175
  %177 = vmatmul.f32.gmra.mxu0 %v28
  %v178 = vpop.f32.mrf.mxu0
  %v179 = vadd.f32 %v98, %v178
  %180 = vmatmul.f32.gmra.mxu0 %v29
  %v181 = vpop.f32.mrf.mxu0
  %v182 = vadd.f32 %v98, %v181
  %183 = vmatmul.f32.gmra.mxu0 %v30
  %v184 = vpop.f32.mrf.mxu0
  %v185 = vadd.f32 %v98, %v184
  %186 = vdwg.mxu0
  %187 = vmatpush.msra.mxu0 %v93
  %188 = vmatpush.msra.mxu0 %v89
  %189 = vmatpush.msra.mxu0 %v85
  %190 = vmatpush.msra.mxu0 %v81
  %191 = vmatpush.msra.mxu0 %v77
  %192 = vmatpush.msra.mxu0 %v73
  %193 = vmatpush.msra.mxu0 %v69
  %194 = vmatpush.msra.mxu0 %v65
  %195 = vmatpush.msra.mxu0 %v61
  %196 = vmatpush.msra.mxu0 %v57
  %197 = vmatpush.msra.mxu0 %v53
  %198 = vmatpush.msra.mxu0 %v49
  %199 = vmatpush.msra.mxu0 %v45
  %200 = vmatpush.msra.mxu0 %v41
  %201 = vmatpush.msra.mxu0 %v37
  %202 = vmatpush.msra.mxu0 %v33
  %203 = vmatmul.f32.gmra.mxu0 %v23
  %v204 = vpop.f32.mrf.mxu0
  %v205 = vadd.f32 %v99, %v204
  %206 = vmatmul.f32.gmra.mxu0 %v24
  %v207 = vpop.f32.mrf.mxu0
  %v208 = vadd.f32 %v99, %v207
  %209 = vmatmul.f32.gmra.mxu0 %v25
  %v210 = vpop.f32.mrf.mxu0
  %v211 = vadd.f32 %v99, %v210
  %212 = vmatmul.f32.gmra.mxu0 %v26
  %v213 = vpop.f32.mrf.mxu0
  %v214 = vadd.f32 %v99, %v213
  %215 = vmatmul.f32.gmra.mxu0 %v27
  %v216 = vpop.f32.mrf.mxu0
  %v217 = vadd.f32 %v99, %v216
  %218 = vmatmul.f32.gmra.mxu0 %v28
  %v219 = vpop.f32.mrf.mxu0
  %v220 = vadd.f32 %v99, %v219
  %221 = vmatmul.f32.gmra.mxu0 %v29
  %v222 = vpop.f32.mrf.mxu0
  %v223 = vadd.f32 %v99, %v222
  %224 = vmatmul.f32.gmra.mxu0 %v30
  %v225 = vpop.f32.mrf.mxu0
  %v226 = vadd.f32 %v99, %v225
  %227 = vdwg.mxu0
  %228 = vmatpush.msra.mxu0 %v94
  %229 = vmatpush.msra.mxu0 %v90
  %230 = vmatpush.msra.mxu0 %v86
  %231 = vmatpush.msra.mxu0 %v82
  %232 = vmatpush.msra.mxu0 %v78
  %233 = vmatpush.msra.mxu0 %v74
  %234 = vmatpush.msra.mxu0 %v70
  %235 = vmatpush.msra.mxu0 %v66
  %236 = vmatpush.msra.mxu0 %v62
  %237 = vmatpush.msra.mxu0 %v58
  %238 = vmatpush.msra.mxu0 %v54
  %239 = vmatpush.msra.mxu0 %v50
  %240 = vmatpush.msra.mxu0 %v46
  %241 = vmatpush.msra.mxu0 %v42
  %242 = vmatpush.msra.mxu0 %v38
  %243 = vmatpush.msra.mxu0 %v34
  %244 = vmatmul.f32.gmra.mxu0 %v23
  %v245 = vpop.f32.mrf.mxu0
  %v246 = vadd.f32 %v100, %v245
  %247 = vmatmul.f32.gmra.mxu0 %v24
  %v248 = vpop.f32.mrf.mxu0
  %v249 = vadd.f32 %v100, %v248
  %250 = vmatmul.f32.gmra.mxu0 %v25
  %v251 = vpop.f32.mrf.mxu0
  %v252 = vadd.f32 %v100, %v251
  %253 = vmatmul.f32.gmra.mxu0 %v26
  %v254 = vpop.f32.mrf.mxu0
  %v255 = vadd.f32 %v100, %v254
  %256 = vmatmul.f32.gmra.mxu0 %v27
  %v257 = vpop.f32.mrf.mxu0
  %v258 = vadd.f32 %v100, %v257
  %259 = vmatmul.f32.gmra.mxu0 %v28
  %v260 = vpop.f32.mrf.mxu0
  %v261 = vadd.f32 %v100, %v260
  %262 = vmatmul.f32.gmra.mxu0 %v29
  %v263 = vpop.f32.mrf.mxu0
  %v264 = vadd.f32 %v100, %v263
  %265 = vmatmul.f32.gmra.mxu0 %v30
  %v266 = vpop.f32.mrf.mxu0
  %v267 = vadd.f32 %v100, %v266
  %268 = vdwg.mxu0
  %269 = vst [vmem:[#allocation2] sm:$0xff] %v123
  %270 = vst [vmem:[#allocation2 + $0x8] sm:$0xff] %v164
  %271 = vst [vmem:[#allocation2 + $0x10] sm:$0xff] %v205
  %272 = vst [vmem:[#allocation2 + $0x18] sm:$0xff] %v246
  %273 = vst [vmem:[#allocation2 + $0x20] sm:$0xff] %v126
  %274 = vst [vmem:[#allocation2 + $0x28] sm:$0xff] %v167
  %275 = vst [vmem:[#allocation2 + $0x30] sm:$0xff] %v208
  %276 = vst [vmem:[#allocation2 + $0x38] sm:$0xff] %v249
  %277 = vst [vmem:[#allocation2 + $0x40] sm:$0xff] %v129
  %278 = vst [vmem:[#allocation2 + $0x48] sm:$0xff] %v170
  %279 = vst [vmem:[#allocation2 + $0x50] sm:$0xff] %v211
  %280 = vst [vmem:[#allocation2 + $0x58] sm:$0xff] %v252
  %281 = vst [vmem:[#allocation2 + $0x60] sm:$0xff] %v132
  %282 = vst [vmem:[#allocation2 + $0x68] sm:$0xff] %v173
  %283 = vst [vmem:[#allocation2 + $0x70] sm:$0xff] %v214
  %284 = vst [vmem:[#allocation2 + $0x78] sm:$0xff] %v255
  %285 = vst [vmem:[#allocation2 + $0x80] sm:$0xff] %v135
  %286 = vst [vmem:[#allocation2 + $0x88] sm:$0xff] %v176
  %287 = vst [vmem:[#allocation2 + $0x90] sm:$0xff] %v217
  %288 = vst [vmem:[#allocation2 + $0x98] sm:$0xff] %v258
  %289 = vst [vmem:[#allocation2 + $0xa0] sm:$0xff] %v138
  %290 = vst [vmem:[#allocation2 + $0xa8] sm:$0xff] %v179
  %291 = vst [vmem:[#allocation2 + $0xb0] sm:$0xff] %v220
  %292 = vst [vmem:[#allocation2 + $0xb8] sm:$0xff] %v261
  %293 = vst [vmem:[#allocation2 + $0xc0] sm:$0xff] %v141
  %294 = vst [vmem:[#allocation2 + $0xc8] sm:$0xff] %v182
  %295 = vst [vmem:[#allocation2 + $0xd0] sm:$0xff] %v223
  %296 = vst [vmem:[#allocation2 + $0xd8] sm:$0xff] %v264
  %297 = vst [vmem:[#allocation2 + $0xe0] sm:$0xff] %v144
  %298 = vst [vmem:[#allocation2 + $0xe8] sm:$0xff] %v185
  %299 = vst [vmem:[#allocation2 + $0xf0] sm:$0xff] %v226
  %300 = vst [vmem:[#allocation2 + $0xf8] sm:$0xff] %v267
  %v301 = vld [vmem:[%s2] sm:$0xff]
  %v302 = vld [vmem:[%s2 + $0x8] sm:$0xff]
  %v303 = vld [vmem:[%s2 + $0x10] sm:$0xff]
  %v304 = vld [vmem:[%s2 + $0x18] sm:$0xff]
  %v305 = vld [vmem:[%s2 + $0x20] sm:$0xff]
  %v306 = vld [vmem:[%s2 + $0x28] sm:$0xff]
  %v307 = vld [vmem:[%s2 + $0x30] sm:$0xff]
  %v308 = vld [vmem:[%s2 + $0x38] sm:$0xff]
  %v309 = vld [vmem:[%s2 + $0x40] sm:$0xff]
  %v310 = vld [vmem:[%s2 + $0x48] sm:$0xff]
  %v311 = vld [vmem:[%s2 + $0x50] sm:$0xff]
  %v312 = vld [vmem:[%s2 + $0x58] sm:$0xff]
  %v313 = vld [vmem:[%s2 + $0x60] sm:$0xff]
  %v314 = vld [vmem:[%s2 + $0x68] sm:$0xff]
  %v315 = vld [vmem:[%s2 + $0x70] sm:$0xff]
  %v316 = vld [vmem:[%s2 + $0x78] sm:$0xff]
  %v317 = vld [vmem:[%s2 + $0x80] sm:$0xff]
  %v318 = vld [vmem:[%s2 + $0x88] sm:$0xff]
  %v319 = vld [vmem:[%s2 + $0x90] sm:$0xff]
  %v320 = vld [vmem:[%s2 + $0x98] sm:$0xff]
  %v321 = vld [vmem:[%s2 + $0xa0] sm:$0xff]
  %v322 = vld [vmem:[%s2 + $0xa8] sm:$0xff]
  %v323 = vld [vmem:[%s2 + $0xb0] sm:$0xff]
  %v324 = vld [vmem:[%s2 + $0xb8] sm:$0xff]
  %v325 = vld [vmem:[%s2 + $0xc0] sm:$0xff]
  %v326 = vld [vmem:[%s2 + $0xc8] sm:$0xff]
  %v327 = vld [vmem:[%s2 + $0xd0] sm:$0xff]
  %v328 = vld [vmem:[%s2 + $0xd8] sm:$0xff]
  %v329 = vld [vmem:[%s2 + $0xe0] sm:$0xff]
  %v330 = vld [vmem:[%s2 + $0xe8] sm:$0xff]
  %v331 = vld [vmem:[%s2 + $0xf0] sm:$0xff]
  %v332 = vld [vmem:[%s2 + $0xf8] sm:$0xff]
  %v333 = vld [vmem:[%s2 + $0x100] sm:$0xff]
  %v334 = vld [vmem:[%s2 + $0x108] sm:$0xff]
  %v335 = vld [vmem:[%s2 + $0x110] sm:$0xff]
  %v336 = vld [vmem:[%s2 + $0x118] sm:$0xff]
  %v337 = vld [vmem:[%s2 + $0x120] sm:$0xff]
  %v338 = vld [vmem:[%s2 + $0x128] sm:$0xff]
  %v339 = vld [vmem:[%s2 + $0x130] sm:$0xff]
  %v340 = vld [vmem:[%s2 + $0x138] sm:$0xff]
  %v341 = vld [vmem:[%s2 + $0x140] sm:$0xff]
  %v342 = vld [vmem:[%s2 + $0x148] sm:$0xff]
  %v343 = vld [vmem:[%s2 + $0x150] sm:$0xff]
  %v344 = vld [vmem:[%s2 + $0x158] sm:$0xff]
  %v345 = vld [vmem:[%s2 + $0x160] sm:$0xff]
  %v346 = vld [vmem:[%s2 + $0x168] sm:$0xff]
  %v347 = vld [vmem:[%s2 + $0x170] sm:$0xff]
  %v348 = vld [vmem:[%s2 + $0x178] sm:$0xff]
  %v349 = vld [vmem:[%s2 + $0x180] sm:$0xff]
  %v350 = vld [vmem:[%s2 + $0x188] sm:$0xff]
  %v351 = vld [vmem:[%s2 + $0x190] sm:$0xff]
  %v352 = vld [vmem:[%s2 + $0x198] sm:$0xff]
  %v353 = vld [vmem:[%s2 + $0x1a0] sm:$0xff]
  %v354 = vld [vmem:[%s2 + $0x1a8] sm:$0xff]
  %v355 = vld [vmem:[%s2 + $0x1b0] sm:$0xff]
  %v356 = vld [vmem:[%s2 + $0x1b8] sm:$0xff]
  %v357 = vld [vmem:[%s2 + $0x1c0] sm:$0xff]
  %v358 = vld [vmem:[%s2 + $0x1c8] sm:$0xff]
  %v359 = vld [vmem:[%s2 + $0x1d0] sm:$0xff]
  %v360 = vld [vmem:[%s2 + $0x1d8] sm:$0xff]
  %v361 = vld [vmem:[%s2 + $0x1e0] sm:$0xff]
  %v362 = vld [vmem:[%s2 + $0x1e8] sm:$0xff]
  %v363 = vld [vmem:[%s2 + $0x1f0] sm:$0xff]
  %v364 = vld [vmem:[%s2 + $0x1f8] sm:$0xff]
  %v365 = vlaneseq
  %v366 = vand.u32 %v365, 127
  %v367 = vadd.s32 %v366, 128
  %v368 = vadd.s32 %v366, 256
  %v369 = vadd.s32 %v366, 384
  %vm370 = vcmp.ge.s32.totalorder %v366, 256
  %vm371 = vcmp.ge.s32.totalorder %v367, 256
  %vm372 = vcmp.ge.s32.totalorder %v368, 256
  %vm373 = vcmp.ge.s32.totalorder %v369, 256
  %vm374 = vcmp.lt.s32.totalorder %v366, 384
  %vm375 = vcmp.lt.s32.totalorder %v367, 384
  %vm376 = vcmp.lt.s32.totalorder %v368, 384
  %vm377 = vcmp.lt.s32.totalorder %v369, 384
  %vm378 = vmand %vm370, %vm374
  %vm379 = vmand %vm371, %vm375
  %vm380 = vmand %vm372, %vm376
  %vm381 = vmand %vm373, %vm377
  %v382 = vld [vmem:[#allocation3] sm:$0xff]
  %v383 = vld [vmem:[#allocation4] sm:$0xff]
  %s384 = smul.u32 0, 4
  %s385 = smul.addr %s384, 8
  %s386 = scalar_lea.vmem [#allocation2], %s385
  %v387 = vld [vmem:[%s386] sm:$0xff]
  %v388 = vld [vmem:[%s386 + $0x8] sm:$0xff]
  %v389 = vld [vmem:[%s386 + $0x10] sm:$0xff]
  %v390 = vld [vmem:[%s386 + $0x18] sm:$0xff]
  %391 = vmatpush.msra.mxu0 %v361
  %392 = vmatpush.msra.mxu0 %v357
  %393 = vmatpush.msra.mxu0 %v353
  %394 = vmatpush.msra.mxu0 %v349
  %395 = vmatpush.msra.mxu0 %v345
  %396 = vmatpush.msra.mxu0 %v341
  %397 = vmatpush.msra.mxu0 %v337
  %398 = vmatpush.msra.mxu0 %v333
  %399 = vmatpush.msra.mxu0 %v329
  %400 = vmatpush.msra.mxu0 %v325
  %401 = vmatpush.msra.mxu0 %v321
  %402 = vmatpush.msra.mxu0 %v317
  %403 = vmatpush.msra.mxu0 %v313
  %404 = vmatpush.msra.mxu0 %v309
  %405 = vmatpush.msra.mxu0 %v305
  %406 = vmatpush.msra.mxu0 %v301
  %407 = vmatmul.f32.gmra.mxu0 %v382
  %v408 = vpop.f32.mrf.mxu0
  %v409 = vadd.f32 0.0, %v408
  %410 = vdwg.mxu0
  %411 = vmatpush.msra.mxu0 %v362
  %412 = vmatpush.msra.mxu0 %v358
  %413 = vmatpush.msra.mxu0 %v354
  %414 = vmatpush.msra.mxu0 %v350
  %415 = vmatpush.msra.mxu0 %v346
  %416 = vmatpush.msra.mxu0 %v342
  %417 = vmatpush.msra.mxu0 %v338
  %418 = vmatpush.msra.mxu0 %v334
  %419 = vmatpush.msra.mxu0 %v330
  %420 = vmatpush.msra.mxu0 %v326
  %421 = vmatpush.msra.mxu0 %v322
  %422 = vmatpush.msra.mxu0 %v318
  %423 = vmatpush.msra.mxu0 %v314
  %424 = vmatpush.msra.mxu0 %v310
  %425 = vmatpush.msra.mxu0 %v306
  %426 = vmatpush.msra.mxu0 %v302
  %427 = vmatmul.f32.gmra.mxu0 %v382
  %v428 = vpop.f32.mrf.mxu0
  %v429 = vadd.f32 0.0, %v428
  %430 = vdwg.mxu0
  %431 = vmatpush.msra.mxu0 %v363
  %432 = vmatpush.msra.mxu0 %v359
  %433 = vmatpush.msra.mxu0 %v355
  %434 = vmatpush.msra.mxu0 %v351
  %435 = vmatpush.msra.mxu0 %v347
  %436 = vmatpush.msra.mxu0 %v343
  %437 = vmatpush.msra.mxu0 %v339
  %438 = vmatpush.msra.mxu0 %v335
  %439 = vmatpush.msra.mxu0 %v331
  %440 = vmatpush.msra.mxu0 %v327
  %441 = vmatpush.msra.mxu0 %v323
  %442 = vmatpush.msra.mxu0 %v319
  %443 = vmatpush.msra.mxu0 %v315
  %444 = vmatpush.msra.mxu0 %v311
  %445 = vmatpush.msra.mxu0 %v307
  %446 = vmatpush.msra.mxu0 %v303
  %447 = vmatmul.f32.gmra.mxu0 %v382
  %v448 = vpop.f32.mrf.mxu0
  %v449 = vadd.f32 0.0, %v448
  %450 = vdwg.mxu0
  %451 = vmatpush.msra.mxu0 %v364
  %452 = vmatpush.msra.mxu0 %v360
  %453 = vmatpush.msra.mxu0 %v356
  %454 = vmatpush.msra.mxu0 %v352
  %455 = vmatpush.msra.mxu0 %v348
  %456 = vmatpush.msra.mxu0 %v344
  %457 = vmatpush.msra.mxu0 %v340
  %458 = vmatpush.msra.mxu0 %v336
  %459 = vmatpush.msra.mxu0 %v332
  %460 = vmatpush.msra.mxu0 %v328
  %461 = vmatpush.msra.mxu0 %v324
  %462 = vmatpush.msra.mxu0 %v320
  %463 = vmatpush.msra.mxu0 %v316
  %464 = vmatpush.msra.mxu0 %v312
  %465 = vmatpush.msra.mxu0 %v308
  %466 = vmatpush.msra.mxu0 %v304
  %467 = vmatmul.f32.gmra.mxu0 %v382
  %v468 = vpop.f32.mrf.mxu0
  %v469 = vadd.f32 0.0, %v468
  %470 = vdwg.mxu0
  %v471 = vadd.f32 %v387, %v409
  %v472 = vadd.f32 %v388, %v429
  %v473 = vadd.f32 %v389, %v449
  %v474 = vadd.f32 %v390, %v469
  %v475 = vmul.f32 %v471, 0.5
  %v476 = vmul.f32 %v472, 0.5
  %v477 = vmul.f32 %v473, 0.5
  %v478 = vmul.f32 %v474, 0.5
  %v479 = vsel %vm378, %v471, %v475
  %v480 = vsel %vm379, %v472, %v476
  %v481 = vsel %vm380, %v473, %v477
  %v482 = vsel %vm381, %v474, %v478
  %v483 = vtanh.pop %v479
  %v484 = vtanh.pop %v480
  %v485 = vtanh.pop %v481
  %v486 = vtanh.pop %v482
  %v487 = vmul.f32 %v483, 0.5
  %v488 = vmul.f32 %v484, 0.5
  %v489 = vmul.f32 %v485, 0.5
  %v490 = vmul.f32 %v486, 0.5
  %v491 = vadd.f32 %v487, 0.5
  %v492 = vadd.f32 %v488, 0.5
  %v493 = vadd.f32 %v489, 0.5
  %v494 = vadd.f32 %v490, 0.5
  %v495 = vsel %vm378, %v483, %v491
  %v496 = vsel %vm379, %v484, %v492
  %v497 = vsel %vm380, %v485, %v493
  %v498 = vsel %vm381, %v486, %v494
  %v499 = vmul.f32 %v496, %v383
  %v500 = vmul.f32 %v495, %v497
  %v501 = vadd.f32 %v499, %v500
  %v502 = vtanh.pop %v501
  %v503 = vmul.f32 %v498, %v502
  %504 = vst [vmem:[%s4] sm:$0xff] %v503
  %s505 = smul.u32 1, 4
  %s506 = smul.addr %s505, 8
  %s507 = scalar_lea.vmem [#allocation2], %s506
  %v508 = vld [vmem:[%s507] sm:$0xff]
  %v509 = vld [vmem:[%s507 + $0x8] sm:$0xff]
  %v510 = vld [vmem:[%s507 + $0x10] sm:$0xff]
  %v511 = vld [vmem:[%s507 + $0x18] sm:$0xff]
  %512 = vmatpush.msra.mxu0 %v361
  %513 = vmatpush.msra.mxu0 %v357
  %514 = vmatpush.msra.mxu0 %v353
  %515 = vmatpush.msra.mxu0 %v349
  %516 = vmatpush.msra.mxu0 %v345
  %517 = vmatpush.msra.mxu0 %v341
  %518 = vmatpush.msra.mxu0 %v337
  %519 = vmatpush.msra.mxu0 %v333
  %520 = vmatpush.msra.mxu0 %v329
  %521 = vmatpush.msra.mxu0 %v325
  %522 = vmatpush.msra.mxu0 %v321
  %523 = vmatpush.msra.mxu0 %v317
  %524 = vmatpush.msra.mxu0 %v313
  %525 = vmatpush.msra.mxu0 %v309
  %526 = vmatpush.msra.mxu0 %v305
  %527 = vmatpush.msra.mxu0 %v301
  %528 = vmatmul.f32.gmra.mxu0 %v503
  %v529 = vpop.f32.mrf.mxu0
  %v530 = vadd.f32 0.0, %v529
  %531 = vdwg.mxu0
  %532 = vmatpush.msra.mxu0 %v362
  %533 = vmatpush.msra.mxu0 %v358
  %534 = vmatpush.msra.mxu0 %v354
  %535 = vmatpush.msra.mxu0 %v350
  %536 = vmatpush.msra.mxu0 %v346
  %537 = vmatpush.msra.mxu0 %v342
  %538 = vmatpush.msra.mxu0 %v338
  %539 = vmatpush.msra.mxu0 %v334
  %540 = vmatpush.msra.mxu0 %v330
  %541 = vmatpush.msra.mxu0 %v326
  %542 = vmatpush.msra.mxu0 %v322
  %543 = vmatpush.msra.mxu0 %v318
  %544 = vmatpush.msra.mxu0 %v314
  %545 = vmatpush.msra.mxu0 %v310
  %546 = vmatpush.msra.mxu0 %v306
  %547 = vmatpush.msra.mxu0 %v302
  %548 = vmatmul.f32.gmra.mxu0 %v503
  %v549 = vpop.f32.mrf.mxu0
  %v550 = vadd.f32 0.0, %v549
  %551 = vdwg.mxu0
  %552 = vmatpush.msra.mxu0 %v363
  %553 = vmatpush.msra.mxu0 %v359
  %554 = vmatpush.msra.mxu0 %v355
  %555 = vmatpush.msra.mxu0 %v351
  %556 = vmatpush.msra.mxu0 %v347
  %557 = vmatpush.msra.mxu0 %v343
  %558 = vmatpush.msra.mxu0 %v339
  %559 = vmatpush.msra.mxu0 %v335
  %560 = vmatpush.msra.mxu0 %v331
  %561 = vmatpush.msra.mxu0 %v327
  %562 = vmatpush.msra.mxu0 %v323
  %563 = vmatpush.msra.mxu0 %v319
  %564 = vmatpush.msra.mxu0 %v315
  %565 = vmatpush.msra.mxu0 %v311
  %566 = vmatpush.msra.mxu0 %v307
  %567 = vmatpush.msra.mxu0 %v303
  %568 = vmatmul.f32.gmra.mxu0 %v503
  %v569 = vpop.f32.mrf.mxu0
  %v570 = vadd.f32 0.0, %v569
  %571 = vdwg.mxu0
  %572 = vmatpush.msra.mxu0 %v364
  %573 = vmatpush.msra.mxu0 %v360
  %574 = vmatpush.msra.mxu0 %v356
  %575 = vmatpush.msra.mxu0 %v352
  %576 = vmatpush.msra.mxu0 %v348
  %577 = vmatpush.msra.mxu0 %v344
  %578 = vmatpush.msra.mxu0 %v340
  %579 = vmatpush.msra.mxu0 %v336
  %580 = vmatpush.msra.mxu0 %v332
  %581 = vmatpush.msra.mxu0 %v328
  %582 = vmatpush.msra.mxu0 %v324
  %583 = vmatpush.msra.mxu0 %v320
  %584 = vmatpush.msra.mxu0 %v316
  %585 = vmatpush.msra.mxu0 %v312
  %586 = vmatpush.msra.mxu0 %v308
  %587 = vmatpush.msra.mxu0 %v304
  %588 = vmatmul.f32.gmra.mxu0 %v503
  %v589 = vpop.f32.mrf.mxu0
  %v590 = vadd.f32 0.0, %v589
  %591 = vdwg.mxu0
  %v592 = vadd.f32 %v508, %v530
  %v593 = vadd.f32 %v509, %v550
  %v594 = vadd.f32 %v510, %v570
  %v595 = vadd.f32 %v511, %v590
  %v596 = vmul.f32 %v592, 0.5
  %v597 = vmul.f32 %v593, 0.5
  %v598 = vmul.f32 %v594, 0.5
  %v599 = vmul.f32 %v595, 0.5
  %v600 = vsel %vm378, %v592, %v596
  %v601 = vsel %vm379, %v593, %v597
  %v602 = vsel %vm380, %v594, %v598
  %v603 = vsel %vm381, %v595, %v599
  %v604 = vtanh.pop %v600
  %v605 = vtanh.pop %v601
  %v606 = vtanh.pop %v602
  %v607 = vtanh.pop %v603
  %v608 = vmul.f32 %v604, 0.5
  %v609 = vmul.f32 %v605, 0.5
  %v610 = vmul.f32 %v606, 0.5
  %v611 = vmul.f32 %v607, 0.5
  %v612 = vadd.f32 %v608, 0.5
  %v613 = vadd.f32 %v609, 0.5
  %v614 = vadd.f32 %v610, 0.5
  %v615 = vadd.f32 %v611, 0.5
  %v616 = vsel %vm378, %v604, %v612
  %v617 = vsel %vm379, %v605, %v613
  %v618 = vsel %vm380, %v606, %v614
  %v619 = vsel %vm381, %v607, %v615
  %v620 = vmul.f32 %v617, %v501
  %v621 = vmul.f32 %v616, %v618
  %v622 = vadd.f32 %v620, %v621
  %v623 = vtanh.pop %v622
  %v624 = vmul.f32 %v619, %v623
  %s625 = scalar_lea.vmem %s4, 8
  %626 = vst [vmem:[%s625] sm:$0xff] %v624
  %s627 = smul.u32 2, 4
  %s628 = smul.addr %s627, 8
  %s629 = scalar_lea.vmem [#allocation2], %s628
  %v630 = vld [vmem:[%s629] sm:$0xff]
  %v631 = vld [vmem:[%s629 + $0x8] sm:$0xff]
  %v632 = vld [vmem:[%s629 + $0x10] sm:$0xff]
  %v633 = vld [vmem:[%s629 + $0x18] sm:$0xff]
  %634 = vmatpush.msra.mxu0 %v361
  %635 = vmatpush.msra.mxu0 %v357
  %636 = vmatpush.msra.mxu0 %v353
  %637 = vmatpush.msra.mxu0 %v349
  %638 = vmatpush.msra.mxu0 %v345
  %639 = vmatpush.msra.mxu0 %v341
  %640 = vmatpush.msra.mxu0 %v337
  %641 = vmatpush.msra.mxu0 %v333
  %642 = vmatpush.msra.mxu0 %v329
  %643 = vmatpush.msra.mxu0 %v325
  %644 = vmatpush.msra.mxu0 %v321
  %645 = vmatpush.msra.mxu0 %v317
  %646 = vmatpush.msra.mxu0 %v313
  %647 = vmatpush.msra.mxu0 %v309
  %648 = vmatpush.msra.mxu0 %v305
  %649 = vmatpush.msra.mxu0 %v301
  %650 = vmatmul.f32.gmra.mxu0 %v624
  %v651 = vpop.f32.mrf.mxu0
  %v652 = vadd.f32 0.0, %v651
  %653 = vdwg.mxu0
  %654 = vmatpush.msra.mxu0 %v362
  %655 = vmatpush.msra.mxu0 %v358
  %656 = vmatpush.msra.mxu0 %v354
  %657 = vmatpush.msra.mxu0 %v350
  %658 = vmatpush.msra.mxu0 %v346
  %659 = vmatpush.msra.mxu0 %v342
  %660 = vmatpush.msra.mxu0 %v338
  %661 = vmatpush.msra.mxu0 %v334
  %662 = vmatpush.msra.mxu0 %v330
  %663 = vmatpush.msra.mxu0 %v326
  %664 = vmatpush.msra.mxu0 %v322
  %665 = vmatpush.msra.mxu0 %v318
  %666 = vmatpush.msra.mxu0 %v314
  %667 = vmatpush.msra.mxu0 %v310
  %668 = vmatpush.msra.mxu0 %v306
  %669 = vmatpush.msra.mxu0 %v302
  %670 = vmatmul.f32.gmra.mxu0 %v624
  %v671 = vpop.f32.mrf.mxu0
  %v672 = vadd.f32 0.0, %v671
  %673 = vdwg.mxu0
  %674 = vmatpush.msra.mxu0 %v363
  %675 = vmatpush.msra.mxu0 %v359
  %676 = vmatpush.msra.mxu0 %v355
  %677 = vmatpush.msra.mxu0 %v351
  %678 = vmatpush.msra.mxu0 %v347
  %679 = vmatpush.msra.mxu0 %v343
  %680 = vmatpush.msra.mxu0 %v339
  %681 = vmatpush.msra.mxu0 %v335
  %682 = vmatpush.msra.mxu0 %v331
  %683 = vmatpush.msra.mxu0 %v327
  %684 = vmatpush.msra.mxu0 %v323
  %685 = vmatpush.msra.mxu0 %v319
  %686 = vmatpush.msra.mxu0 %v315
  %687 = vmatpush.msra.mxu0 %v311
  %688 = vmatpush.msra.mxu0 %v307
  %689 = vmatpush.msra.mxu0 %v303
  %690 = vmatmul.f32.gmra.mxu0 %v624
  %v691 = vpop.f32.mrf.mxu0
  %v692 = vadd.f32 0.0, %v691
  %693 = vdwg.mxu0
  %694 = vmatpush.msra.mxu0 %v364
  %695 = vmatpush.msra.mxu0 %v360
  %696 = vmatpush.msra.mxu0 %v356
  %697 = vmatpush.msra.mxu0 %v352
  %698 = vmatpush.msra.mxu0 %v348
  %699 = vmatpush.msra.mxu0 %v344
  %700 = vmatpush.msra.mxu0 %v340
  %701 = vmatpush.msra.mxu0 %v336
  %702 = vmatpush.msra.mxu0 %v332
  %703 = vmatpush.msra.mxu0 %v328
  %704 = vmatpush.msra.mxu0 %v324
  %705 = vmatpush.msra.mxu0 %v320
  %706 = vmatpush.msra.mxu0 %v316
  %707 = vmatpush.msra.mxu0 %v312
  %708 = vmatpush.msra.mxu0 %v308
  %709 = vmatpush.msra.mxu0 %v304
  %710 = vmatmul.f32.gmra.mxu0 %v624
  %v711 = vpop.f32.mrf.mxu0
  %v712 = vadd.f32 0.0, %v711
  %713 = vdwg.mxu0
  %v714 = vadd.f32 %v630, %v652
  %v715 = vadd.f32 %v631, %v672
  %v716 = vadd.f32 %v632, %v692
  %v717 = vadd.f32 %v633, %v712
  %v718 = vmul.f32 %v714, 0.5
  %v719 = vmul.f32 %v715, 0.5
  %v720 = vmul.f32 %v716, 0.5
  %v721 = vmul.f32 %v717, 0.5
  %v722 = vsel %vm378, %v714, %v718
  %v723 = vsel %vm379, %v715, %v719
  %v724 = vsel %vm380, %v716, %v720
  %v725 = vsel %vm381, %v717, %v721
  %v726 = vtanh.pop %v722
  %v727 = vtanh.pop %v723
  %v728 = vtanh.pop %v724
  %v729 = vtanh.pop %v725
  %v730 = vmul.f32 %v726, 0.5
  %v731 = vmul.f32 %v727, 0.5
  %v732 = vmul.f32 %v728, 0.5
  %v733 = vmul.f32 %v729, 0.5
  %v734 = vadd.f32 %v730, 0.5
  %v735 = vadd.f32 %v731, 0.5
  %v736 = vadd.f32 %v732, 0.5
  %v737 = vadd.f32 %v733, 0.5
  %v738 = vsel %vm378, %v726, %v734
  %v739 = vsel %vm379, %v727, %v735
  %v740 = vsel %vm380, %v728, %v736
  %v741 = vsel %vm381, %v729, %v737
  %v742 = vmul.f32 %v739, %v622
  %v743 = vmul.f32 %v738, %v740
  %v744 = vadd.f32 %v742, %v743
  %v745 = vtanh.pop %v744
  %v746 = vmul.f32 %v741, %v745
  %s747 = scalar_lea.vmem %s4, 16
  %748 = vst [vmem:[%s747] sm:$0xff] %v746
  %s749 = smul.u32 3, 4
  %s750 = smul.addr %s749, 8
  %s751 = scalar_lea.vmem [#allocation2], %s750
  %v752 = vld [vmem:[%s751] sm:$0xff]
  %v753 = vld [vmem:[%s751 + $0x8] sm:$0xff]
  %v754 = vld [vmem:[%s751 + $0x10] sm:$0xff]
  %v755 = vld [vmem:[%s751 + $0x18] sm:$0xff]
  %756 = vmatpush.msra.mxu0 %v361
  %757 = vmatpush.msra.mxu0 %v357
  %758 = vmatpush.msra.mxu0 %v353
  %759 = vmatpush.msra.mxu0 %v349
  %760 = vmatpush.msra.mxu0 %v345
  %761 = vmatpush.msra.mxu0 %v341
  %762 = vmatpush.msra.mxu0 %v337
  %763 = vmatpush.msra.mxu0 %v333
  %764 = vmatpush.msra.mxu0 %v329
  %765 = vmatpush.msra.mxu0 %v325
  %766 = vmatpush.msra.mxu0 %v321
  %767 = vmatpush.msra.mxu0 %v317
  %768 = vmatpush.msra.mxu0 %v313
  %769 = vmatpush.msra.mxu0 %v309
  %770 = vmatpush.msra.mxu0 %v305
  %771 = vmatpush.msra.mxu0 %v301
  %772 = vmatmul.f32.gmra.mxu0 %v746
  %v773 = vpop.f32.mrf.mxu0
  %v774 = vadd.f32 0.0, %v773
  %775 = vdwg.mxu0
  %776 = vmatpush.msra.mxu0 %v362
  %777 = vmatpush.msra.mxu0 %v358
  %778 = vmatpush.msra.mxu0 %v354
  %779 = vmatpush.msra.mxu0 %v350
  %780 = vmatpush.msra.mxu0 %v346
  %781 = vmatpush.msra.mxu0 %v342
  %782 = vmatpush.msra.mxu0 %v338
  %783 = vmatpush.msra.mxu0 %v334
  %784 = vmatpush.msra.mxu0 %v330
  %785 = vmatpush.msra.mxu0 %v326
  %786 = vmatpush.msra.mxu0 %v322
  %787 = vmatpush.msra.mxu0 %v318
  %788 = vmatpush.msra.mxu0 %v314
  %789 = vmatpush.msra.mxu0 %v310
  %790 = vmatpush.msra.mxu0 %v306
  %791 = vmatpush.msra.mxu0 %v302
  %792 = vmatmul.f32.gmra.mxu0 %v746
  %v793 = vpop.f32.mrf.mxu0
  %v794 = vadd.f32 0.0, %v793
  %795 = vdwg.mxu0
  %796 = vmatpush.msra.mxu0 %v363
  %797 = vmatpush.msra.mxu0 %v359
  %798 = vmatpush.msra.mxu0 %v355
  %799 = vmatpush.msra.mxu0 %v351
  %800 = vmatpush.msra.mxu0 %v347
  %801 = vmatpush.msra.mxu0 %v343
  %802 = vmatpush.msra.mxu0 %v339
  %803 = vmatpush.msra.mxu0 %v335
  %804 = vmatpush.msra.mxu0 %v331
  %805 = vmatpush.msra.mxu0 %v327
  %806 = vmatpush.msra.mxu0 %v323
  %807 = vmatpush.msra.mxu0 %v319
  %808 = vmatpush.msra.mxu0 %v315
  %809 = vmatpush.msra.mxu0 %v311
  %810 = vmatpush.msra.mxu0 %v307
  %811 = vmatpush.msra.mxu0 %v303
  %812 = vmatmul.f32.gmra.mxu0 %v746
  %v813 = vpop.f32.mrf.mxu0
  %v814 = vadd.f32 0.0, %v813
  %815 = vdwg.mxu0
  %816 = vmatpush.msra.mxu0 %v364
  %817 = vmatpush.msra.mxu0 %v360
  %818 = vmatpush.msra.mxu0 %v356
  %819 = vmatpush.msra.mxu0 %v352
  %820 = vmatpush.msra.mxu0 %v348
  %821 = vmatpush.msra.mxu0 %v344
  %822 = vmatpush.msra.mxu0 %v340
  %823 = vmatpush.msra.mxu0 %v336
  %824 = vmatpush.msra.mxu0 %v332
  %825 = vmatpush.msra.mxu0 %v328
  %826 = vmatpush.msra.mxu0 %v324
  %827 = vmatpush.msra.mxu0 %v320
  %828 = vmatpush.msra.mxu0 %v316
  %829 = vmatpush.msra.mxu0 %v312
  %830 = vmatpush.msra.mxu0 %v308
  %831 = vmatpush.msra.mxu0 %v304
  %832 = vmatmul.f32.gmra.mxu0 %v746
  %v833 = vpop.f32.mrf.mxu0
  %v834 = vadd.f32 0.0, %v833
  %835 = vdwg.mxu0
  %v836 = vadd.f32 %v752, %v774
  %v837 = vadd.f32 %v753, %v794
  %v838 = vadd.f32 %v754, %v814
  %v839 = vadd.f32 %v755, %v834
  %v840 = vmul.f32 %v836, 0.5
  %v841 = vmul.f32 %v837, 0.5
  %v842 = vmul.f32 %v838, 0.5
  %v843 = vmul.f32 %v839, 0.5
  %v844 = vsel %vm378, %v836, %v840
  %v845 = vsel %vm379, %v837, %v841
  %v846 = vsel %vm380, %v838, %v842
  %v847 = vsel %vm381, %v839, %v843
  %v848 = vtanh.pop %v844
  %v849 = vtanh.pop %v845
  %v850 = vtanh.pop %v846
  %v851 = vtanh.pop %v847
  %v852 = vmul.f32 %v848, 0.5
  %v853 = vmul.f32 %v849, 0.5
  %v854 = vmul.f32 %v850, 0.5
  %v855 = vmul.f32 %v851, 0.5
  %v856 = vadd.f32 %v852, 0.5
  %v857 = vadd.f32 %v853, 0.5
  %v858 = vadd.f32 %v854, 0.5
  %v859 = vadd.f32 %v855, 0.5
  %v860 = vsel %vm378, %v848, %v856
  %v861 = vsel %vm379, %v849, %v857
  %v862 = vsel %vm380, %v850, %v858
  %v863 = vsel %vm381, %v851, %v859
  %v864 = vmul.f32 %v861, %v744
  %v865 = vmul.f32 %v860, %v862
  %v866 = vadd.f32 %v864, %v865
  %v867 = vtanh.pop %v866
  %v868 = vmul.f32 %v863, %v867
  %s869 = scalar_lea.vmem %s4, 24
  %870 = vst [vmem:[%s869] sm:$0xff] %v868
  %s871 = smul.u32 4, 4
  %s872 = smul.addr %s871, 8
  %s873 = scalar_lea.vmem [#allocation2], %s872
  %v874 = vld [vmem:[%s873] sm:$0xff]
  %v875 = vld [vmem:[%s873 + $0x8] sm:$0xff]
  %v876 = vld [vmem:[%s873 + $0x10] sm:$0xff]
  %v877 = vld [vmem:[%s873 + $0x18] sm:$0xff]
  %878 = vmatpush.msra.mxu0 %v361
  %879 = vmatpush.msra.mxu0 %v357
  %880 = vmatpush.msra.mxu0 %v353
  %881 = vmatpush.msra.mxu0 %v349
  %882 = vmatpush.msra.mxu0 %v345
  %883 = vmatpush.msra.mxu0 %v341
  %884 = vmatpush.msra.mxu0 %v337
  %885 = vmatpush.msra.mxu0 %v333
  %886 = vmatpush.msra.mxu0 %v329
  %887 = vmatpush.msra.mxu0 %v325
  %888 = vmatpush.msra.mxu0 %v321
  %889 = vmatpush.msra.mxu0 %v317
  %890 = vmatpush.msra.mxu0 %v313
  %891 = vmatpush.msra.mxu0 %v309
  %892 = vmatpush.msra.mxu0 %v305
  %893 = vmatpush.msra.mxu0 %v301
  %894 = vmatmul.f32.gmra.mxu0 %v868
  %v895 = vpop.f32.mrf.mxu0
  %v896 = vadd.f32 0.0, %v895
  %897 = vdwg.mxu0
  %898 = vmatpush.msra.mxu0 %v362
  %899 = vmatpush.msra.mxu0 %v358
  %900 = vmatpush.msra.mxu0 %v354
  %901 = vmatpush.msra.mxu0 %v350
  %902 = vmatpush.msra.mxu0 %v346
  %903 = vmatpush.msra.mxu0 %v342
  %904 = vmatpush.msra.mxu0 %v338
  %905 = vmatpush.msra.mxu0 %v334
  %906 = vmatpush.msra.mxu0 %v330
  %907 = vmatpush.msra.mxu0 %v326
  %908 = vmatpush.msra.mxu0 %v322
  %909 = vmatpush.msra.mxu0 %v318
  %910 = vmatpush.msra.mxu0 %v314
  %911 = vmatpush.msra.mxu0 %v310
  %912 = vmatpush.msra.mxu0 %v306
  %913 = vmatpush.msra.mxu0 %v302
  %914 = vmatmul.f32.gmra.mxu0 %v868
  %v915 = vpop.f32.mrf.mxu0
  %v916 = vadd.f32 0.0, %v915
  %917 = vdwg.mxu0
  %918 = vmatpush.msra.mxu0 %v363
  %919 = vmatpush.msra.mxu0 %v359
  %920 = vmatpush.msra.mxu0 %v355
  %921 = vmatpush.msra.mxu0 %v351
  %922 = vmatpush.msra.mxu0 %v347
  %923 = vmatpush.msra.mxu0 %v343
  %924 = vmatpush.msra.mxu0 %v339
  %925 = vmatpush.msra.mxu0 %v335
  %926 = vmatpush.msra.mxu0 %v331
  %927 = vmatpush.msra.mxu0 %v327
  %928 = vmatpush.msra.mxu0 %v323
  %929 = vmatpush.msra.mxu0 %v319
  %930 = vmatpush.msra.mxu0 %v315
  %931 = vmatpush.msra.mxu0 %v311
  %932 = vmatpush.msra.mxu0 %v307
  %933 = vmatpush.msra.mxu0 %v303
  %934 = vmatmul.f32.gmra.mxu0 %v868
  %v935 = vpop.f32.mrf.mxu0
  %v936 = vadd.f32 0.0, %v935
  %937 = vdwg.mxu0
  %938 = vmatpush.msra.mxu0 %v364
  %939 = vmatpush.msra.mxu0 %v360
  %940 = vmatpush.msra.mxu0 %v356
  %941 = vmatpush.msra.mxu0 %v352
  %942 = vmatpush.msra.mxu0 %v348
  %943 = vmatpush.msra.mxu0 %v344
  %944 = vmatpush.msra.mxu0 %v340
  %945 = vmatpush.msra.mxu0 %v336
  %946 = vmatpush.msra.mxu0 %v332
  %947 = vmatpush.msra.mxu0 %v328
  %948 = vmatpush.msra.mxu0 %v324
  %949 = vmatpush.msra.mxu0 %v320
  %950 = vmatpush.msra.mxu0 %v316
  %951 = vmatpush.msra.mxu0 %v312
  %952 = vmatpush.msra.mxu0 %v308
  %953 = vmatpush.msra.mxu0 %v304
  %954 = vmatmul.f32.gmra.mxu0 %v868
  %v955 = vpop.f32.mrf.mxu0
  %v956 = vadd.f32 0.0, %v955
  %957 = vdwg.mxu0
  %v958 = vadd.f32 %v874, %v896
  %v959 = vadd.f32 %v875, %v916
  %v960 = vadd.f32 %v876, %v936
  %v961 = vadd.f32 %v877, %v956
  %v962 = vmul.f32 %v958, 0.5
  %v963 = vmul.f32 %v959, 0.5
  %v964 = vmul.f32 %v960, 0.5
  %v965 = vmul.f32 %v961, 0.5
  %v966 = vsel %vm378, %v958, %v962
  %v967 = vsel %vm379, %v959, %v963
  %v968 = vsel %vm380, %v960, %v964
  %v969 = vsel %vm381, %v961, %v965
  %v970 = vtanh.pop %v966
  %v971 = vtanh.pop %v967
  %v972 = vtanh.pop %v968
  %v973 = vtanh.pop %v969
  %v974 = vmul.f32 %v970, 0.5
  %v975 = vmul.f32 %v971, 0.5
  %v976 = vmul.f32 %v972, 0.5
  %v977 = vmul.f32 %v973, 0.5
  %v978 = vadd.f32 %v974, 0.5
  %v979 = vadd.f32 %v975, 0.5
  %v980 = vadd.f32 %v976, 0.5
  %v981 = vadd.f32 %v977, 0.5
  %v982 = vsel %vm378, %v970, %v978
  %v983 = vsel %vm379, %v971, %v979
  %v984 = vsel %vm380, %v972, %v980
  %v985 = vsel %vm381, %v973, %v981
  %v986 = vmul.f32 %v983, %v866
  %v987 = vmul.f32 %v982, %v984
  %v988 = vadd.f32 %v986, %v987
  %v989 = vtanh.pop %v988
  %v990 = vmul.f32 %v985, %v989
  %s991 = scalar_lea.vmem %s4, 32
  %992 = vst [vmem:[%s991] sm:$0xff] %v990
  %s993 = smul.u32 5, 4
  %s994 = smul.addr %s993, 8
  %s995 = scalar_lea.vmem [#allocation2], %s994
  %v996 = vld [vmem:[%s995] sm:$0xff]
  %v997 = vld [vmem:[%s995 + $0x8] sm:$0xff]
  %v998 = vld [vmem:[%s995 + $0x10] sm:$0xff]
  %v999 = vld [vmem:[%s995 + $0x18] sm:$0xff]
  %1000 = vmatpush.msra.mxu0 %v361
  %1001 = vmatpush.msra.mxu0 %v357
  %1002 = vmatpush.msra.mxu0 %v353
  %1003 = vmatpush.msra.mxu0 %v349
  %1004 = vmatpush.msra.mxu0 %v345
  %1005 = vmatpush.msra.mxu0 %v341
  %1006 = vmatpush.msra.mxu0 %v337
  %1007 = vmatpush.msra.mxu0 %v333
  %1008 = vmatpush.msra.mxu0 %v329
  %1009 = vmatpush.msra.mxu0 %v325
  %1010 = vmatpush.msra.mxu0 %v321
  %1011 = vmatpush.msra.mxu0 %v317
  %1012 = vmatpush.msra.mxu0 %v313
  %1013 = vmatpush.msra.mxu0 %v309
  %1014 = vmatpush.msra.mxu0 %v305
  %1015 = vmatpush.msra.mxu0 %v301
  %1016 = vmatmul.f32.gmra.mxu0 %v990
  %v1017 = vpop.f32.mrf.mxu0
  %v1018 = vadd.f32 0.0, %v1017
  %1019 = vdwg.mxu0
  %1020 = vmatpush.msra.mxu0 %v362
  %1021 = vmatpush.msra.mxu0 %v358
  %1022 = vmatpush.msra.mxu0 %v354
  %1023 = vmatpush.msra.mxu0 %v350
  %1024 = vmatpush.msra.mxu0 %v346
  %1025 = vmatpush.msra.mxu0 %v342
  %1026 = vmatpush.msra.mxu0 %v338
  %1027 = vmatpush.msra.mxu0 %v334
  %1028 = vmatpush.msra.mxu0 %v330
  %1029 = vmatpush.msra.mxu0 %v326
  %1030 = vmatpush.msra.mxu0 %v322
  %1031 = vmatpush.msra.mxu0 %v318
  %1032 = vmatpush.msra.mxu0 %v314
  %1033 = vmatpush.msra.mxu0 %v310
  %1034 = vmatpush.msra.mxu0 %v306
  %1035 = vmatpush.msra.mxu0 %v302
  %1036 = vmatmul.f32.gmra.mxu0 %v990
  %v1037 = vpop.f32.mrf.mxu0
  %v1038 = vadd.f32 0.0, %v1037
  %1039 = vdwg.mxu0
  %1040 = vmatpush.msra.mxu0 %v363
  %1041 = vmatpush.msra.mxu0 %v359
  %1042 = vmatpush.msra.mxu0 %v355
  %1043 = vmatpush.msra.mxu0 %v351
  %1044 = vmatpush.msra.mxu0 %v347
  %1045 = vmatpush.msra.mxu0 %v343
  %1046 = vmatpush.msra.mxu0 %v339
  %1047 = vmatpush.msra.mxu0 %v335
  %1048 = vmatpush.msra.mxu0 %v331
  %1049 = vmatpush.msra.mxu0 %v327
  %1050 = vmatpush.msra.mxu0 %v323
  %1051 = vmatpush.msra.mxu0 %v319
  %1052 = vmatpush.msra.mxu0 %v315
  %1053 = vmatpush.msra.mxu0 %v311
  %1054 = vmatpush.msra.mxu0 %v307
  %1055 = vmatpush.msra.mxu0 %v303
  %1056 = vmatmul.f32.gmra.mxu0 %v990
  %v1057 = vpop.f32.mrf.mxu0
  %v1058 = vadd.f32 0.0, %v1057
  %1059 = vdwg.mxu0
  %1060 = vmatpush.msra.mxu0 %v364
  %1061 = vmatpush.msra.mxu0 %v360
  %1062 = vmatpush.msra.mxu0 %v356
  %1063 = vmatpush.msra.mxu0 %v352
  %1064 = vmatpush.msra.mxu0 %v348
  %1065 = vmatpush.msra.mxu0 %v344
  %1066 = vmatpush.msra.mxu0 %v340
  %1067 = vmatpush.msra.mxu0 %v336
  %1068 = vmatpush.msra.mxu0 %v332
  %1069 = vmatpush.msra.mxu0 %v328
  %1070 = vmatpush.msra.mxu0 %v324
  %1071 = vmatpush.msra.mxu0 %v320
  %1072 = vmatpush.msra.mxu0 %v316
  %1073 = vmatpush.msra.mxu0 %v312
  %1074 = vmatpush.msra.mxu0 %v308
  %1075 = vmatpush.msra.mxu0 %v304
  %1076 = vmatmul.f32.gmra.mxu0 %v990
  %v1077 = vpop.f32.mrf.mxu0
  %v1078 = vadd.f32 0.0, %v1077
  %1079 = vdwg.mxu0
  %v1080 = vadd.f32 %v996, %v1018
  %v1081 = vadd.f32 %v997, %v1038
  %v1082 = vadd.f32 %v998, %v1058
  %v1083 = vadd.f32 %v999, %v1078
  %v1084 = vmul.f32 %v1080, 0.5
  %v1085 = vmul.f32 %v1081, 0.5
  %v1086 = vmul.f32 %v1082, 0.5
  %v1087 = vmul.f32 %v1083, 0.5
  %v1088 = vsel %vm378, %v1080, %v1084
  %v1089 = vsel %vm379, %v1081, %v1085
  %v1090 = vsel %vm380, %v1082, %v1086
  %v1091 = vsel %vm381, %v1083, %v1087
  %v1092 = vtanh.pop %v1088
  %v1093 = vtanh.pop %v1089
  %v1094 = vtanh.pop %v1090
  %v1095 = vtanh.pop %v1091
  %v1096 = vmul.f32 %v1092, 0.5
  %v1097 = vmul.f32 %v1093, 0.5
  %v1098 = vmul.f32 %v1094, 0.5
  %v1099 = vmul.f32 %v1095, 0.5
  %v1100 = vadd.f32 %v1096, 0.5
  %v1101 = vadd.f32 %v1097, 0.5
  %v1102 = vadd.f32 %v1098, 0.5
  %v1103 = vadd.f32 %v1099, 0.5
  %v1104 = vsel %vm378, %v1092, %v1100
  %v1105 = vsel %vm379, %v1093, %v1101
  %v1106 = vsel %vm380, %v1094, %v1102
  %v1107 = vsel %vm381, %v1095, %v1103
  %v1108 = vmul.f32 %v1105, %v988
  %v1109 = vmul.f32 %v1104, %v1106
  %v1110 = vadd.f32 %v1108, %v1109
  %v1111 = vtanh.pop %v1110
  %v1112 = vmul.f32 %v1107, %v1111
  %s1113 = scalar_lea.vmem %s4, 40
  %1114 = vst [vmem:[%s1113] sm:$0xff] %v1112
  %s1115 = smul.u32 6, 4
  %s1116 = smul.addr %s1115, 8
  %s1117 = scalar_lea.vmem [#allocation2], %s1116
  %v1118 = vld [vmem:[%s1117] sm:$0xff]
  %v1119 = vld [vmem:[%s1117 + $0x8] sm:$0xff]
  %v1120 = vld [vmem:[%s1117 + $0x10] sm:$0xff]
  %v1121 = vld [vmem:[%s1117 + $0x18] sm:$0xff]
  %1122 = vmatpush.msra.mxu0 %v361
  %1123 = vmatpush.msra.mxu0 %v357
  %1124 = vmatpush.msra.mxu0 %v353
  %1125 = vmatpush.msra.mxu0 %v349
  %1126 = vmatpush.msra.mxu0 %v345
  %1127 = vmatpush.msra.mxu0 %v341
  %1128 = vmatpush.msra.mxu0 %v337
  %1129 = vmatpush.msra.mxu0 %v333
  %1130 = vmatpush.msra.mxu0 %v329
  %1131 = vmatpush.msra.mxu0 %v325
  %1132 = vmatpush.msra.mxu0 %v321
  %1133 = vmatpush.msra.mxu0 %v317
  %1134 = vmatpush.msra.mxu0 %v313
  %1135 = vmatpush.msra.mxu0 %v309
  %1136 = vmatpush.msra.mxu0 %v305
  %1137 = vmatpush.msra.mxu0 %v301
  %1138 = vmatmul.f32.gmra.mxu0 %v1112
  %v1139 = vpop.f32.mrf.mxu0
  %v1140 = vadd.f32 0.0, %v1139
  %1141 = vdwg.mxu0
  %1142 = vmatpush.msra.mxu0 %v362
  %1143 = vmatpush.msra.mxu0 %v358
  %1144 = vmatpush.msra.mxu0 %v354
  %1145 = vmatpush.msra.mxu0 %v350
  %1146 = vmatpush.msra.mxu0 %v346
  %1147 = vmatpush.msra.mxu0 %v342
  %1148 = vmatpush.msra.mxu0 %v338
  %1149 = vmatpush.msra.mxu0 %v334
  %1150 = vmatpush.msra.mxu0 %v330
  %1151 = vmatpush.msra.mxu0 %v326
  %1152 = vmatpush.msra.mxu0 %v322
  %1153 = vmatpush.msra.mxu0 %v318
  %1154 = vmatpush.msra.mxu0 %v314
  %1155 = vmatpush.msra.mxu0 %v310
  %1156 = vmatpush.msra.mxu0 %v306
  %1157 = vmatpush.msra.mxu0 %v302
  %1158 = vmatmul.f32.gmra.mxu0 %v1112
  %v1159 = vpop.f32.mrf.mxu0
  %v1160 = vadd.f32 0.0, %v1159
  %1161 = vdwg.mxu0
  %1162 = vmatpush.msra.mxu0 %v363
  %1163 = vmatpush.msra.mxu0 %v359
  %1164 = vmatpush.msra.mxu0 %v355
  %1165 = vmatpush.msra.mxu0 %v351
  %1166 = vmatpush.msra.mxu0 %v347
  %1167 = vmatpush.msra.mxu0 %v343
  %1168 = vmatpush.msra.mxu0 %v339
  %1169 = vmatpush.msra.mxu0 %v335
  %1170 = vmatpush.msra.mxu0 %v331
  %1171 = vmatpush.msra.mxu0 %v327
  %1172 = vmatpush.msra.mxu0 %v323
  %1173 = vmatpush.msra.mxu0 %v319
  %1174 = vmatpush.msra.mxu0 %v315
  %1175 = vmatpush.msra.mxu0 %v311
  %1176 = vmatpush.msra.mxu0 %v307
  %1177 = vmatpush.msra.mxu0 %v303
  %1178 = vmatmul.f32.gmra.mxu0 %v1112
  %v1179 = vpop.f32.mrf.mxu0
  %v1180 = vadd.f32 0.0, %v1179
  %1181 = vdwg.mxu0
  %1182 = vmatpush.msra.mxu0 %v364
  %1183 = vmatpush.msra.mxu0 %v360
  %1184 = vmatpush.msra.mxu0 %v356
  %1185 = vmatpush.msra.mxu0 %v352
  %1186 = vmatpush.msra.mxu0 %v348
  %1187 = vmatpush.msra.mxu0 %v344
  %1188 = vmatpush.msra.mxu0 %v340
  %1189 = vmatpush.msra.mxu0 %v336
  %1190 = vmatpush.msra.mxu0 %v332
  %1191 = vmatpush.msra.mxu0 %v328
  %1192 = vmatpush.msra.mxu0 %v324
  %1193 = vmatpush.msra.mxu0 %v320
  %1194 = vmatpush.msra.mxu0 %v316
  %1195 = vmatpush.msra.mxu0 %v312
  %1196 = vmatpush.msra.mxu0 %v308
  %1197 = vmatpush.msra.mxu0 %v304
  %1198 = vmatmul.f32.gmra.mxu0 %v1112
  %v1199 = vpop.f32.mrf.mxu0
  %v1200 = vadd.f32 0.0, %v1199
  %1201 = vdwg.mxu0
  %v1202 = vadd.f32 %v1118, %v1140
  %v1203 = vadd.f32 %v1119, %v1160
  %v1204 = vadd.f32 %v1120, %v1180
  %v1205 = vadd.f32 %v1121, %v1200
  %v1206 = vmul.f32 %v1202, 0.5
  %v1207 = vmul.f32 %v1203, 0.5
  %v1208 = vmul.f32 %v1204, 0.5
  %v1209 = vmul.f32 %v1205, 0.5
  %v1210 = vsel %vm378, %v1202, %v1206
  %v1211 = vsel %vm379, %v1203, %v1207
  %v1212 = vsel %vm380, %v1204, %v1208
  %v1213 = vsel %vm381, %v1205, %v1209
  %v1214 = vtanh.pop %v1210
  %v1215 = vtanh.pop %v1211
  %v1216 = vtanh.pop %v1212
  %v1217 = vtanh.pop %v1213
  %v1218 = vmul.f32 %v1214, 0.5
  %v1219 = vmul.f32 %v1215, 0.5
  %v1220 = vmul.f32 %v1216, 0.5
  %v1221 = vmul.f32 %v1217, 0.5
  %v1222 = vadd.f32 %v1218, 0.5
  %v1223 = vadd.f32 %v1219, 0.5
  %v1224 = vadd.f32 %v1220, 0.5
  %v1225 = vadd.f32 %v1221, 0.5
  %v1226 = vsel %vm378, %v1214, %v1222
  %v1227 = vsel %vm379, %v1215, %v1223
  %v1228 = vsel %vm380, %v1216, %v1224
  %v1229 = vsel %vm381, %v1217, %v1225
  %v1230 = vmul.f32 %v1227, %v1110
  %v1231 = vmul.f32 %v1226, %v1228
  %v1232 = vadd.f32 %v1230, %v1231
  %v1233 = vtanh.pop %v1232
  %v1234 = vmul.f32 %v1229, %v1233
  %s1235 = scalar_lea.vmem %s4, 48
  %1236 = vst [vmem:[%s1235] sm:$0xff] %v1234
  %s1237 = smul.u32 7, 4
  %s1238 = smul.addr %s1237, 8
  %s1239 = scalar_lea.vmem [#allocation2], %s1238
  %v1240 = vld [vmem:[%s1239] sm:$0xff]
  %v1241 = vld [vmem:[%s1239 + $0x8] sm:$0xff]
  %v1242 = vld [vmem:[%s1239 + $0x10] sm:$0xff]
  %v1243 = vld [vmem:[%s1239 + $0x18] sm:$0xff]
  %1244 = vmatpush.msra.mxu0 %v361
  %1245 = vmatpush.msra.mxu0 %v357
  %1246 = vmatpush.msra.mxu0 %v353
  %1247 = vmatpush.msra.mxu0 %v349
  %1248 = vmatpush.msra.mxu0 %v345
  %1249 = vmatpush.msra.mxu0 %v341
  %1250 = vmatpush.msra.mxu0 %v337
  %1251 = vmatpush.msra.mxu0 %v333
  %1252 = vmatpush.msra.mxu0 %v329
  %1253 = vmatpush.msra.mxu0 %v325
  %1254 = vmatpush.msra.mxu0 %v321
  %1255 = vmatpush.msra.mxu0 %v317
  %1256 = vmatpush.msra.mxu0 %v313
  %1257 = vmatpush.msra.mxu0 %v309
  %1258 = vmatpush.msra.mxu0 %v305
  %1259 = vmatpush.msra.mxu0 %v301
  %1260 = vmatmul.f32.gmra.mxu0 %v1234
  %v1261 = vpop.f32.mrf.mxu0
  %v1262 = vadd.f32 0.0, %v1261
  %1263 = vdwg.mxu0
  %1264 = vmatpush.msra.mxu0 %v362
  %1265 = vmatpush.msra.mxu0 %v358
  %1266 = vmatpush.msra.mxu0 %v354
  %1267 = vmatpush.msra.mxu0 %v350
  %1268 = vmatpush.msra.mxu0 %v346
  %1269 = vmatpush.msra.mxu0 %v342
  %1270 = vmatpush.msra.mxu0 %v338
  %1271 = vmatpush.msra.mxu0 %v334
  %1272 = vmatpush.msra.mxu0 %v330
  %1273 = vmatpush.msra.mxu0 %v326
  %1274 = vmatpush.msra.mxu0 %v322
  %1275 = vmatpush.msra.mxu0 %v318
  %1276 = vmatpush.msra.mxu0 %v314
  %1277 = vmatpush.msra.mxu0 %v310
  %1278 = vmatpush.msra.mxu0 %v306
  %1279 = vmatpush.msra.mxu0 %v302
  %1280 = vmatmul.f32.gmra.mxu0 %v1234
  %v1281 = vpop.f32.mrf.mxu0
  %v1282 = vadd.f32 0.0, %v1281
  %1283 = vdwg.mxu0
  %1284 = vmatpush.msra.mxu0 %v363
  %1285 = vmatpush.msra.mxu0 %v359
  %1286 = vmatpush.msra.mxu0 %v355
  %1287 = vmatpush.msra.mxu0 %v351
  %1288 = vmatpush.msra.mxu0 %v347
  %1289 = vmatpush.msra.mxu0 %v343
  %1290 = vmatpush.msra.mxu0 %v339
  %1291 = vmatpush.msra.mxu0 %v335
  %1292 = vmatpush.msra.mxu0 %v331
  %1293 = vmatpush.msra.mxu0 %v327
  %1294 = vmatpush.msra.mxu0 %v323
  %1295 = vmatpush.msra.mxu0 %v319
  %1296 = vmatpush.msra.mxu0 %v315
  %1297 = vmatpush.msra.mxu0 %v311
  %1298 = vmatpush.msra.mxu0 %v307
  %1299 = vmatpush.msra.mxu0 %v303
  %1300 = vmatmul.f32.gmra.mxu0 %v1234
  %v1301 = vpop.f32.mrf.mxu0
  %v1302 = vadd.f32 0.0, %v1301
  %1303 = vdwg.mxu0
  %1304 = vmatpush.msra.mxu0 %v364
  %1305 = vmatpush.msra.mxu0 %v360
  %1306 = vmatpush.msra.mxu0 %v356
  %1307 = vmatpush.msra.mxu0 %v352
  %1308 = vmatpush.msra.mxu0 %v348
  %1309 = vmatpush.msra.mxu0 %v344
  %1310 = vmatpush.msra.mxu0 %v340
  %1311 = vmatpush.msra.mxu0 %v336
  %1312 = vmatpush.msra.mxu0 %v332
  %1313 = vmatpush.msra.mxu0 %v328
  %1314 = vmatpush.msra.mxu0 %v324
  %1315 = vmatpush.msra.mxu0 %v320
  %1316 = vmatpush.msra.mxu0 %v316
  %1317 = vmatpush.msra.mxu0 %v312
  %1318 = vmatpush.msra.mxu0 %v308
  %1319 = vmatpush.msra.mxu0 %v304
  %1320 = vmatmul.f32.gmra.mxu0 %v1234
  %v1321 = vpop.f32.mrf.mxu0
  %v1322 = vadd.f32 0.0, %v1321
  %1323 = vdwg.mxu0
  %v1324 = vadd.f32 %v1240, %v1262
  %v1325 = vadd.f32 %v1241, %v1282
  %v1326 = vadd.f32 %v1242, %v1302
  %v1327 = vadd.f32 %v1243, %v1322
  %v1328 = vmul.f32 %v1324, 0.5
  %v1329 = vmul.f32 %v1325, 0.5
  %v1330 = vmul.f32 %v1326, 0.5
  %v1331 = vmul.f32 %v1327, 0.5
  %v1332 = vsel %vm378, %v1324, %v1328
  %v1333 = vsel %vm379, %v1325, %v1329
  %v1334 = vsel %vm380, %v1326, %v1330
  %v1335 = vsel %vm381, %v1327, %v1331
  %v1336 = vtanh.pop %v1332
  %v1337 = vtanh.pop %v1333
  %v1338 = vtanh.pop %v1334
  %v1339 = vtanh.pop %v1335
  %v1340 = vmul.f32 %v1336, 0.5
  %v1341 = vmul.f32 %v1337, 0.5
  %v1342 = vmul.f32 %v1338, 0.5
  %v1343 = vmul.f32 %v1339, 0.5
  %v1344 = vadd.f32 %v1340, 0.5
  %v1345 = vadd.f32 %v1341, 0.5
  %v1346 = vadd.f32 %v1342, 0.5
  %v1347 = vadd.f32 %v1343, 0.5
  %v1348 = vsel %vm378, %v1336, %v1344
  %v1349 = vsel %vm379, %v1337, %v1345
  %v1350 = vsel %vm380, %v1338, %v1346
  %v1351 = vsel %vm381, %v1339, %v1347
  %v1352 = vmul.f32 %v1349, %v1232
  %v1353 = vmul.f32 %v1348, %v1350
  %v1354 = vadd.f32 %v1352, %v1353
  %v1355 = vtanh.pop %v1354
  %v1356 = vmul.f32 %v1351, %v1355
  %s1357 = scalar_lea.vmem %s4, 56
  %1358 = vst [vmem:[%s1357] sm:$0xff] %v1356
  %1359 = vst [vmem:[#allocation3] sm:$0xff] %v1356
  %1360 = vst [vmem:[#allocation4] sm:$0xff] %v1354
  // Predicated region
  $region22: #{xlstm_forward.5} parent=0 // pred_check
    _
  $region23: #{xlstm_forward.5} parent=0 // pred_check_branch
    %1362 = sbr.rel (0) target = $region25
  $region24: #{xlstm_forward.5} parent=0 // pred_region
    _
  $region25: #{xlstm_forward.5} parent=0 // pred_fallthru
    _
  // Predicated region
  $region26: #{xlstm_forward.5} parent=0 // pred_check
    _
  $region27: #{xlstm_forward.5} parent=0 // pred_check_branch
    %1364 = sbr.rel (0) target = $region29
  $region28: #{xlstm_forward.5} parent=0 // pred_region
    _
  $region29: #{xlstm_forward.5} parent=0 // pred_fallthru
    _

</llo_original>
